<compile_context>
chip_gen: v7x
topology: tpu7x:2x2x1
jax: 0.10.0
libtpu: 0.0.40
codegen_flags: <defaults>
</compile_context>

<pallas_src>
import numpy as np

import jax
import jax.numpy as jnp
from jax.experimental import pallas as pl
from jax.experimental.pallas import tpu as pltpu


# ----------------------------- helpers (host side) -----------------------------

def _round_up(x, m):
    return ((x + m - 1) // m) * m


def _deinterleave(idx, levels):
    """Recursive even/odd de-interleave order: storage position q holds natural index result[q]."""
    idx = list(idx)
    if levels == 0 or len(idx) <= 1:
        return idx
    return _deinterleave(idx[0::2], levels - 1) + _deinterleave(idx[1::2], levels - 1)


def _nodes_at_depth(tp, depth):
    """Depth-`depth` interactor nodes of the params tree, left-to-right (even before odd)."""
    if depth == 0:
        return [tp]
    return _nodes_at_depth(tp["even"], depth - 1) + _nodes_at_depth(tp["odd"], depth - 1)


def _module_mats_np(mod, Lc, perm, D):
    """Fold ReplicationPad1d((3,3)) + Conv1d(k=5) into (M1, b1f) and Conv1d(k=3) into (M2, b2f),
    acting on (time*channel)-flattened rows whose time axis is stored in de-interleaved order
    `perm` (storage position q holds natural local time perm[q])."""
    w1 = np.asarray(mod["w1"], np.float32)        # (5, D_in, D_out)
    b1 = np.asarray(mod["b1"], np.float32)        # (1, D)
    w2 = np.asarray(mod["w2"], np.float32)        # (3, D_in, D_out)
    b2 = np.asarray(mod["b2"], np.float32)        # (1, D)
    perm = np.asarray(perm)

    l = np.arange(Lc + 2)
    M1 = np.zeros((Lc * D, (Lc + 2) * D), np.float32)
    for k in range(5):                            # replication pad + 5-tap conv
        src = np.clip(l + k - 3, 0, Lc - 1)                               # natural src time per out l
        S = (perm[:, None] == src[None, :]).astype(np.float32)            # (Lc, Lc+2)
        M1 += np.kron(S, w1[k])
    b1f = np.tile(b1, (1, Lc + 2))

    mi = np.arange(Lc + 2)
    M2 = np.zeros(((Lc + 2) * D, Lc * D), np.float32)
    for k in range(3):                            # 3-tap conv (no pad)
        S = (mi[:, None] == (perm[None, :] + k)).astype(np.float32)       # (Lc+2, Lc)
        M2 += np.kron(S, w2[k])
    b2f = np.tile(b2, (1, Lc))
    return M1, b1f, M2, b2f


def _fold_scinet_weights(params, T, D, F, num_levels, weights_dtype):
    """Build the packed, lane-dense padded weight stack consumed by the fused kernel.

    Returns:
      W_all: (4*num_levels + 1, P, P)  weights_dtype   (12 tree matmuls + 1 fused head matmul)
      B_all: (4*num_levels + 1, 1, P)  float32         (biases, added after f32 accumulation)
      P    : padded lane width (multiple of 128)
    """
    TD = T * D
    max_mid = (T + 2 ** (num_levels + 1)) * D            # widest per-level conv1 output width
    P = _round_up(max(TD, max_mid, F, 128), 128)
    n_mats = 4 * num_levels + 1
    W_all = np.zeros((n_mats, P, P), np.float32)
    B_all = np.zeros((n_mats, 1, P), np.float32)

    tree = params["tree"]
    for lvl in range(num_levels):
        nodes = _nodes_at_depth(tree, lvl)
        n = len(nodes)                                   # 2**lvl nodes at this level
        Lc = T // (2 ** (lvl + 1))                       # sequence length each conv module sees
        perm = np.asarray(_deinterleave(range(Lc), num_levels - 1 - lvl))
        h = Lc * D                                       # flattened half-segment width
        wm = (Lc + 2) * D                                # flattened conv1-output width
        mid = 2 * n * wm
        # output segment 2j holds psi_j(xo_j) (stage A) / U_j(d_j) (stage B);
        # output segment 2j+1 holds phi_j(xe_j)          / -P_j(c_j)   ("crossed" placement)
        stage_specs = (
            [s for j in range(n) for s in (("psi", 2 * j + 1, 1.0), ("phi", 2 * j, 1.0))],
            [s for j in range(n) for s in (("U", 2 * j + 1, 1.0), ("P", 2 * j, -1.0))],
        )
        for s_i, spec in enumerate(stage_specs):
            W1 = np.zeros((TD, mid), np.float32)
            B1 = np.zeros((1, mid), np.float32)
            W2 = np.zeros((mid, TD), np.float32)
            B2 = np.zeros((1, TD), np.float32)
            for o_seg, (name, src_seg, sign) in enumerate(spec):
                mod = nodes[o_seg // 2]["block"][name]
                M1, b1f, M2, b2f = _module_mats_np(mod, Lc, perm, D)
                W1[src_seg * h:(src_seg + 1) * h, o_seg * wm:(o_seg + 1) * wm] = M1
                B1[:, o_seg * wm:(o_seg + 1) * wm] = b1f
                W2[o_seg * wm:(o_seg + 1) * wm, o_seg * h:(o_seg + 1) * h] = sign * M2
                B2[:, o_seg * h:(o_seg + 1) * h] = sign * b2f
            m1 = 4 * lvl + 2 * s_i
            m2 = m1 + 1
            W_all[m1, :TD, :mid] = W1
            B_all[m1, :, :mid] = B1
            W_all[m2, :mid, :TD] = W2
            B_all[m2, :, :TD] = B2

    # head: projection1 (F, T) with its columns permuted into de-interleaved order, folded with
    # Linear(D -> 1) into a single (T*D, F) matrix; bias pre-broadcast to a lane row; zero-padded
    # out to P columns so the final store is lane-dense.
    sigma = _deinterleave(range(T), num_levels)
    A = np.asarray(params["proj_w"], np.float32)[:, sigma].T              # (T, F)
    Wh = np.kron(A, np.asarray(params["lin_w"], np.float32))              # (T*D, F)
    Bh = np.tile(np.asarray(params["lin_b"], np.float32), (1, F))         # (1, F)
    W_all[4 * num_levels, :TD, :F] = Wh
    B_all[4 * num_levels, :, :F] = Bh

    return jnp.asarray(W_all, weights_dtype), jnp.asarray(B_all, jnp.float32), P


def _choose_batch_tile(B):
    """TB: multiple of 8, capped at 128 (v5e) / 256 (v6e/v7x); prefer >=2 grid steps on multi-TC chips."""
    try:
        kind = jax.devices()[0].device_kind.lower()
    except Exception:
        kind = ""
    is_v5e = ("v5e" in kind) or ("v5 lite" in kind) or ("v5litepod" in kind)
    single_tc = is_v5e or ("v6" in kind)
    cap = 128 if is_v5e else 256
    tb = min(cap, _round_up(max(B, 1), 8))
    if (not single_tc) and B > 8:
        # give the scheduler at least 2 parallel grid steps (v7x / megacore)
        tb = min(tb, max(8, _round_up(pl.cdiv(B, 2), 8)))
    return tb


# ----------------------------- fused Pallas kernel -----------------------------

def _make_scinet_kernel(num_levels):
    def kernel(x_ref, w_ref, b_ref, o_ref):
        x = x_ref[...].astype(jnp.float32)               # (TB, P) batch tile, lanes >= T*D are zero

        def affine(a, i):
            w = w_ref[i]                                 # (P, P) static-index view/load
            acc = jnp.dot(a.astype(w.dtype), w, preferred_element_type=jnp.float32)
            return acc + b_ref[i].astype(jnp.float32)    # (1, P) bias, f32 add after accumulation

        cur = x
        for lvl in range(num_levels):
            base = 4 * lvl
            # stage A: every node j of the level -> [psi_j(xo_j) | phi_j(xe_j)]
            t = affine(cur, base + 0)
            t = jnp.where(t > 0, t, 0.01 * t)            # LeakyReLU(0.01)
            # TODO(synk): nn.Dropout(0.5) train-mode randomness not implemented (eval == identity).
            g = jnp.tanh(affine(t, base + 1))
            cd = cur * jnp.exp(g)                        # [c_j | d_j] per node (c = xe*e^psi, d = xo*e^phi)
            # stage B: [U_j(d_j) | -P_j(c_j)]  (P's second conv pre-negated; tanh is odd)
            t = affine(cd, base + 2)
            t = jnp.where(t > 0, t, 0.01 * t)
            g = jnp.tanh(affine(t, base + 3))
            cur = cd + g                                 # [ye_j | yo_j] = [c+U(d) | d-P(c)]

        out = affine(cur + x, 4 * num_levels)            # residual + fused proj1/Linear head
        o_ref[...] = out.astype(o_ref.dtype)             # lane-dense (TB, P) store
    return kernel


# ----------------------------- wrapper -----------------------------

def scinet_forward(x, params, num_levels, weights_dtype=jnp.bfloat16):
    B, T, D = x.shape
    F = params["proj_w"].shape[0]
    assert T % (2 ** num_levels) == 0, (T, num_levels)

    W_all, B_all, P = _fold_scinet_weights(params, T, D, F, num_levels, weights_dtype)
    n_mats = W_all.shape[0]

    # de-interleave the time axis once in XLA, flatten (time, channel) onto lanes, pad to (B_pad, P)
    sigma = jnp.asarray(_deinterleave(range(T), num_levels), jnp.int32)
    x_d = jnp.take(x, sigma, axis=1).reshape(B, T * D).astype(jnp.float32)
    TB = _choose_batch_tile(B)
    B_pad = _round_up(B, TB)
    x_d = jnp.pad(x_d, ((0, B_pad - B), (0, P - T * D)))
    grid = (B_pad // TB,)

    kernel = _make_scinet_kernel(num_levels)

    weight_bytes = int(W_all.size) * W_all.dtype.itemsize + int(B_all.size) * B_all.dtype.itemsize
    io_bytes = 2 * 2 * TB * P * 4                         # double-buffered x/out tiles
    vmem_limit = int(min(max(2 * weight_bytes + io_bytes + (4 << 20), 16 << 20), 64 << 20))
    cost = pl.CostEstimate(
        flops=int(2 * B_pad * P * P * n_mats),
        transcendentals=int(B_pad * P * 3 * num_levels),
        bytes_accessed=int(weight_bytes + 2 * B_pad * P * 4),
    )

    def run(single_buffer_weights):
        wmode = {"pipeline_mode": pl.Buffered(1)} if single_buffer_weights else {}
        in_specs = [
            pl.BlockSpec((TB, P), lambda b: (b, 0)),
            pl.BlockSpec((n_mats, P, P), lambda b: (0, 0, 0), **wmode),
            pl.BlockSpec((n_mats, 1, P), lambda b: (0, 0, 0), **wmode),
        ]
        out = pl.pallas_call(
            kernel,
            grid=grid,
            in_specs=in_specs,
            out_specs=pl.BlockSpec((TB, P), lambda b: (b, 0)),
            out_shape=jax.ShapeDtypeStruct((B_pad, P), jnp.float32),
            compiler_params=pltpu.CompilerParams(
                dimension_semantics=("parallel",),
                vmem_limit_bytes=vmem_limit),
            cost_estimate=cost,
        )(x_d, W_all, B_all)
        return jax.block_until_ready(out)

    try:
        out = run(True)      # single-buffered resident weights (constant index_map)
    except Exception:
        out = run(False)     # fallback if pl.Buffered(1) is rejected by this jax version
    return out[:B, :F]       # matches `out = self.linear(out); out = out[:, :, 0]`


# ----------------------------- parameter init -----------------------------

def _init_conv_module(key, D):
    k1, k2, k3, k4 = jax.random.split(key, 4)
    return {
        "w1": 0.2 * jax.random.normal(k1, (5, D, D), jnp.float32),   # (tap, in, out)
        "b1": 0.1 * jax.random.normal(k2, (1, D), jnp.float32),
        "w2": 0.2 * jax.random.normal(k3, (3, D, D), jnp.float32),
        "b2": 0.1 * jax.random.normal(k4, (1, D), jnp.float32),
    }


def _init_interactor(key, D):
    ks = jax.random.split(key, 4)
    return {n: _init_conv_module(k, D) for n, k in zip(("phi", "psi", "P", "U"), ks)}


def _init_tree(key, D, level):
    kb, ke, ko = jax.random.split(key, 3)
    node = {"block": _init_interactor(kb, D)}
    if level > 0:
        node["even"] = _init_tree(ke, D, level - 1)
        node["odd"] = _init_tree(ko, D, level - 1)
    return node


def init_params(key, D, T, F, num_levels):
    kt, kp, kl, kb = jax.random.split(key, 4)
    return {
        "tree": _init_tree(kt, D, num_levels - 1),
        "proj_w": 0.2 * jax.random.normal(kp, (F, T), jnp.float32),   # Conv1d(T->F, k=1, bias=False)
        "lin_w": 0.2 * jax.random.normal(kl, (D, 1), jnp.float32),    # nn.Linear(D, 1)
        "lin_b": 0.1 * jax.random.normal(kb, (1, 1), jnp.float32),
    }


# ----------------------------- pure-JAX reference -----------------------------

def _conv_module_ref(x, m):
    B, L, D = x.shape
    idx = jnp.clip(jnp.arange(L + 6) - 3, 0, L - 1)
    xp = x[:, idx, :]
    acc = jnp.zeros((B, L + 2, D), jnp.float32)
    for k in range(5):
        acc = acc + jnp.einsum("bld,de->ble", xp[:, k:k + L + 2, :], m["w1"][k],
                               precision=jax.lax.Precision.HIGHEST)
    acc = acc + m["b1"][None]
    acc = jnp.where(acc > 0, acc, 0.01 * acc)
    out = jnp.zeros((B, L, D), jnp.float32)
    for k in range(3):
        out = out + jnp.einsum("bld,de->ble", acc[:, k:k + L, :], m["w2"][k],
                               precision=jax.lax.Precision.HIGHEST)
    return jnp.tanh(out + m["b2"][None])


def _interactor_ref(xe, xo, p):
    d = xo * jnp.exp(_conv_module_ref(xe, p["phi"]))
    c = xe * jnp.exp(_conv_module_ref(xo, p["psi"]))
    return c + _conv_module_ref(d, p["U"]), d - _conv_module_ref(c, p["P"])


def _tree_ref(x, tp, level):
    ye, yo = _interactor_ref(x[:, 0::2, :], x[:, 1::2, :], tp["block"])
    if level > 0:
        ye = _tree_ref(ye, tp["even"], level - 1)
        yo = _tree_ref(yo, tp["odd"], level - 1)
    B, Lh, D = ye.shape
    return jnp.stack([ye, yo], axis=2).reshape(B, 2 * Lh, D)   # zip_up_the_pants


def forward_ref(x, params, num_levels):
    t = _tree_ref(x, params["tree"], num_levels - 1)
    xr = t + x
    y = jnp.einsum("ft,btd->bfd", params["proj_w"], xr,
                   precision=jax.lax.Precision.HIGHEST)
    z = jnp.einsum("bfd,do->bfo", y, params["lin_w"],
                   precision=jax.lax.Precision.HIGHEST) + params["lin_b"][None]
    return z[:, :, 0]


# ----------------------------- main -----------------------------

if __name__ == "__main__":
    B, T, D, F = 2, 16, 4, 8      # batch, window_length, features_count, forecast_length
    NUM_LEVELS = 3                # SCINet default; requires T % 2**NUM_LEVELS == 0

    root = jax.random.PRNGKey(0)
    kx, kp = jax.random.split(root)
    x = jax.random.normal(kx, (B, T, D), jnp.float32)
    params = init_params(kp, D, T, F, NUM_LEVELS)

    ref = forward_ref(x, params, NUM_LEVELS)

    # exact (f32-weight) path: tight tolerance against the pure-JAX reference
    out_f32 = scinet_forward(x, params, NUM_LEVELS, weights_dtype=jnp.float32)
    out_f32 = jax.block_until_ready(out_f32)
    assert out_f32.shape == (B, F), out_f32.shape
    assert jnp.allclose(out_f32, ref, rtol=2e-3, atol=2e-3), (out_f32, ref)

    # performance path: bf16 weights on the MXU (f32 accumulation), looser tolerance
    out_bf16 = scinet_forward(x, params, NUM_LEVELS, weights_dtype=jnp.bfloat16)
    out_bf16 = jax.block_until_ready(out_bf16)
    assert out_bf16.shape == (B, F), out_bf16.shape
    assert jnp.allclose(out_bf16, ref, rtol=4e-2, atol=4e-2), (out_bf16, ref)

    print("KERNEL_OK")
</pallas_src>

<mosaic_0001>
module attributes {stable_mosaic.version = 11 : i64} {
  func.func @kernel(%arg0: i32, %arg1: memref<8x128xf32, #tpu.memory_space<vmem>>, %arg2: memref<13x128x128xf32, #tpu.memory_space<vmem>>, %arg3: memref<13x1x128xf32, #tpu.memory_space<vmem>>, %arg4: memref<8x128xf32, #tpu.memory_space<vmem>>) attributes {dimension_semantics = [#tpu.dimension_semantics<parallel>], iteration_bounds = array<i64: 1>, scalar_prefetch = 0 : i64, scratch_operands = 0 : i64, tpu.core_type = #tpu.core_type<tc>, window_params = [{transform_indices = @transform_0, window_bounds = array<i64: 8, 128>}, {pipeline_mode = #tpu.pipeline_mode<synchronous>, transform_indices = @transform_1, window_bounds = array<i64: 13, 128, 128>}, {pipeline_mode = #tpu.pipeline_mode<synchronous>, transform_indices = @transform_2, window_bounds = array<i64: 13, 1, 128>}, {transform_indices = @transform_3, window_bounds = array<i64: 8, 128>}]} {
    %c0 = arith.constant 0 : index
    %c0_0 = arith.constant 0 : index
    %0 = vector.load %arg1[%c0, %c0_0] : memref<8x128xf32, #tpu.memory_space<vmem>>, vector<8x128xf32>
    %c0_1 = arith.constant 0 : index
    %c0_2 = arith.constant 0 : index
    %c0_3 = arith.constant 0 : index
    %1 = vector.load %arg2[%c0_1, %c0_2, %c0_3] : memref<13x128x128xf32, #tpu.memory_space<vmem>>, vector<1x128x128xf32>
    %2 = vector.shape_cast %1 : vector<1x128x128xf32> to vector<128x128xf32>
    %cst = arith.constant dense<0.000000e+00> : vector<8x128xf32>
    %3 = tpu.matmul %0, %2, %cst {dimension_numbers = #tpu.dot_dimension_numbers<[1], [0], [0], [1], [0, 0, 1, 1], [], []>} : vector<8x128xf32>, vector<128x128xf32>, vector<8x128xf32> -> vector<8x128xf32>
    %c0_4 = arith.constant 0 : index
    %c0_5 = arith.constant 0 : index
    %c0_6 = arith.constant 0 : index
    %4 = vector.load %arg3[%c0_4, %c0_5, %c0_6] : memref<13x1x128xf32, #tpu.memory_space<vmem>>, vector<1x1x128xf32>
    %5 = vector.shape_cast %4 : vector<1x1x128xf32> to vector<1x128xf32>
    %6 = vector.broadcast %5 : vector<1x128xf32> to vector<8x128xf32>
    %7 = arith.addf %3, %6 : vector<8x128xf32>
    %cst_7 = arith.constant 0.000000e+00 : f32
    %8 = vector.broadcast %cst_7 : f32 to vector<8x128xf32>
    %9 = arith.cmpf ogt, %7, %8 : vector<8x128xf32>
    %cst_8 = arith.constant 0.00999999977 : f32
    %10 = vector.broadcast %cst_8 : f32 to vector<8x128xf32>
    %11 = arith.mulf %10, %7 : vector<8x128xf32>
    %12 = arith.select %9, %7, %11 : vector<8x128xi1>, vector<8x128xf32>
    %c1 = arith.constant 1 : index
    %c0_9 = arith.constant 0 : index
    %c0_10 = arith.constant 0 : index
    %13 = vector.load %arg2[%c1, %c0_9, %c0_10] : memref<13x128x128xf32, #tpu.memory_space<vmem>>, vector<1x128x128xf32>
    %14 = vector.shape_cast %13 : vector<1x128x128xf32> to vector<128x128xf32>
    %cst_11 = arith.constant dense<0.000000e+00> : vector<8x128xf32>
    %15 = tpu.matmul %12, %14, %cst_11 {dimension_numbers = #tpu.dot_dimension_numbers<[1], [0], [0], [1], [0, 0, 1, 1], [], []>} : vector<8x128xf32>, vector<128x128xf32>, vector<8x128xf32> -> vector<8x128xf32>
    %c1_12 = arith.constant 1 : index
    %c0_13 = arith.constant 0 : index
    %c0_14 = arith.constant 0 : index
    %16 = vector.load %arg3[%c1_12, %c0_13, %c0_14] : memref<13x1x128xf32, #tpu.memory_space<vmem>>, vector<1x1x128xf32>
    %17 = vector.shape_cast %16 : vector<1x1x128xf32> to vector<1x128xf32>
    %18 = vector.broadcast %17 : vector<1x128xf32> to vector<8x128xf32>
    %19 = arith.addf %15, %18 : vector<8x128xf32>
    %20 = math.tanh %19 : vector<8x128xf32>
    %21 = math.exp %20 : vector<8x128xf32>
    %22 = arith.mulf %0, %21 : vector<8x128xf32>
    %c2 = arith.constant 2 : index
    %c0_15 = arith.constant 0 : index
    %c0_16 = arith.constant 0 : index
    %23 = vector.load %arg2[%c2, %c0_15, %c0_16] : memref<13x128x128xf32, #tpu.memory_space<vmem>>, vector<1x128x128xf32>
    %24 = vector.shape_cast %23 : vector<1x128x128xf32> to vector<128x128xf32>
    %cst_17 = arith.constant dense<0.000000e+00> : vector<8x128xf32>
    %25 = tpu.matmul %22, %24, %cst_17 {dimension_numbers = #tpu.dot_dimension_numbers<[1], [0], [0], [1], [0, 0, 1, 1], [], []>} : vector<8x128xf32>, vector<128x128xf32>, vector<8x128xf32> -> vector<8x128xf32>
    %c2_18 = arith.constant 2 : index
    %c0_19 = arith.constant 0 : index
    %c0_20 = arith.constant 0 : index
    %26 = vector.load %arg3[%c2_18, %c0_19, %c0_20] : memref<13x1x128xf32, #tpu.memory_space<vmem>>, vector<1x1x128xf32>
    %27 = vector.shape_cast %26 : vector<1x1x128xf32> to vector<1x128xf32>
    %28 = vector.broadcast %27 : vector<1x128xf32> to vector<8x128xf32>
    %29 = arith.addf %25, %28 : vector<8x128xf32>
    %cst_21 = arith.constant 0.000000e+00 : f32
    %30 = vector.broadcast %cst_21 : f32 to vector<8x128xf32>
    %31 = arith.cmpf ogt, %29, %30 : vector<8x128xf32>
    %cst_22 = arith.constant 0.00999999977 : f32
    %32 = vector.broadcast %cst_22 : f32 to vector<8x128xf32>
    %33 = arith.mulf %32, %29 : vector<8x128xf32>
    %34 = arith.select %31, %29, %33 : vector<8x128xi1>, vector<8x128xf32>
    %c3 = arith.constant 3 : index
    %c0_23 = arith.constant 0 : index
    %c0_24 = arith.constant 0 : index
    %35 = vector.load %arg2[%c3, %c0_23, %c0_24] : memref<13x128x128xf32, #tpu.memory_space<vmem>>, vector<1x128x128xf32>
    %36 = vector.shape_cast %35 : vector<1x128x128xf32> to vector<128x128xf32>
    %cst_25 = arith.constant dense<0.000000e+00> : vector<8x128xf32>
    %37 = tpu.matmul %34, %36, %cst_25 {dimension_numbers = #tpu.dot_dimension_numbers<[1], [0], [0], [1], [0, 0, 1, 1], [], []>} : vector<8x128xf32>, vector<128x128xf32>, vector<8x128xf32> -> vector<8x128xf32>
    %c3_26 = arith.constant 3 : index
    %c0_27 = arith.constant 0 : index
    %c0_28 = arith.constant 0 : index
    %38 = vector.load %arg3[%c3_26, %c0_27, %c0_28] : memref<13x1x128xf32, #tpu.memory_space<vmem>>, vector<1x1x128xf32>
    %39 = vector.shape_cast %38 : vector<1x1x128xf32> to vector<1x128xf32>
    %40 = vector.broadcast %39 : vector<1x128xf32> to vector<8x128xf32>
    %41 = arith.addf %37, %40 : vector<8x128xf32>
    %42 = math.tanh %41 : vector<8x128xf32>
    %43 = arith.addf %22, %42 : vector<8x128xf32>
    %c4 = arith.constant 4 : index
    %c0_29 = arith.constant 0 : index
    %c0_30 = arith.constant 0 : index
    %44 = vector.load %arg2[%c4, %c0_29, %c0_30] : memref<13x128x128xf32, #tpu.memory_space<vmem>>, vector<1x128x128xf32>
    %45 = vector.shape_cast %44 : vector<1x128x128xf32> to vector<128x128xf32>
    %cst_31 = arith.constant dense<0.000000e+00> : vector<8x128xf32>
    %46 = tpu.matmul %43, %45, %cst_31 {dimension_numbers = #tpu.dot_dimension_numbers<[1], [0], [0], [1], [0, 0, 1, 1], [], []>} : vector<8x128xf32>, vector<128x128xf32>, vector<8x128xf32> -> vector<8x128xf32>
    %c4_32 = arith.constant 4 : index
    %c0_33 = arith.constant 0 : index
    %c0_34 = arith.constant 0 : index
    %47 = vector.load %arg3[%c4_32, %c0_33, %c0_34] : memref<13x1x128xf32, #tpu.memory_space<vmem>>, vector<1x1x128xf32>
    %48 = vector.shape_cast %47 : vector<1x1x128xf32> to vector<1x128xf32>
    %49 = vector.broadcast %48 : vector<1x128xf32> to vector<8x128xf32>
    %50 = arith.addf %46, %49 : vector<8x128xf32>
    %cst_35 = arith.constant 0.000000e+00 : f32
    %51 = vector.broadcast %cst_35 : f32 to vector<8x128xf32>
    %52 = arith.cmpf ogt, %50, %51 : vector<8x128xf32>
    %cst_36 = arith.constant 0.00999999977 : f32
    %53 = vector.broadcast %cst_36 : f32 to vector<8x128xf32>
    %54 = arith.mulf %53, %50 : vector<8x128xf32>
    %55 = arith.select %52, %50, %54 : vector<8x128xi1>, vector<8x128xf32>
    %c5 = arith.constant 5 : index
    %c0_37 = arith.constant 0 : index
    %c0_38 = arith.constant 0 : index
    %56 = vector.load %arg2[%c5, %c0_37, %c0_38] : memref<13x128x128xf32, #tpu.memory_space<vmem>>, vector<1x128x128xf32>
    %57 = vector.shape_cast %56 : vector<1x128x128xf32> to vector<128x128xf32>
    %cst_39 = arith.constant dense<0.000000e+00> : vector<8x128xf32>
    %58 = tpu.matmul %55, %57, %cst_39 {dimension_numbers = #tpu.dot_dimension_numbers<[1], [0], [0], [1], [0, 0, 1, 1], [], []>} : vector<8x128xf32>, vector<128x128xf32>, vector<8x128xf32> -> vector<8x128xf32>
    %c5_40 = arith.constant 5 : index
    %c0_41 = arith.constant 0 : index
    %c0_42 = arith.constant 0 : index
    %59 = vector.load %arg3[%c5_40, %c0_41, %c0_42] : memref<13x1x128xf32, #tpu.memory_space<vmem>>, vector<1x1x128xf32>
    %60 = vector.shape_cast %59 : vector<1x1x128xf32> to vector<1x128xf32>
    %61 = vector.broadcast %60 : vector<1x128xf32> to vector<8x128xf32>
    %62 = arith.addf %58, %61 : vector<8x128xf32>
    %63 = math.tanh %62 : vector<8x128xf32>
    %64 = math.exp %63 : vector<8x128xf32>
    %65 = arith.mulf %43, %64 : vector<8x128xf32>
    %c6 = arith.constant 6 : index
    %c0_43 = arith.constant 0 : index
    %c0_44 = arith.constant 0 : index
    %66 = vector.load %arg2[%c6, %c0_43, %c0_44] : memref<13x128x128xf32, #tpu.memory_space<vmem>>, vector<1x128x128xf32>
    %67 = vector.shape_cast %66 : vector<1x128x128xf32> to vector<128x128xf32>
    %cst_45 = arith.constant dense<0.000000e+00> : vector<8x128xf32>
    %68 = tpu.matmul %65, %67, %cst_45 {dimension_numbers = #tpu.dot_dimension_numbers<[1], [0], [0], [1], [0, 0, 1, 1], [], []>} : vector<8x128xf32>, vector<128x128xf32>, vector<8x128xf32> -> vector<8x128xf32>
    %c6_46 = arith.constant 6 : index
    %c0_47 = arith.constant 0 : index
    %c0_48 = arith.constant 0 : index
    %69 = vector.load %arg3[%c6_46, %c0_47, %c0_48] : memref<13x1x128xf32, #tpu.memory_space<vmem>>, vector<1x1x128xf32>
    %70 = vector.shape_cast %69 : vector<1x1x128xf32> to vector<1x128xf32>
    %71 = vector.broadcast %70 : vector<1x128xf32> to vector<8x128xf32>
    %72 = arith.addf %68, %71 : vector<8x128xf32>
    %cst_49 = arith.constant 0.000000e+00 : f32
    %73 = vector.broadcast %cst_49 : f32 to vector<8x128xf32>
    %74 = arith.cmpf ogt, %72, %73 : vector<8x128xf32>
    %cst_50 = arith.constant 0.00999999977 : f32
    %75 = vector.broadcast %cst_50 : f32 to vector<8x128xf32>
    %76 = arith.mulf %75, %72 : vector<8x128xf32>
    %77 = arith.select %74, %72, %76 : vector<8x128xi1>, vector<8x128xf32>
    %c7 = arith.constant 7 : index
    %c0_51 = arith.constant 0 : index
    %c0_52 = arith.constant 0 : index
    %78 = vector.load %arg2[%c7, %c0_51, %c0_52] : memref<13x128x128xf32, #tpu.memory_space<vmem>>, vector<1x128x128xf32>
    %79 = vector.shape_cast %78 : vector<1x128x128xf32> to vector<128x128xf32>
    %cst_53 = arith.constant dense<0.000000e+00> : vector<8x128xf32>
    %80 = tpu.matmul %77, %79, %cst_53 {dimension_numbers = #tpu.dot_dimension_numbers<[1], [0], [0], [1], [0, 0, 1, 1], [], []>} : vector<8x128xf32>, vector<128x128xf32>, vector<8x128xf32> -> vector<8x128xf32>
    %c7_54 = arith.constant 7 : index
    %c0_55 = arith.constant 0 : index
    %c0_56 = arith.constant 0 : index
    %81 = vector.load %arg3[%c7_54, %c0_55, %c0_56] : memref<13x1x128xf32, #tpu.memory_space<vmem>>, vector<1x1x128xf32>
    %82 = vector.shape_cast %81 : vector<1x1x128xf32> to vector<1x128xf32>
    %83 = vector.broadcast %82 : vector<1x128xf32> to vector<8x128xf32>
    %84 = arith.addf %80, %83 : vector<8x128xf32>
    %85 = math.tanh %84 : vector<8x128xf32>
    %86 = arith.addf %65, %85 : vector<8x128xf32>
    %c8 = arith.constant 8 : index
    %c0_57 = arith.constant 0 : index
    %c0_58 = arith.constant 0 : index
    %87 = vector.load %arg2[%c8, %c0_57, %c0_58] : memref<13x128x128xf32, #tpu.memory_space<vmem>>, vector<1x128x128xf32>
    %88 = vector.shape_cast %87 : vector<1x128x128xf32> to vector<128x128xf32>
    %cst_59 = arith.constant dense<0.000000e+00> : vector<8x128xf32>
    %89 = tpu.matmul %86, %88, %cst_59 {dimension_numbers = #tpu.dot_dimension_numbers<[1], [0], [0], [1], [0, 0, 1, 1], [], []>} : vector<8x128xf32>, vector<128x128xf32>, vector<8x128xf32> -> vector<8x128xf32>
    %c8_60 = arith.constant 8 : index
    %c0_61 = arith.constant 0 : index
    %c0_62 = arith.constant 0 : index
    %90 = vector.load %arg3[%c8_60, %c0_61, %c0_62] : memref<13x1x128xf32, #tpu.memory_space<vmem>>, vector<1x1x128xf32>
    %91 = vector.shape_cast %90 : vector<1x1x128xf32> to vector<1x128xf32>
    %92 = vector.broadcast %91 : vector<1x128xf32> to vector<8x128xf32>
    %93 = arith.addf %89, %92 : vector<8x128xf32>
    %cst_63 = arith.constant 0.000000e+00 : f32
    %94 = vector.broadcast %cst_63 : f32 to vector<8x128xf32>
    %95 = arith.cmpf ogt, %93, %94 : vector<8x128xf32>
    %cst_64 = arith.constant 0.00999999977 : f32
    %96 = vector.broadcast %cst_64 : f32 to vector<8x128xf32>
    %97 = arith.mulf %96, %93 : vector<8x128xf32>
    %98 = arith.select %95, %93, %97 : vector<8x128xi1>, vector<8x128xf32>
    %c9 = arith.constant 9 : index
    %c0_65 = arith.constant 0 : index
    %c0_66 = arith.constant 0 : index
    %99 = vector.load %arg2[%c9, %c0_65, %c0_66] : memref<13x128x128xf32, #tpu.memory_space<vmem>>, vector<1x128x128xf32>
    %100 = vector.shape_cast %99 : vector<1x128x128xf32> to vector<128x128xf32>
    %cst_67 = arith.constant dense<0.000000e+00> : vector<8x128xf32>
    %101 = tpu.matmul %98, %100, %cst_67 {dimension_numbers = #tpu.dot_dimension_numbers<[1], [0], [0], [1], [0, 0, 1, 1], [], []>} : vector<8x128xf32>, vector<128x128xf32>, vector<8x128xf32> -> vector<8x128xf32>
    %c9_68 = arith.constant 9 : index
    %c0_69 = arith.constant 0 : index
    %c0_70 = arith.constant 0 : index
    %102 = vector.load %arg3[%c9_68, %c0_69, %c0_70] : memref<13x1x128xf32, #tpu.memory_space<vmem>>, vector<1x1x128xf32>
    %103 = vector.shape_cast %102 : vector<1x1x128xf32> to vector<1x128xf32>
    %104 = vector.broadcast %103 : vector<1x128xf32> to vector<8x128xf32>
    %105 = arith.addf %101, %104 : vector<8x128xf32>
    %106 = math.tanh %105 : vector<8x128xf32>
    %107 = math.exp %106 : vector<8x128xf32>
    %108 = arith.mulf %86, %107 : vector<8x128xf32>
    %c10 = arith.constant 10 : index
    %c0_71 = arith.constant 0 : index
    %c0_72 = arith.constant 0 : index
    %109 = vector.load %arg2[%c10, %c0_71, %c0_72] : memref<13x128x128xf32, #tpu.memory_space<vmem>>, vector<1x128x128xf32>
    %110 = vector.shape_cast %109 : vector<1x128x128xf32> to vector<128x128xf32>
    %cst_73 = arith.constant dense<0.000000e+00> : vector<8x128xf32>
    %111 = tpu.matmul %108, %110, %cst_73 {dimension_numbers = #tpu.dot_dimension_numbers<[1], [0], [0], [1], [0, 0, 1, 1], [], []>} : vector<8x128xf32>, vector<128x128xf32>, vector<8x128xf32> -> vector<8x128xf32>
    %c10_74 = arith.constant 10 : index
    %c0_75 = arith.constant 0 : index
    %c0_76 = arith.constant 0 : index
    %112 = vector.load %arg3[%c10_74, %c0_75, %c0_76] : memref<13x1x128xf32, #tpu.memory_space<vmem>>, vector<1x1x128xf32>
    %113 = vector.shape_cast %112 : vector<1x1x128xf32> to vector<1x128xf32>
    %114 = vector.broadcast %113 : vector<1x128xf32> to vector<8x128xf32>
    %115 = arith.addf %111, %114 : vector<8x128xf32>
    %cst_77 = arith.constant 0.000000e+00 : f32
    %116 = vector.broadcast %cst_77 : f32 to vector<8x128xf32>
    %117 = arith.cmpf ogt, %115, %116 : vector<8x128xf32>
    %cst_78 = arith.constant 0.00999999977 : f32
    %118 = vector.broadcast %cst_78 : f32 to vector<8x128xf32>
    %119 = arith.mulf %118, %115 : vector<8x128xf32>
    %120 = arith.select %117, %115, %119 : vector<8x128xi1>, vector<8x128xf32>
    %c11 = arith.constant 11 : index
    %c0_79 = arith.constant 0 : index
    %c0_80 = arith.constant 0 : index
    %121 = vector.load %arg2[%c11, %c0_79, %c0_80] : memref<13x128x128xf32, #tpu.memory_space<vmem>>, vector<1x128x128xf32>
    %122 = vector.shape_cast %121 : vector<1x128x128xf32> to vector<128x128xf32>
    %cst_81 = arith.constant dense<0.000000e+00> : vector<8x128xf32>
    %123 = tpu.matmul %120, %122, %cst_81 {dimension_numbers = #tpu.dot_dimension_numbers<[1], [0], [0], [1], [0, 0, 1, 1], [], []>} : vector<8x128xf32>, vector<128x128xf32>, vector<8x128xf32> -> vector<8x128xf32>
    %c11_82 = arith.constant 11 : index
    %c0_83 = arith.constant 0 : index
    %c0_84 = arith.constant 0 : index
    %124 = vector.load %arg3[%c11_82, %c0_83, %c0_84] : memref<13x1x128xf32, #tpu.memory_space<vmem>>, vector<1x1x128xf32>
    %125 = vector.shape_cast %124 : vector<1x1x128xf32> to vector<1x128xf32>
    %126 = vector.broadcast %125 : vector<1x128xf32> to vector<8x128xf32>
    %127 = arith.addf %123, %126 : vector<8x128xf32>
    %128 = math.tanh %127 : vector<8x128xf32>
    %129 = arith.addf %108, %128 : vector<8x128xf32>
    %130 = arith.addf %129, %0 : vector<8x128xf32>
    %c12 = arith.constant 12 : index
    %c0_85 = arith.constant 0 : index
    %c0_86 = arith.constant 0 : index
    %131 = vector.load %arg2[%c12, %c0_85, %c0_86] : memref<13x128x128xf32, #tpu.memory_space<vmem>>, vector<1x128x128xf32>
    %132 = vector.shape_cast %131 : vector<1x128x128xf32> to vector<128x128xf32>
    %cst_87 = arith.constant dense<0.000000e+00> : vector<8x128xf32>
    %133 = tpu.matmul %130, %132, %cst_87 {dimension_numbers = #tpu.dot_dimension_numbers<[1], [0], [0], [1], [0, 0, 1, 1], [], []>} : vector<8x128xf32>, vector<128x128xf32>, vector<8x128xf32> -> vector<8x128xf32>
    %c12_88 = arith.constant 12 : index
    %c0_89 = arith.constant 0 : index
    %c0_90 = arith.constant 0 : index
    %134 = vector.load %arg3[%c12_88, %c0_89, %c0_90] : memref<13x1x128xf32, #tpu.memory_space<vmem>>, vector<1x1x128xf32>
    %135 = vector.shape_cast %134 : vector<1x1x128xf32> to vector<1x128xf32>
    %136 = vector.broadcast %135 : vector<1x128xf32> to vector<8x128xf32>
    %137 = arith.addf %133, %136 : vector<8x128xf32>
    %c0_91 = arith.constant 0 : index
    %c0_92 = arith.constant 0 : index
    %138 = vector.load %arg4[%c0_91, %c0_92] : memref<8x128xf32, #tpu.memory_space<vmem>>, vector<8x128xf32>
    tpu.vector_store %arg4[%c0_91, %c0_92], %137 {strides = array<i32>} : memref<8x128xf32, #tpu.memory_space<vmem>>, vector<8x128xf32>,
    return
  }
  func.func @transform_0(%arg0: i32) -> (i32, i32) {
    %c0_i32 = arith.constant 0 : i32
    %c0_i32_0 = arith.constant 0 : i32
    return %arg0, %c0_i32 : i32, i32
  }
  func.func @transform_1(%arg0: i32) -> (i32, i32, i32) {
    %c0_i32 = arith.constant 0 : i32
    %c0_i32_0 = arith.constant 0 : i32
    %c0_i32_1 = arith.constant 0 : i32
    %c0_i32_2 = arith.constant 0 : i32
    return %c0_i32, %c0_i32_0, %c0_i32_1 : i32, i32, i32
  }
  func.func @transform_2(%arg0: i32) -> (i32, i32, i32) {
    %c0_i32 = arith.constant 0 : i32
    %c0_i32_0 = arith.constant 0 : i32
    %c0_i32_1 = arith.constant 0 : i32
    %c0_i32_2 = arith.constant 0 : i32
    return %c0_i32, %c0_i32_0, %c0_i32_1 : i32, i32, i32
  }
  func.func @transform_3(%arg0: i32) -> (i32, i32) {
    %c0_i32 = arith.constant 0 : i32
    %c0_i32_0 = arith.constant 0 : i32
    return %arg0, %c0_i32 : i32, i32
  }
}

module attributes {stable_mosaic.version = 11 : i64} {
  func.func @kernel(%arg0: i32, %arg1: memref<8x128xf32, #tpu.memory_space<vmem>>, %arg2: memref<13x128x128xf32, #tpu.memory_space<vmem>>, %arg3: memref<13x1x128xf32, #tpu.memory_space<vmem>>, %arg4: memref<8x128xf32, #tpu.memory_space<vmem>>) attributes {dimension_semantics = [#tpu.dimension_semantics<parallel>], iteration_bounds = array<i64: 1>, scalar_prefetch = 0 : i64, scratch_operands = 0 : i64, tpu.core_type = #tpu.core_type<tc>, window_params = [{transform_indices = @transform_0, window_bounds = array<i64: 8, 128>}, {pipeline_mode = #tpu.pipeline_mode<synchronous>, transform_indices = @transform_1, window_bounds = array<i64: 13, 128, 128>}, {pipeline_mode = #tpu.pipeline_mode<synchronous>, transform_indices = @transform_2, window_bounds = array<i64: 13, 1, 128>}, {transform_indices = @transform_3, window_bounds = array<i64: 8, 128>}]} {
    %c0 = arith.constant 0 : index
    %c0_0 = arith.constant 0 : index
    %0 = vector.load %arg1[%c0, %c0_0] : memref<8x128xf32, #tpu.memory_space<vmem>>, vector<8x128xf32>
    %c0_1 = arith.constant 0 : index
    %c0_2 = arith.constant 0 : index
    %c0_3 = arith.constant 0 : index
    %1 = vector.load %arg2[%c0_1, %c0_2, %c0_3] : memref<13x128x128xf32, #tpu.memory_space<vmem>>, vector<1x128x128xf32>
    %2 = vector.shape_cast %1 : vector<1x128x128xf32> to vector<128x128xf32>
    %cst = arith.constant dense<0.000000e+00> : vector<8x128xf32>
    %3 = tpu.matmul %0, %2, %cst {dimension_numbers = #tpu.dot_dimension_numbers<[1], [0], [0], [1], [0, 0, 1, 1], [], []>} : vector<8x128xf32>, vector<128x128xf32>, vector<8x128xf32> -> vector<8x128xf32>
    %c0_4 = arith.constant 0 : index
    %c0_5 = arith.constant 0 : index
    %c0_6 = arith.constant 0 : index
    %4 = vector.load %arg3[%c0_4, %c0_5, %c0_6] : memref<13x1x128xf32, #tpu.memory_space<vmem>>, vector<1x1x128xf32>
    %5 = vector.shape_cast %4 : vector<1x1x128xf32> to vector<1x128xf32>
    %6 = vector.broadcast %5 : vector<1x128xf32> to vector<8x128xf32>
    %7 = arith.addf %3, %6 : vector<8x128xf32>
    %cst_7 = arith.constant 0.000000e+00 : f32
    %8 = vector.broadcast %cst_7 : f32 to vector<8x128xf32>
    %9 = arith.cmpf ogt, %7, %8 : vector<8x128xf32>
    %cst_8 = arith.constant 0.00999999977 : f32
    %10 = vector.broadcast %cst_8 : f32 to vector<8x128xf32>
    %11 = arith.mulf %10, %7 : vector<8x128xf32>
    %12 = arith.select %9, %7, %11 : vector<8x128xi1>, vector<8x128xf32>
    %c1 = arith.constant 1 : index
    %c0_9 = arith.constant 0 : index
    %c0_10 = arith.constant 0 : index
    %13 = vector.load %arg2[%c1, %c0_9, %c0_10] : memref<13x128x128xf32, #tpu.memory_space<vmem>>, vector<1x128x128xf32>
    %14 = vector.shape_cast %13 : vector<1x128x128xf32> to vector<128x128xf32>
    %cst_11 = arith.constant dense<0.000000e+00> : vector<8x128xf32>
    %15 = tpu.matmul %12, %14, %cst_11 {dimension_numbers = #tpu.dot_dimension_numbers<[1], [0], [0], [1], [0, 0, 1, 1], [], []>} : vector<8x128xf32>, vector<128x128xf32>, vector<8x128xf32> -> vector<8x128xf32>
    %c1_12 = arith.constant 1 : index
    %c0_13 = arith.constant 0 : index
    %c0_14 = arith.constant 0 : index
    %16 = vector.load %arg3[%c1_12, %c0_13, %c0_14] : memref<13x1x128xf32, #tpu.memory_space<vmem>>, vector<1x1x128xf32>
    %17 = vector.shape_cast %16 : vector<1x1x128xf32> to vector<1x128xf32>
    %18 = vector.broadcast %17 : vector<1x128xf32> to vector<8x128xf32>
    %19 = arith.addf %15, %18 : vector<8x128xf32>
    %20 = math.tanh %19 : vector<8x128xf32>
    %21 = math.exp %20 : vector<8x128xf32>
    %22 = arith.mulf %0, %21 : vector<8x128xf32>
    %c2 = arith.constant 2 : index
    %c0_15 = arith.constant 0 : index
    %c0_16 = arith.constant 0 : index
    %23 = vector.load %arg2[%c2, %c0_15, %c0_16] : memref<13x128x128xf32, #tpu.memory_space<vmem>>, vector<1x128x128xf32>
    %24 = vector.shape_cast %23 : vector<1x128x128xf32> to vector<128x128xf32>
    %cst_17 = arith.constant dense<0.000000e+00> : vector<8x128xf32>
    %25 = tpu.matmul %22, %24, %cst_17 {dimension_numbers = #tpu.dot_dimension_numbers<[1], [0], [0], [1], [0, 0, 1, 1], [], []>} : vector<8x128xf32>, vector<128x128xf32>, vector<8x128xf32> -> vector<8x128xf32>
    %c2_18 = arith.constant 2 : index
    %c0_19 = arith.constant 0 : index
    %c0_20 = arith.constant 0 : index
    %26 = vector.load %arg3[%c2_18, %c0_19, %c0_20] : memref<13x1x128xf32, #tpu.memory_space<vmem>>, vector<1x1x128xf32>
    %27 = vector.shape_cast %26 : vector<1x1x128xf32> to vector<1x128xf32>
    %28 = vector.broadcast %27 : vector<1x128xf32> to vector<8x128xf32>
    %29 = arith.addf %25, %28 : vector<8x128xf32>
    %cst_21 = arith.constant 0.000000e+00 : f32
    %30 = vector.broadcast %cst_21 : f32 to vector<8x128xf32>
    %31 = arith.cmpf ogt, %29, %30 : vector<8x128xf32>
    %cst_22 = arith.constant 0.00999999977 : f32
    %32 = vector.broadcast %cst_22 : f32 to vector<8x128xf32>
    %33 = arith.mulf %32, %29 : vector<8x128xf32>
    %34 = arith.select %31, %29, %33 : vector<8x128xi1>, vector<8x128xf32>
    %c3 = arith.constant 3 : index
    %c0_23 = arith.constant 0 : index
    %c0_24 = arith.constant 0 : index
    %35 = vector.load %arg2[%c3, %c0_23, %c0_24] : memref<13x128x128xf32, #tpu.memory_space<vmem>>, vector<1x128x128xf32>
    %36 = vector.shape_cast %35 : vector<1x128x128xf32> to vector<128x128xf32>
    %cst_25 = arith.constant dense<0.000000e+00> : vector<8x128xf32>
    %37 = tpu.matmul %34, %36, %cst_25 {dimension_numbers = #tpu.dot_dimension_numbers<[1], [0], [0], [1], [0, 0, 1, 1], [], []>} : vector<8x128xf32>, vector<128x128xf32>, vector<8x128xf32> -> vector<8x128xf32>
    %c3_26 = arith.constant 3 : index
    %c0_27 = arith.constant 0 : index
    %c0_28 = arith.constant 0 : index
    %38 = vector.load %arg3[%c3_26, %c0_27, %c0_28] : memref<13x1x128xf32, #tpu.memory_space<vmem>>, vector<1x1x128xf32>
    %39 = vector.shape_cast %38 : vector<1x1x128xf32> to vector<1x128xf32>
    %40 = vector.broadcast %39 : vector<1x128xf32> to vector<8x128xf32>
    %41 = arith.addf %37, %40 : vector<8x128xf32>
    %42 = math.tanh %41 : vector<8x128xf32>
    %43 = arith.addf %22, %42 : vector<8x128xf32>
    %c4 = arith.constant 4 : index
    %c0_29 = arith.constant 0 : index
    %c0_30 = arith.constant 0 : index
    %44 = vector.load %arg2[%c4, %c0_29, %c0_30] : memref<13x128x128xf32, #tpu.memory_space<vmem>>, vector<1x128x128xf32>
    %45 = vector.shape_cast %44 : vector<1x128x128xf32> to vector<128x128xf32>
    %cst_31 = arith.constant dense<0.000000e+00> : vector<8x128xf32>
    %46 = tpu.matmul %43, %45, %cst_31 {dimension_numbers = #tpu.dot_dimension_numbers<[1], [0], [0], [1], [0, 0, 1, 1], [], []>} : vector<8x128xf32>, vector<128x128xf32>, vector<8x128xf32> -> vector<8x128xf32>
    %c4_32 = arith.constant 4 : index
    %c0_33 = arith.constant 0 : index
    %c0_34 = arith.constant 0 : index
    %47 = vector.load %arg3[%c4_32, %c0_33, %c0_34] : memref<13x1x128xf32, #tpu.memory_space<vmem>>, vector<1x1x128xf32>
    %48 = vector.shape_cast %47 : vector<1x1x128xf32> to vector<1x128xf32>
    %49 = vector.broadcast %48 : vector<1x128xf32> to vector<8x128xf32>
    %50 = arith.addf %46, %49 : vector<8x128xf32>
    %cst_35 = arith.constant 0.000000e+00 : f32
    %51 = vector.broadcast %cst_35 : f32 to vector<8x128xf32>
    %52 = arith.cmpf ogt, %50, %51 : vector<8x128xf32>
    %cst_36 = arith.constant 0.00999999977 : f32
    %53 = vector.broadcast %cst_36 : f32 to vector<8x128xf32>
    %54 = arith.mulf %53, %50 : vector<8x128xf32>
    %55 = arith.select %52, %50, %54 : vector<8x128xi1>, vector<8x128xf32>
    %c5 = arith.constant 5 : index
    %c0_37 = arith.constant 0 : index
    %c0_38 = arith.constant 0 : index
    %56 = vector.load %arg2[%c5, %c0_37, %c0_38] : memref<13x128x128xf32, #tpu.memory_space<vmem>>, vector<1x128x128xf32>
    %57 = vector.shape_cast %56 : vector<1x128x128xf32> to vector<128x128xf32>
    %cst_39 = arith.constant dense<0.000000e+00> : vector<8x128xf32>
    %58 = tpu.matmul %55, %57, %cst_39 {dimension_numbers = #tpu.dot_dimension_numbers<[1], [0], [0], [1], [0, 0, 1, 1], [], []>} : vector<8x128xf32>, vector<128x128xf32>, vector<8x128xf32> -> vector<8x128xf32>
    %c5_40 = arith.constant 5 : index
    %c0_41 = arith.constant 0 : index
    %c0_42 = arith.constant 0 : index
    %59 = vector.load %arg3[%c5_40, %c0_41, %c0_42] : memref<13x1x128xf32, #tpu.memory_space<vmem>>, vector<1x1x128xf32>
    %60 = vector.shape_cast %59 : vector<1x1x128xf32> to vector<1x128xf32>
    %61 = vector.broadcast %60 : vector<1x128xf32> to vector<8x128xf32>
    %62 = arith.addf %58, %61 : vector<8x128xf32>
    %63 = math.tanh %62 : vector<8x128xf32>
    %64 = math.exp %63 : vector<8x128xf32>
    %65 = arith.mulf %43, %64 : vector<8x128xf32>
    %c6 = arith.constant 6 : index
    %c0_43 = arith.constant 0 : index
    %c0_44 = arith.constant 0 : index
    %66 = vector.load %arg2[%c6, %c0_43, %c0_44] : memref<13x128x128xf32, #tpu.memory_space<vmem>>, vector<1x128x128xf32>
    %67 = vector.shape_cast %66 : vector<1x128x128xf32> to vector<128x128xf32>
    %cst_45 = arith.constant dense<0.000000e+00> : vector<8x128xf32>
    %68 = tpu.matmul %65, %67, %cst_45 {dimension_numbers = #tpu.dot_dimension_numbers<[1], [0], [0], [1], [0, 0, 1, 1], [], []>} : vector<8x128xf32>, vector<128x128xf32>, vector<8x128xf32> -> vector<8x128xf32>
    %c6_46 = arith.constant 6 : index
    %c0_47 = arith.constant 0 : index
    %c0_48 = arith.constant 0 : index
    %69 = vector.load %arg3[%c6_46, %c0_47, %c0_48] : memref<13x1x128xf32, #tpu.memory_space<vmem>>, vector<1x1x128xf32>
    %70 = vector.shape_cast %69 : vector<1x1x128xf32> to vector<1x128xf32>
    %71 = vector.broadcast %70 : vector<1x128xf32> to vector<8x128xf32>
    %72 = arith.addf %68, %71 : vector<8x128xf32>
    %cst_49 = arith.constant 0.000000e+00 : f32
    %73 = vector.broadcast %cst_49 : f32 to vector<8x128xf32>
    %74 = arith.cmpf ogt, %72, %73 : vector<8x128xf32>
    %cst_50 = arith.constant 0.00999999977 : f32
    %75 = vector.broadcast %cst_50 : f32 to vector<8x128xf32>
    %76 = arith.mulf %75, %72 : vector<8x128xf32>
    %77 = arith.select %74, %72, %76 : vector<8x128xi1>, vector<8x128xf32>
    %c7 = arith.constant 7 : index
    %c0_51 = arith.constant 0 : index
    %c0_52 = arith.constant 0 : index
    %78 = vector.load %arg2[%c7, %c0_51, %c0_52] : memref<13x128x128xf32, #tpu.memory_space<vmem>>, vector<1x128x128xf32>
    %79 = vector.shape_cast %78 : vector<1x128x128xf32> to vector<128x128xf32>
    %cst_53 = arith.constant dense<0.000000e+00> : vector<8x128xf32>
    %80 = tpu.matmul %77, %79, %cst_53 {dimension_numbers = #tpu.dot_dimension_numbers<[1], [0], [0], [1], [0, 0, 1, 1], [], []>} : vector<8x128xf32>, vector<128x128xf32>, vector<8x128xf32> -> vector<8x128xf32>
    %c7_54 = arith.constant 7 : index
    %c0_55 = arith.constant 0 : index
    %c0_56 = arith.constant 0 : index
    %81 = vector.load %arg3[%c7_54, %c0_55, %c0_56] : memref<13x1x128xf32, #tpu.memory_space<vmem>>, vector<1x1x128xf32>
    %82 = vector.shape_cast %81 : vector<1x1x128xf32> to vector<1x128xf32>
    %83 = vector.broadcast %82 : vector<1x128xf32> to vector<8x128xf32>
    %84 = arith.addf %80, %83 : vector<8x128xf32>
    %85 = math.tanh %84 : vector<8x128xf32>
    %86 = arith.addf %65, %85 : vector<8x128xf32>
    %c8 = arith.constant 8 : index
    %c0_57 = arith.constant 0 : index
    %c0_58 = arith.constant 0 : index
    %87 = vector.load %arg2[%c8, %c0_57, %c0_58] : memref<13x128x128xf32, #tpu.memory_space<vmem>>, vector<1x128x128xf32>
    %88 = vector.shape_cast %87 : vector<1x128x128xf32> to vector<128x128xf32>
    %cst_59 = arith.constant dense<0.000000e+00> : vector<8x128xf32>
    %89 = tpu.matmul %86, %88, %cst_59 {dimension_numbers = #tpu.dot_dimension_numbers<[1], [0], [0], [1], [0, 0, 1, 1], [], []>} : vector<8x128xf32>, vector<128x128xf32>, vector<8x128xf32> -> vector<8x128xf32>
    %c8_60 = arith.constant 8 : index
    %c0_61 = arith.constant 0 : index
    %c0_62 = arith.constant 0 : index
    %90 = vector.load %arg3[%c8_60, %c0_61, %c0_62] : memref<13x1x128xf32, #tpu.memory_space<vmem>>, vector<1x1x128xf32>
    %91 = vector.shape_cast %90 : vector<1x1x128xf32> to vector<1x128xf32>
    %92 = vector.broadcast %91 : vector<1x128xf32> to vector<8x128xf32>
    %93 = arith.addf %89, %92 : vector<8x128xf32>
    %cst_63 = arith.constant 0.000000e+00 : f32
    %94 = vector.broadcast %cst_63 : f32 to vector<8x128xf32>
    %95 = arith.cmpf ogt, %93, %94 : vector<8x128xf32>
    %cst_64 = arith.constant 0.00999999977 : f32
    %96 = vector.broadcast %cst_64 : f32 to vector<8x128xf32>
    %97 = arith.mulf %96, %93 : vector<8x128xf32>
    %98 = arith.select %95, %93, %97 : vector<8x128xi1>, vector<8x128xf32>
    %c9 = arith.constant 9 : index
    %c0_65 = arith.constant 0 : index
    %c0_66 = arith.constant 0 : index
    %99 = vector.load %arg2[%c9, %c0_65, %c0_66] : memref<13x128x128xf32, #tpu.memory_space<vmem>>, vector<1x128x128xf32>
    %100 = vector.shape_cast %99 : vector<1x128x128xf32> to vector<128x128xf32>
    %cst_67 = arith.constant dense<0.000000e+00> : vector<8x128xf32>
    %101 = tpu.matmul %98, %100, %cst_67 {dimension_numbers = #tpu.dot_dimension_numbers<[1], [0], [0], [1], [0, 0, 1, 1], [], []>} : vector<8x128xf32>, vector<128x128xf32>, vector<8x128xf32> -> vector<8x128xf32>
    %c9_68 = arith.constant 9 : index
    %c0_69 = arith.constant 0 : index
    %c0_70 = arith.constant 0 : index
    %102 = vector.load %arg3[%c9_68, %c0_69, %c0_70] : memref<13x1x128xf32, #tpu.memory_space<vmem>>, vector<1x1x128xf32>
    %103 = vector.shape_cast %102 : vector<1x1x128xf32> to vector<1x128xf32>
    %104 = vector.broadcast %103 : vector<1x128xf32> to vector<8x128xf32>
    %105 = arith.addf %101, %104 : vector<8x128xf32>
    %106 = math.tanh %105 : vector<8x128xf32>
    %107 = math.exp %106 : vector<8x128xf32>
    %108 = arith.mulf %86, %107 : vector<8x128xf32>
    %c10 = arith.constant 10 : index
    %c0_71 = arith.constant 0 : index
    %c0_72 = arith.constant 0 : index
    %109 = vector.load %arg2[%c10, %c0_71, %c0_72] : memref<13x128x128xf32, #tpu.memory_space<vmem>>, vector<1x128x128xf32>
    %110 = vector.shape_cast %109 : vector<1x128x128xf32> to vector<128x128xf32>
    %cst_73 = arith.constant dense<0.000000e+00> : vector<8x128xf32>
    %111 = tpu.matmul %108, %110, %cst_73 {dimension_numbers = #tpu.dot_dimension_numbers<[1], [0], [0], [1], [0, 0, 1, 1], [], []>} : vector<8x128xf32>, vector<128x128xf32>, vector<8x128xf32> -> vector<8x128xf32>
    %c10_74 = arith.constant 10 : index
    %c0_75 = arith.constant 0 : index
    %c0_76 = arith.constant 0 : index
    %112 = vector.load %arg3[%c10_74, %c0_75, %c0_76] : memref<13x1x128xf32, #tpu.memory_space<vmem>>, vector<1x1x128xf32>
    %113 = vector.shape_cast %112 : vector<1x1x128xf32> to vector<1x128xf32>
    %114 = vector.broadcast %113 : vector<1x128xf32> to vector<8x128xf32>
    %115 = arith.addf %111, %114 : vector<8x128xf32>
    %cst_77 = arith.constant 0.000000e+00 : f32
    %116 = vector.broadcast %cst_77 : f32 to vector<8x128xf32>
    %117 = arith.cmpf ogt, %115, %116 : vector<8x128xf32>
    %cst_78 = arith.constant 0.00999999977 : f32
    %118 = vector.broadcast %cst_78 : f32 to vector<8x128xf32>
    %119 = arith.mulf %118, %115 : vector<8x128xf32>
    %120 = arith.select %117, %115, %119 : vector<8x128xi1>, vector<8x128xf32>
    %c11 = arith.constant 11 : index
    %c0_79 = arith.constant 0 : index
    %c0_80 = arith.constant 0 : index
    %121 = vector.load %arg2[%c11, %c0_79, %c0_80] : memref<13x128x128xf32, #tpu.memory_space<vmem>>, vector<1x128x128xf32>
    %122 = vector.shape_cast %121 : vector<1x128x128xf32> to vector<128x128xf32>
    %cst_81 = arith.constant dense<0.000000e+00> : vector<8x128xf32>
    %123 = tpu.matmul %120, %122, %cst_81 {dimension_numbers = #tpu.dot_dimension_numbers<[1], [0], [0], [1], [0, 0, 1, 1], [], []>} : vector<8x128xf32>, vector<128x128xf32>, vector<8x128xf32> -> vector<8x128xf32>
    %c11_82 = arith.constant 11 : index
    %c0_83 = arith.constant 0 : index
    %c0_84 = arith.constant 0 : index
    %124 = vector.load %arg3[%c11_82, %c0_83, %c0_84] : memref<13x1x128xf32, #tpu.memory_space<vmem>>, vector<1x1x128xf32>
    %125 = vector.shape_cast %124 : vector<1x1x128xf32> to vector<1x128xf32>
    %126 = vector.broadcast %125 : vector<1x128xf32> to vector<8x128xf32>
    %127 = arith.addf %123, %126 : vector<8x128xf32>
    %128 = math.tanh %127 : vector<8x128xf32>
    %129 = arith.addf %108, %128 : vector<8x128xf32>
    %130 = arith.addf %129, %0 : vector<8x128xf32>
    %c12 = arith.constant 12 : index
    %c0_85 = arith.constant 0 : index
    %c0_86 = arith.constant 0 : index
    %131 = vector.load %arg2[%c12, %c0_85, %c0_86] : memref<13x128x128xf32, #tpu.memory_space<vmem>>, vector<1x128x128xf32>
    %132 = vector.shape_cast %131 : vector<1x128x128xf32> to vector<128x128xf32>
    %cst_87 = arith.constant dense<0.000000e+00> : vector<8x128xf32>
    %133 = tpu.matmul %130, %132, %cst_87 {dimension_numbers = #tpu.dot_dimension_numbers<[1], [0], [0], [1], [0, 0, 1, 1], [], []>} : vector<8x128xf32>, vector<128x128xf32>, vector<8x128xf32> -> vector<8x128xf32>
    %c12_88 = arith.constant 12 : index
    %c0_89 = arith.constant 0 : index
    %c0_90 = arith.constant 0 : index
    %134 = vector.load %arg3[%c12_88, %c0_89, %c0_90] : memref<13x1x128xf32, #tpu.memory_space<vmem>>, vector<1x1x128xf32>
    %135 = vector.shape_cast %134 : vector<1x1x128xf32> to vector<1x128xf32>
    %136 = vector.broadcast %135 : vector<1x128xf32> to vector<8x128xf32>
    %137 = arith.addf %133, %136 : vector<8x128xf32>
    %c0_91 = arith.constant 0 : index
    %c0_92 = arith.constant 0 : index
    %138 = vector.load %arg4[%c0_91, %c0_92] : memref<8x128xf32, #tpu.memory_space<vmem>>, vector<8x128xf32>
    tpu.vector_store %arg4[%c0_91, %c0_92], %137 {strides = array<i32>} : memref<8x128xf32, #tpu.memory_space<vmem>>, vector<8x128xf32>,
    return
  }
  func.func @transform_0(%arg0: i32) -> (i32, i32) {
    %c0_i32 = arith.constant 0 : i32
    %c0_i32_0 = arith.constant 0 : i32
    return %arg0, %c0_i32 : i32, i32
  }
  func.func @transform_1(%arg0: i32) -> (i32, i32, i32) {
    %c0_i32 = arith.constant 0 : i32
    %c0_i32_0 = arith.constant 0 : i32
    %c0_i32_1 = arith.constant 0 : i32
    %c0_i32_2 = arith.constant 0 : i32
    return %c0_i32, %c0_i32_0, %c0_i32_1 : i32, i32, i32
  }
  func.func @transform_2(%arg0: i32) -> (i32, i32, i32) {
    %c0_i32 = arith.constant 0 : i32
    %c0_i32_0 = arith.constant 0 : i32
    %c0_i32_1 = arith.constant 0 : i32
    %c0_i32_2 = arith.constant 0 : i32
    return %c0_i32, %c0_i32_0, %c0_i32_1 : i32, i32, i32
  }
  func.func @transform_3(%arg0: i32) -> (i32, i32) {
    %c0_i32 = arith.constant 0 : i32
    %c0_i32_0 = arith.constant 0 : i32
    return %arg0, %c0_i32 : i32, i32
  }
}

</mosaic_0001>

<llo_original>
// kernel: tpu_custom_call.1
$region0: #{tpu_custom_call.1}
  #allocation0 [shape = 'u32[]', space=smem, size = 0x4, offset = 0x4, fixed_abs, tag = 'smem constant byte address 0x4 - core index']
  #allocation1 [shape = 'u32[144,128]{1,0:T(1,128)}', space=vmem, size = 0x12000, scoped, tag = 'internal scratch']
  %s0 = inlined_call_operand.hbm [shape: f32[8,128], index: 0, kind: input, shape index: {}]
  %s1 = inlined_call_operand.hbm [shape: f32[13,128,128], index: 1, kind: input, shape index: {}]
  %s2 = inlined_call_operand.hbm [shape: f32[13,1,128], index: 2, kind: input, shape index: {}]
  %s3 = inlined_call_operand.hbm [shape: f32[8,128], index: 3, kind: output, shape index: {}]
  %s4 = sld [smem:[#allocation0]]
  $region34: #{tpu_custom_call.1} parent=0
    _
  %s6 = ssub.s32 1, %s4
  %s7 = scalar_select 0, %s6, %s4
  $region1: #{tpu_custom_call.1} parent=0
    #allocation2 [shape = 'u8[4096]{0}', space=vmem, size = 0x1000, scoped, tag = 'input window, operand 0, single buffered']
    #allocation3 [shape = 's32[1]{0}', space=sflag, size = 0x4, scoped, tag = 'scoped memory for tpu_custom_call.1']
    #allocation4 [shape = 's32[1]{0}', space=sflag, size = 0x4, scoped, tag = 'scoped memory for tpu_custom_call.1']
    #allocation5 [shape = 'u8[851968]{0}', space=vmem, size = 0xd0000, scoped, tag = 'input window, operand 1, single buffered']
    #allocation6 [shape = 's32[1]{0}', space=sflag, size = 0x4, scoped, tag = 'scoped memory for tpu_custom_call.1']
    #allocation7 [shape = 'u8[6656]{0}', space=vmem, size = 0x1c00, scoped, tag = 'input window, operand 2, single buffered']
    #allocation8 [shape = 'u8[4096]{0}', space=vmem, size = 0x1000, scoped, tag = 'output window, operand 0, single buffered']
    %8 = vsyncpa [#allocation3], 0
    %9 = vsyncpa [#allocation6], 0
    %10 = vsyncpa [#allocation4], 0
    // Predicated region
    $region2: #{tpu_custom_call.1} parent=1 // pred_check
      _
    $region3: #{tpu_custom_call.1} parent=1 // pred_check_branch
      %12 = sbr.rel (0) target = $region5
    $region4: #{tpu_custom_call.1} parent=1 // pred_region
      %s14 = ssub.s32 128, 128
      %15 = vsyncadd [#allocation3], %s14
      %s17 = sshll.u32 [#allocation2], 4
      %s18 = int_to_ptr.vmem [resolvable:$true] %s17
      %20 = dma.hbm_to_vmem [thread:$0]  %s0, 128, %s18, [#allocation3]
    $region5: #{tpu_custom_call.1} parent=1 // pred_fallthru
      _
    // Predicated region
    $region6: #{tpu_custom_call.1} parent=1 // pred_check
      _
    $region7: #{tpu_custom_call.1} parent=1 // pred_check_branch
      %22 = sbr.rel (0) target = $region9
    $region8: #{tpu_custom_call.1} parent=1 // pred_region
      %s24 = ssub.s32 26624, 26624
      %25 = vsyncadd [#allocation6], %s24
      %s26 = sshll.u32 [#allocation5], 4
      %s27 = int_to_ptr.vmem [resolvable:$true] %s26
      %32 = dma.hbm_to_vmem [thread:$0]  %s1, 26624, %s27, [#allocation6], 128, 128, 8
    $region9: #{tpu_custom_call.1} parent=1 // pred_fallthru
      _
    // Predicated region
    $region10: #{tpu_custom_call.1} parent=1 // pred_check
      _
    $region11: #{tpu_custom_call.1} parent=1 // pred_check_branch
      %34 = sbr.rel (0) target = $region13
    $region12: #{tpu_custom_call.1} parent=1 // pred_region
      %s36 = ssub.s32 208, 208
      %37 = vsyncadd [#allocation6], %s36
      %s38 = sshll.u32 [#allocation7], 4
      %s39 = int_to_ptr.vmem [resolvable:$true] %s38
      %44 = dma.hbm_to_vmem [thread:$0]  %s2, 208, %s39, [#allocation6], 16, 16, 1
    $region13: #{tpu_custom_call.1} parent=1 // pred_fallthru
      _
    // Predicated region
    $region14: #{tpu_custom_call.1} parent=1 // pred_check
      _
    $region15: #{tpu_custom_call.1} parent=1 // pred_check_branch
      %46 = sbr.rel (0) target = $region17
    $region16: #{tpu_custom_call.1} parent=1 // pred_region
      %47 = dma.done [#allocation3], 128
    $region17: #{tpu_custom_call.1} parent=1 // pred_fallthru
      _
    // Predicated region
    $region18: #{tpu_custom_call.1} parent=1 // pred_check
      _
    $region19: #{tpu_custom_call.1} parent=1 // pred_check_branch
      %49 = sbr.rel (0) target = $region21
    $region20: #{tpu_custom_call.1} parent=1 // pred_region
      %50 = dma.done [#allocation6], 26624
    $region21: #{tpu_custom_call.1} parent=1 // pred_fallthru
      _
    // Predicated region
    $region22: #{tpu_custom_call.1} parent=1 // pred_check
      _
    $region23: #{tpu_custom_call.1} parent=1 // pred_check_branch
      %52 = sbr.rel (0) target = $region25
    $region24: #{tpu_custom_call.1} parent=1 // pred_region
      %53 = dma.done [#allocation6], 208
    $region25: #{tpu_custom_call.1} parent=1 // pred_fallthru
      _
    %v54 = vld [vmem:[#allocation2] sm:$0xff]
    %v55 = vld [vmem:[#allocation5] sm:$0xff]
    %v56 = vld [vmem:[#allocation5 + $0x8] sm:$0xff]
    %v57 = vld [vmem:[#allocation5 + $0x10] sm:$0xff]
    %v58 = vld [vmem:[#allocation5 + $0x18] sm:$0xff]
    %v59 = vld [vmem:[#allocation5 + $0x20] sm:$0xff]
    %v60 = vld [vmem:[#allocation5 + $0x28] sm:$0xff]
    %v61 = vld [vmem:[#allocation5 + $0x30] sm:$0xff]
    %v62 = vld [vmem:[#allocation5 + $0x38] sm:$0xff]
    %v63 = vld [vmem:[#allocation5 + $0x40] sm:$0xff]
    %v64 = vld [vmem:[#allocation5 + $0x48] sm:$0xff]
    %v65 = vld [vmem:[#allocation5 + $0x50] sm:$0xff]
    %v66 = vld [vmem:[#allocation5 + $0x58] sm:$0xff]
    %v67 = vld [vmem:[#allocation5 + $0x60] sm:$0xff]
    %v68 = vld [vmem:[#allocation5 + $0x68] sm:$0xff]
    %v69 = vld [vmem:[#allocation5 + $0x70] sm:$0xff]
    %v70 = vld [vmem:[#allocation5 + $0x78] sm:$0xff]
    %v71 = vld [vmem:[#allocation7] sm:$0x1]
    %v73 = vlaneseq
    %v74 = vshrl.u32 %v73, 7
    %v75 = vsub.s32 0, %v74
    %v76 = vrot.slane %v71, %v75
    %78 = vmatprep.subr.mxu0 0.0
    %79 = vmatpush1.msra.mxu0 %v55
    %80 = vmatprep.subr.mxu0 0.0
    %81 = vmatpush1.msra.mxu0 %v56
    %82 = vmatprep.subr.mxu0 0.0
    %83 = vmatpush1.msra.mxu0 %v57
    %84 = vmatprep.subr.mxu0 0.0
    %85 = vmatpush1.msra.mxu0 %v58
    %86 = vmatprep.subr.mxu0 0.0
    %87 = vmatpush1.msra.mxu0 %v59
    %88 = vmatprep.subr.mxu0 0.0
    %89 = vmatpush1.msra.mxu0 %v60
    %90 = vmatprep.subr.mxu0 0.0
    %91 = vmatpush1.msra.mxu0 %v61
    %92 = vmatprep.subr.mxu0 0.0
    %93 = vmatpush1.msra.mxu0 %v62
    %94 = vmatprep.subr.mxu0 0.0
    %95 = vmatpush1.msra.mxu0 %v63
    %96 = vmatprep.subr.mxu0 0.0
    %97 = vmatpush1.msra.mxu0 %v64
    %98 = vmatprep.subr.mxu0 0.0
    %99 = vmatpush1.msra.mxu0 %v65
    %100 = vmatprep.subr.mxu0 0.0
    %101 = vmatpush1.msra.mxu0 %v66
    %102 = vmatprep.subr.mxu0 0.0
    %103 = vmatpush1.msra.mxu0 %v67
    %104 = vmatprep.subr.mxu0 0.0
    %105 = vmatpush1.msra.mxu0 %v68
    %106 = vmatprep.subr.mxu0 0.0
    %107 = vmatpush1.msra.mxu0 %v69
    %108 = vmatprep.subr.mxu0 0.0
    %109 = vmatpush1.msra.mxu0 %v70
    %110 = vmatprep.subr.mxu0 0.0
    %111 = vmatpush1.msra.mxu0 0.0
    %112 = vmatprep.subr.mxu0 0.0
    %113 = vmatpush1.msra.mxu0 0.0
    %114 = vmatprep.subr.mxu0 0.0
    %115 = vmatpush1.msra.mxu0 0.0
    %116 = vmatprep.subr.mxu0 0.0
    %117 = vmatpush1.msra.mxu0 0.0
    %118 = vmatprep.subr.mxu0 0.0
    %119 = vmatpush1.msra.mxu0 0.0
    %120 = vmatprep.subr.mxu0 0.0
    %121 = vmatpush1.msra.mxu0 0.0
    %122 = vmatprep.subr.mxu0 0.0
    %123 = vmatpush1.msra.mxu0 0.0
    %124 = vmatprep.subr.mxu0 0.0
    %125 = vmatpush1.msra.mxu0 0.0
    %126 = vmatprep.subr.mxu0 0.0
    %127 = vmatpush1.msra.mxu0 0.0
    %128 = vmatprep.subr.mxu0 0.0
    %129 = vmatpush1.msra.mxu0 0.0
    %130 = vmatprep.subr.mxu0 0.0
    %131 = vmatpush1.msra.mxu0 0.0
    %132 = vmatprep.subr.mxu0 0.0
    %133 = vmatpush1.msra.mxu0 0.0
    %134 = vmatprep.subr.mxu0 0.0
    %135 = vmatpush1.msra.mxu0 0.0
    %136 = vmatprep.subr.mxu0 0.0
    %137 = vmatpush1.msra.mxu0 0.0
    %138 = vmatprep.subr.mxu0 0.0
    %139 = vmatpush1.msra.mxu0 0.0
    %140 = vmatprep.subr.mxu0 0.0
    %141 = vmatpush1.msra.mxu0 0.0
    %142 = vmatprep.mubr.f32.mxu0 0.0
    %143 = vmatmul.mubr.f32.gmra.mrb[0].mxu0 %v54
    %v144 = vpop.f32.mrb[0].mxu0
    %v145 = vadd.f32 %v76, %v144
    %v146 = vpop.f32.mrb[0].mxu0
    %147 = vdwg.mxu0
    %vm148 = vcmp.gt.f32.partialorder %v145, 0.0
    %v149 = vmul.f32 %v145, 0.01
    %v150 = vsel %vm148, %v145, %v149
    %s151 = scalar_lea.vmem [#allocation5], 128
    %v152 = vld [vmem:[%s151] sm:$0xff]
    %v153 = vld [vmem:[%s151 + $0x8] sm:$0xff]
    %v154 = vld [vmem:[%s151 + $0x10] sm:$0xff]
    %v155 = vld [vmem:[%s151 + $0x18] sm:$0xff]
    %v156 = vld [vmem:[%s151 + $0x20] sm:$0xff]
    %v157 = vld [vmem:[%s151 + $0x28] sm:$0xff]
    %v158 = vld [vmem:[%s151 + $0x30] sm:$0xff]
    %v159 = vld [vmem:[%s151 + $0x38] sm:$0xff]
    %v160 = vld [vmem:[%s151 + $0x40] sm:$0xff]
    %v161 = vld [vmem:[%s151 + $0x48] sm:$0xff]
    %v162 = vld [vmem:[%s151 + $0x50] sm:$0xff]
    %v163 = vld [vmem:[%s151 + $0x58] sm:$0xff]
    %v164 = vld [vmem:[%s151 + $0x60] sm:$0xff]
    %v165 = vld [vmem:[%s151 + $0x68] sm:$0xff]
    %v166 = vld [vmem:[%s151 + $0x70] sm:$0xff]
    %v167 = vld [vmem:[%s151 + $0x78] sm:$0xff]
    %s168 = scalar_lea.vmem [#allocation7], 1
    %v169 = vld [vmem:[%s168] sm:$0x1]
    %v171 = vlaneseq
    %v172 = vshrl.u32 %v171, 7
    %v173 = vsub.s32 0, %v172
    %v174 = vrot.slane %v169, %v173
    %176 = vmatprep.subr.mxu0 0.0
    %177 = vmatpush1.msra.mxu0 %v152
    %178 = vmatprep.subr.mxu0 0.0
    %179 = vmatpush1.msra.mxu0 %v153
    %180 = vmatprep.subr.mxu0 0.0
    %181 = vmatpush1.msra.mxu0 %v154
    %182 = vmatprep.subr.mxu0 0.0
    %183 = vmatpush1.msra.mxu0 %v155
    %184 = vmatprep.subr.mxu0 0.0
    %185 = vmatpush1.msra.mxu0 %v156
    %186 = vmatprep.subr.mxu0 0.0
    %187 = vmatpush1.msra.mxu0 %v157
    %188 = vmatprep.subr.mxu0 0.0
    %189 = vmatpush1.msra.mxu0 %v158
    %190 = vmatprep.subr.mxu0 0.0
    %191 = vmatpush1.msra.mxu0 %v159
    %192 = vmatprep.subr.mxu0 0.0
    %193 = vmatpush1.msra.mxu0 %v160
    %194 = vmatprep.subr.mxu0 0.0
    %195 = vmatpush1.msra.mxu0 %v161
    %196 = vmatprep.subr.mxu0 0.0
    %197 = vmatpush1.msra.mxu0 %v162
    %198 = vmatprep.subr.mxu0 0.0
    %199 = vmatpush1.msra.mxu0 %v163
    %200 = vmatprep.subr.mxu0 0.0
    %201 = vmatpush1.msra.mxu0 %v164
    %202 = vmatprep.subr.mxu0 0.0
    %203 = vmatpush1.msra.mxu0 %v165
    %204 = vmatprep.subr.mxu0 0.0
    %205 = vmatpush1.msra.mxu0 %v166
    %206 = vmatprep.subr.mxu0 0.0
    %207 = vmatpush1.msra.mxu0 %v167
    %208 = vmatprep.subr.mxu0 0.0
    %209 = vmatpush1.msra.mxu0 0.0
    %210 = vmatprep.subr.mxu0 0.0
    %211 = vmatpush1.msra.mxu0 0.0
    %212 = vmatprep.subr.mxu0 0.0
    %213 = vmatpush1.msra.mxu0 0.0
    %214 = vmatprep.subr.mxu0 0.0
    %215 = vmatpush1.msra.mxu0 0.0
    %216 = vmatprep.subr.mxu0 0.0
    %217 = vmatpush1.msra.mxu0 0.0
    %218 = vmatprep.subr.mxu0 0.0
    %219 = vmatpush1.msra.mxu0 0.0
    %220 = vmatprep.subr.mxu0 0.0
    %221 = vmatpush1.msra.mxu0 0.0
    %222 = vmatprep.subr.mxu0 0.0
    %223 = vmatpush1.msra.mxu0 0.0
    %224 = vmatprep.subr.mxu0 0.0
    %225 = vmatpush1.msra.mxu0 0.0
    %226 = vmatprep.subr.mxu0 0.0
    %227 = vmatpush1.msra.mxu0 0.0
    %228 = vmatprep.subr.mxu0 0.0
    %229 = vmatpush1.msra.mxu0 0.0
    %230 = vmatprep.subr.mxu0 0.0
    %231 = vmatpush1.msra.mxu0 0.0
    %232 = vmatprep.subr.mxu0 0.0
    %233 = vmatpush1.msra.mxu0 0.0
    %234 = vmatprep.subr.mxu0 0.0
    %235 = vmatpush1.msra.mxu0 0.0
    %236 = vmatprep.subr.mxu0 0.0
    %237 = vmatpush1.msra.mxu0 0.0
    %238 = vmatprep.subr.mxu0 0.0
    %239 = vmatpush1.msra.mxu0 0.0
    %240 = vmatprep.mubr.f32.mxu0 0.0
    %241 = vmatmul.mubr.f32.gmra.mrb[0].mxu0 %v150
    %v242 = vpop.f32.mrb[0].mxu0
    %v243 = vadd.f32 %v174, %v242
    %v244 = vpop.f32.mrb[0].mxu0
    %245 = vdwg.mxu0
    %v246 = vtanh.pop %v243
    %v247 = vmul.f32 %v246, 1.442695
    %v248 = vpow.pop %v247
    %v249 = vmul.f32 %v54, %v248
    %s250 = scalar_lea.vmem [#allocation5], 256
    %v251 = vld [vmem:[%s250] sm:$0xff]
    %v252 = vld [vmem:[%s250 + $0x8] sm:$0xff]
    %v253 = vld [vmem:[%s250 + $0x10] sm:$0xff]
    %v254 = vld [vmem:[%s250 + $0x18] sm:$0xff]
    %v255 = vld [vmem:[%s250 + $0x20] sm:$0xff]
    %v256 = vld [vmem:[%s250 + $0x28] sm:$0xff]
    %v257 = vld [vmem:[%s250 + $0x30] sm:$0xff]
    %v258 = vld [vmem:[%s250 + $0x38] sm:$0xff]
    %v259 = vld [vmem:[%s250 + $0x40] sm:$0xff]
    %v260 = vld [vmem:[%s250 + $0x48] sm:$0xff]
    %v261 = vld [vmem:[%s250 + $0x50] sm:$0xff]
    %v262 = vld [vmem:[%s250 + $0x58] sm:$0xff]
    %v263 = vld [vmem:[%s250 + $0x60] sm:$0xff]
    %v264 = vld [vmem:[%s250 + $0x68] sm:$0xff]
    %v265 = vld [vmem:[%s250 + $0x70] sm:$0xff]
    %v266 = vld [vmem:[%s250 + $0x78] sm:$0xff]
    %s267 = scalar_lea.vmem [#allocation7], 2
    %v268 = vld [vmem:[%s267] sm:$0x1]
    %v270 = vlaneseq
    %v271 = vshrl.u32 %v270, 7
    %v272 = vsub.s32 0, %v271
    %v273 = vrot.slane %v268, %v272
    %275 = vmatprep.subr.mxu0 0.0
    %276 = vmatpush1.msra.mxu0 %v251
    %277 = vmatprep.subr.mxu0 0.0
    %278 = vmatpush1.msra.mxu0 %v252
    %279 = vmatprep.subr.mxu0 0.0
    %280 = vmatpush1.msra.mxu0 %v253
    %281 = vmatprep.subr.mxu0 0.0
    %282 = vmatpush1.msra.mxu0 %v254
    %283 = vmatprep.subr.mxu0 0.0
    %284 = vmatpush1.msra.mxu0 %v255
    %285 = vmatprep.subr.mxu0 0.0
    %286 = vmatpush1.msra.mxu0 %v256
    %287 = vmatprep.subr.mxu0 0.0
    %288 = vmatpush1.msra.mxu0 %v257
    %289 = vmatprep.subr.mxu0 0.0
    %290 = vmatpush1.msra.mxu0 %v258
    %291 = vmatprep.subr.mxu0 0.0
    %292 = vmatpush1.msra.mxu0 %v259
    %293 = vmatprep.subr.mxu0 0.0
    %294 = vmatpush1.msra.mxu0 %v260
    %295 = vmatprep.subr.mxu0 0.0
    %296 = vmatpush1.msra.mxu0 %v261
    %297 = vmatprep.subr.mxu0 0.0
    %298 = vmatpush1.msra.mxu0 %v262
    %299 = vmatprep.subr.mxu0 0.0
    %300 = vmatpush1.msra.mxu0 %v263
    %301 = vmatprep.subr.mxu0 0.0
    %302 = vmatpush1.msra.mxu0 %v264
    %303 = vmatprep.subr.mxu0 0.0
    %304 = vmatpush1.msra.mxu0 %v265
    %305 = vmatprep.subr.mxu0 0.0
    %306 = vmatpush1.msra.mxu0 %v266
    %307 = vmatprep.subr.mxu0 0.0
    %308 = vmatpush1.msra.mxu0 0.0
    %309 = vmatprep.subr.mxu0 0.0
    %310 = vmatpush1.msra.mxu0 0.0
    %311 = vmatprep.subr.mxu0 0.0
    %312 = vmatpush1.msra.mxu0 0.0
    %313 = vmatprep.subr.mxu0 0.0
    %314 = vmatpush1.msra.mxu0 0.0
    %315 = vmatprep.subr.mxu0 0.0
    %316 = vmatpush1.msra.mxu0 0.0
    %317 = vmatprep.subr.mxu0 0.0
    %318 = vmatpush1.msra.mxu0 0.0
    %319 = vmatprep.subr.mxu0 0.0
    %320 = vmatpush1.msra.mxu0 0.0
    %321 = vmatprep.subr.mxu0 0.0
    %322 = vmatpush1.msra.mxu0 0.0
    %323 = vmatprep.subr.mxu0 0.0
    %324 = vmatpush1.msra.mxu0 0.0
    %325 = vmatprep.subr.mxu0 0.0
    %326 = vmatpush1.msra.mxu0 0.0
    %327 = vmatprep.subr.mxu0 0.0
    %328 = vmatpush1.msra.mxu0 0.0
    %329 = vmatprep.subr.mxu0 0.0
    %330 = vmatpush1.msra.mxu0 0.0
    %331 = vmatprep.subr.mxu0 0.0
    %332 = vmatpush1.msra.mxu0 0.0
    %333 = vmatprep.subr.mxu0 0.0
    %334 = vmatpush1.msra.mxu0 0.0
    %335 = vmatprep.subr.mxu0 0.0
    %336 = vmatpush1.msra.mxu0 0.0
    %337 = vmatprep.subr.mxu0 0.0
    %338 = vmatpush1.msra.mxu0 0.0
    %339 = vmatprep.mubr.f32.mxu0 0.0
    %340 = vmatmul.mubr.f32.gmra.mrb[0].mxu0 %v249
    %v341 = vpop.f32.mrb[0].mxu0
    %v342 = vadd.f32 %v273, %v341
    %v343 = vpop.f32.mrb[0].mxu0
    %344 = vdwg.mxu0
    %vm345 = vcmp.gt.f32.partialorder %v342, 0.0
    %v346 = vmul.f32 %v342, 0.01
    %v347 = vsel %vm345, %v342, %v346
    %s348 = scalar_lea.vmem [#allocation5], 384
    %v349 = vld [vmem:[%s348] sm:$0xff]
    %v350 = vld [vmem:[%s348 + $0x8] sm:$0xff]
    %v351 = vld [vmem:[%s348 + $0x10] sm:$0xff]
    %v352 = vld [vmem:[%s348 + $0x18] sm:$0xff]
    %v353 = vld [vmem:[%s348 + $0x20] sm:$0xff]
    %v354 = vld [vmem:[%s348 + $0x28] sm:$0xff]
    %v355 = vld [vmem:[%s348 + $0x30] sm:$0xff]
    %v356 = vld [vmem:[%s348 + $0x38] sm:$0xff]
    %v357 = vld [vmem:[%s348 + $0x40] sm:$0xff]
    %v358 = vld [vmem:[%s348 + $0x48] sm:$0xff]
    %v359 = vld [vmem:[%s348 + $0x50] sm:$0xff]
    %v360 = vld [vmem:[%s348 + $0x58] sm:$0xff]
    %v361 = vld [vmem:[%s348 + $0x60] sm:$0xff]
    %v362 = vld [vmem:[%s348 + $0x68] sm:$0xff]
    %v363 = vld [vmem:[%s348 + $0x70] sm:$0xff]
    %v364 = vld [vmem:[%s348 + $0x78] sm:$0xff]
    %s365 = scalar_lea.vmem [#allocation7], 3
    %v366 = vld [vmem:[%s365] sm:$0x1]
    %v368 = vlaneseq
    %v369 = vshrl.u32 %v368, 7
    %v370 = vsub.s32 0, %v369
    %v371 = vrot.slane %v366, %v370
    %373 = vmatprep.subr.mxu0 0.0
    %374 = vmatpush1.msra.mxu0 %v349
    %375 = vmatprep.subr.mxu0 0.0
    %376 = vmatpush1.msra.mxu0 %v350
    %377 = vmatprep.subr.mxu0 0.0
    %378 = vmatpush1.msra.mxu0 %v351
    %379 = vmatprep.subr.mxu0 0.0
    %380 = vmatpush1.msra.mxu0 %v352
    %381 = vmatprep.subr.mxu0 0.0
    %382 = vmatpush1.msra.mxu0 %v353
    %383 = vmatprep.subr.mxu0 0.0
    %384 = vmatpush1.msra.mxu0 %v354
    %385 = vmatprep.subr.mxu0 0.0
    %386 = vmatpush1.msra.mxu0 %v355
    %387 = vmatprep.subr.mxu0 0.0
    %388 = vmatpush1.msra.mxu0 %v356
    %389 = vmatprep.subr.mxu0 0.0
    %390 = vmatpush1.msra.mxu0 %v357
    %391 = vmatprep.subr.mxu0 0.0
    %392 = vmatpush1.msra.mxu0 %v358
    %393 = vmatprep.subr.mxu0 0.0
    %394 = vmatpush1.msra.mxu0 %v359
    %395 = vmatprep.subr.mxu0 0.0
    %396 = vmatpush1.msra.mxu0 %v360
    %397 = vmatprep.subr.mxu0 0.0
    %398 = vmatpush1.msra.mxu0 %v361
    %399 = vmatprep.subr.mxu0 0.0
    %400 = vmatpush1.msra.mxu0 %v362
    %401 = vmatprep.subr.mxu0 0.0
    %402 = vmatpush1.msra.mxu0 %v363
    %403 = vmatprep.subr.mxu0 0.0
    %404 = vmatpush1.msra.mxu0 %v364
    %405 = vmatprep.subr.mxu0 0.0
    %406 = vmatpush1.msra.mxu0 0.0
    %407 = vmatprep.subr.mxu0 0.0
    %408 = vmatpush1.msra.mxu0 0.0
    %409 = vmatprep.subr.mxu0 0.0
    %410 = vmatpush1.msra.mxu0 0.0
    %411 = vmatprep.subr.mxu0 0.0
    %412 = vmatpush1.msra.mxu0 0.0
    %413 = vmatprep.subr.mxu0 0.0
    %414 = vmatpush1.msra.mxu0 0.0
    %415 = vmatprep.subr.mxu0 0.0
    %416 = vmatpush1.msra.mxu0 0.0
    %417 = vmatprep.subr.mxu0 0.0
    %418 = vmatpush1.msra.mxu0 0.0
    %419 = vmatprep.subr.mxu0 0.0
    %420 = vmatpush1.msra.mxu0 0.0
    %421 = vmatprep.subr.mxu0 0.0
    %422 = vmatpush1.msra.mxu0 0.0
    %423 = vmatprep.subr.mxu0 0.0
    %424 = vmatpush1.msra.mxu0 0.0
    %425 = vmatprep.subr.mxu0 0.0
    %426 = vmatpush1.msra.mxu0 0.0
    %427 = vmatprep.subr.mxu0 0.0
    %428 = vmatpush1.msra.mxu0 0.0
    %429 = vmatprep.subr.mxu0 0.0
    %430 = vmatpush1.msra.mxu0 0.0
    %431 = vmatprep.subr.mxu0 0.0
    %432 = vmatpush1.msra.mxu0 0.0
    %433 = vmatprep.subr.mxu0 0.0
    %434 = vmatpush1.msra.mxu0 0.0
    %435 = vmatprep.subr.mxu0 0.0
    %436 = vmatpush1.msra.mxu0 0.0
    %437 = vmatprep.mubr.f32.mxu0 0.0
    %438 = vmatmul.mubr.f32.gmra.mrb[0].mxu0 %v347
    %v439 = vpop.f32.mrb[0].mxu0
    %v440 = vadd.f32 %v371, %v439
    %v441 = vpop.f32.mrb[0].mxu0
    %442 = vdwg.mxu0
    %v443 = vtanh.pop %v440
    %v444 = vadd.f32 %v249, %v443
    %s445 = scalar_lea.vmem [#allocation5], 512
    %v446 = vld [vmem:[%s445] sm:$0xff]
    %v447 = vld [vmem:[%s445 + $0x8] sm:$0xff]
    %v448 = vld [vmem:[%s445 + $0x10] sm:$0xff]
    %v449 = vld [vmem:[%s445 + $0x18] sm:$0xff]
    %v450 = vld [vmem:[%s445 + $0x20] sm:$0xff]
    %v451 = vld [vmem:[%s445 + $0x28] sm:$0xff]
    %v452 = vld [vmem:[%s445 + $0x30] sm:$0xff]
    %v453 = vld [vmem:[%s445 + $0x38] sm:$0xff]
    %v454 = vld [vmem:[%s445 + $0x40] sm:$0xff]
    %v455 = vld [vmem:[%s445 + $0x48] sm:$0xff]
    %v456 = vld [vmem:[%s445 + $0x50] sm:$0xff]
    %v457 = vld [vmem:[%s445 + $0x58] sm:$0xff]
    %v458 = vld [vmem:[%s445 + $0x60] sm:$0xff]
    %v459 = vld [vmem:[%s445 + $0x68] sm:$0xff]
    %v460 = vld [vmem:[%s445 + $0x70] sm:$0xff]
    %v461 = vld [vmem:[%s445 + $0x78] sm:$0xff]
    %s462 = scalar_lea.vmem [#allocation7], 4
    %v463 = vld [vmem:[%s462] sm:$0x1]
    %v465 = vlaneseq
    %v466 = vshrl.u32 %v465, 7
    %v467 = vsub.s32 0, %v466
    %v468 = vrot.slane %v463, %v467
    %470 = vmatprep.subr.mxu0 0.0
    %471 = vmatpush1.msra.mxu0 %v446
    %472 = vmatprep.subr.mxu0 0.0
    %473 = vmatpush1.msra.mxu0 %v447
    %474 = vmatprep.subr.mxu0 0.0
    %475 = vmatpush1.msra.mxu0 %v448
    %476 = vmatprep.subr.mxu0 0.0
    %477 = vmatpush1.msra.mxu0 %v449
    %478 = vmatprep.subr.mxu0 0.0
    %479 = vmatpush1.msra.mxu0 %v450
    %480 = vmatprep.subr.mxu0 0.0
    %481 = vmatpush1.msra.mxu0 %v451
    %482 = vmatprep.subr.mxu0 0.0
    %483 = vmatpush1.msra.mxu0 %v452
    %484 = vmatprep.subr.mxu0 0.0
    %485 = vmatpush1.msra.mxu0 %v453
    %486 = vmatprep.subr.mxu0 0.0
    %487 = vmatpush1.msra.mxu0 %v454
    %488 = vmatprep.subr.mxu0 0.0
    %489 = vmatpush1.msra.mxu0 %v455
    %490 = vmatprep.subr.mxu0 0.0
    %491 = vmatpush1.msra.mxu0 %v456
    %492 = vmatprep.subr.mxu0 0.0
    %493 = vmatpush1.msra.mxu0 %v457
    %494 = vmatprep.subr.mxu0 0.0
    %495 = vmatpush1.msra.mxu0 %v458
    %496 = vmatprep.subr.mxu0 0.0
    %497 = vmatpush1.msra.mxu0 %v459
    %498 = vmatprep.subr.mxu0 0.0
    %499 = vmatpush1.msra.mxu0 %v460
    %500 = vmatprep.subr.mxu0 0.0
    %501 = vmatpush1.msra.mxu0 %v461
    %502 = vmatprep.subr.mxu0 0.0
    %503 = vmatpush1.msra.mxu0 0.0
    %504 = vmatprep.subr.mxu0 0.0
    %505 = vmatpush1.msra.mxu0 0.0
    %506 = vmatprep.subr.mxu0 0.0
    %507 = vmatpush1.msra.mxu0 0.0
    %508 = vmatprep.subr.mxu0 0.0
    %509 = vmatpush1.msra.mxu0 0.0
    %510 = vmatprep.subr.mxu0 0.0
    %511 = vmatpush1.msra.mxu0 0.0
    %512 = vmatprep.subr.mxu0 0.0
    %513 = vmatpush1.msra.mxu0 0.0
    %514 = vmatprep.subr.mxu0 0.0
    %515 = vmatpush1.msra.mxu0 0.0
    %516 = vmatprep.subr.mxu0 0.0
    %517 = vmatpush1.msra.mxu0 0.0
    %518 = vmatprep.subr.mxu0 0.0
    %519 = vmatpush1.msra.mxu0 0.0
    %520 = vmatprep.subr.mxu0 0.0
    %521 = vmatpush1.msra.mxu0 0.0
    %522 = vmatprep.subr.mxu0 0.0
    %523 = vmatpush1.msra.mxu0 0.0
    %524 = vmatprep.subr.mxu0 0.0
    %525 = vmatpush1.msra.mxu0 0.0
    %526 = vmatprep.subr.mxu0 0.0
    %527 = vmatpush1.msra.mxu0 0.0
    %528 = vmatprep.subr.mxu0 0.0
    %529 = vmatpush1.msra.mxu0 0.0
    %530 = vmatprep.subr.mxu0 0.0
    %531 = vmatpush1.msra.mxu0 0.0
    %532 = vmatprep.subr.mxu0 0.0
    %533 = vmatpush1.msra.mxu0 0.0
    %534 = vmatprep.mubr.f32.mxu0 0.0
    %535 = vmatmul.mubr.f32.gmra.mrb[0].mxu0 %v444
    %v536 = vpop.f32.mrb[0].mxu0
    %v537 = vadd.f32 %v468, %v536
    %v538 = vpop.f32.mrb[0].mxu0
    %539 = vdwg.mxu0
    %vm540 = vcmp.gt.f32.partialorder %v537, 0.0
    %v541 = vmul.f32 %v537, 0.01
    %v542 = vsel %vm540, %v537, %v541
    %s543 = scalar_lea.vmem [#allocation5], 640
    %v544 = vld [vmem:[%s543] sm:$0xff]
    %v545 = vld [vmem:[%s543 + $0x8] sm:$0xff]
    %v546 = vld [vmem:[%s543 + $0x10] sm:$0xff]
    %v547 = vld [vmem:[%s543 + $0x18] sm:$0xff]
    %v548 = vld [vmem:[%s543 + $0x20] sm:$0xff]
    %v549 = vld [vmem:[%s543 + $0x28] sm:$0xff]
    %v550 = vld [vmem:[%s543 + $0x30] sm:$0xff]
    %v551 = vld [vmem:[%s543 + $0x38] sm:$0xff]
    %v552 = vld [vmem:[%s543 + $0x40] sm:$0xff]
    %v553 = vld [vmem:[%s543 + $0x48] sm:$0xff]
    %v554 = vld [vmem:[%s543 + $0x50] sm:$0xff]
    %v555 = vld [vmem:[%s543 + $0x58] sm:$0xff]
    %v556 = vld [vmem:[%s543 + $0x60] sm:$0xff]
    %v557 = vld [vmem:[%s543 + $0x68] sm:$0xff]
    %v558 = vld [vmem:[%s543 + $0x70] sm:$0xff]
    %v559 = vld [vmem:[%s543 + $0x78] sm:$0xff]
    %s560 = scalar_lea.vmem [#allocation7], 5
    %v561 = vld [vmem:[%s560] sm:$0x1]
    %v563 = vlaneseq
    %v564 = vshrl.u32 %v563, 7
    %v565 = vsub.s32 0, %v564
    %v566 = vrot.slane %v561, %v565
    %568 = vmatprep.subr.mxu0 0.0
    %569 = vmatpush1.msra.mxu0 %v544
    %570 = vmatprep.subr.mxu0 0.0
    %571 = vmatpush1.msra.mxu0 %v545
    %572 = vmatprep.subr.mxu0 0.0
    %573 = vmatpush1.msra.mxu0 %v546
    %574 = vmatprep.subr.mxu0 0.0
    %575 = vmatpush1.msra.mxu0 %v547
    %576 = vmatprep.subr.mxu0 0.0
    %577 = vmatpush1.msra.mxu0 %v548
    %578 = vmatprep.subr.mxu0 0.0
    %579 = vmatpush1.msra.mxu0 %v549
    %580 = vmatprep.subr.mxu0 0.0
    %581 = vmatpush1.msra.mxu0 %v550
    %582 = vmatprep.subr.mxu0 0.0
    %583 = vmatpush1.msra.mxu0 %v551
    %584 = vmatprep.subr.mxu0 0.0
    %585 = vmatpush1.msra.mxu0 %v552
    %586 = vmatprep.subr.mxu0 0.0
    %587 = vmatpush1.msra.mxu0 %v553
    %588 = vmatprep.subr.mxu0 0.0
    %589 = vmatpush1.msra.mxu0 %v554
    %590 = vmatprep.subr.mxu0 0.0
    %591 = vmatpush1.msra.mxu0 %v555
    %592 = vmatprep.subr.mxu0 0.0
    %593 = vmatpush1.msra.mxu0 %v556
    %594 = vmatprep.subr.mxu0 0.0
    %595 = vmatpush1.msra.mxu0 %v557
    %596 = vmatprep.subr.mxu0 0.0
    %597 = vmatpush1.msra.mxu0 %v558
    %598 = vmatprep.subr.mxu0 0.0
    %599 = vmatpush1.msra.mxu0 %v559
    %600 = vmatprep.subr.mxu0 0.0
    %601 = vmatpush1.msra.mxu0 0.0
    %602 = vmatprep.subr.mxu0 0.0
    %603 = vmatpush1.msra.mxu0 0.0
    %604 = vmatprep.subr.mxu0 0.0
    %605 = vmatpush1.msra.mxu0 0.0
    %606 = vmatprep.subr.mxu0 0.0
    %607 = vmatpush1.msra.mxu0 0.0
    %608 = vmatprep.subr.mxu0 0.0
    %609 = vmatpush1.msra.mxu0 0.0
    %610 = vmatprep.subr.mxu0 0.0
    %611 = vmatpush1.msra.mxu0 0.0
    %612 = vmatprep.subr.mxu0 0.0
    %613 = vmatpush1.msra.mxu0 0.0
    %614 = vmatprep.subr.mxu0 0.0
    %615 = vmatpush1.msra.mxu0 0.0
    %616 = vmatprep.subr.mxu0 0.0
    %617 = vmatpush1.msra.mxu0 0.0
    %618 = vmatprep.subr.mxu0 0.0
    %619 = vmatpush1.msra.mxu0 0.0
    %620 = vmatprep.subr.mxu0 0.0
    %621 = vmatpush1.msra.mxu0 0.0
    %622 = vmatprep.subr.mxu0 0.0
    %623 = vmatpush1.msra.mxu0 0.0
    %624 = vmatprep.subr.mxu0 0.0
    %625 = vmatpush1.msra.mxu0 0.0
    %626 = vmatprep.subr.mxu0 0.0
    %627 = vmatpush1.msra.mxu0 0.0
    %628 = vmatprep.subr.mxu0 0.0
    %629 = vmatpush1.msra.mxu0 0.0
    %630 = vmatprep.subr.mxu0 0.0
    %631 = vmatpush1.msra.mxu0 0.0
    %632 = vmatprep.mubr.f32.mxu0 0.0
    %633 = vmatmul.mubr.f32.gmra.mrb[0].mxu0 %v542
    %v634 = vpop.f32.mrb[0].mxu0
    %v635 = vadd.f32 %v566, %v634
    %v636 = vpop.f32.mrb[0].mxu0
    %637 = vdwg.mxu0
    %v638 = vtanh.pop %v635
    %v639 = vmul.f32 %v638, 1.442695
    %v640 = vpow.pop %v639
    %v641 = vmul.f32 %v444, %v640
    %s642 = scalar_lea.vmem [#allocation5], 768
    %v643 = vld [vmem:[%s642] sm:$0xff]
    %v644 = vld [vmem:[%s642 + $0x8] sm:$0xff]
    %v645 = vld [vmem:[%s642 + $0x10] sm:$0xff]
    %v646 = vld [vmem:[%s642 + $0x18] sm:$0xff]
    %v647 = vld [vmem:[%s642 + $0x20] sm:$0xff]
    %v648 = vld [vmem:[%s642 + $0x28] sm:$0xff]
    %v649 = vld [vmem:[%s642 + $0x30] sm:$0xff]
    %v650 = vld [vmem:[%s642 + $0x38] sm:$0xff]
    %v651 = vld [vmem:[%s642 + $0x40] sm:$0xff]
    %v652 = vld [vmem:[%s642 + $0x48] sm:$0xff]
    %v653 = vld [vmem:[%s642 + $0x50] sm:$0xff]
    %v654 = vld [vmem:[%s642 + $0x58] sm:$0xff]
    %v655 = vld [vmem:[%s642 + $0x60] sm:$0xff]
    %v656 = vld [vmem:[%s642 + $0x68] sm:$0xff]
    %v657 = vld [vmem:[%s642 + $0x70] sm:$0xff]
    %v658 = vld [vmem:[%s642 + $0x78] sm:$0xff]
    %s659 = scalar_lea.vmem [#allocation7], 6
    %v660 = vld [vmem:[%s659] sm:$0x1]
    %v662 = vlaneseq
    %v663 = vshrl.u32 %v662, 7
    %v664 = vsub.s32 0, %v663
    %v665 = vrot.slane %v660, %v664
    %667 = vmatprep.subr.mxu0 0.0
    %668 = vmatpush1.msra.mxu0 %v643
    %669 = vmatprep.subr.mxu0 0.0
    %670 = vmatpush1.msra.mxu0 %v644
    %671 = vmatprep.subr.mxu0 0.0
    %672 = vmatpush1.msra.mxu0 %v645
    %673 = vmatprep.subr.mxu0 0.0
    %674 = vmatpush1.msra.mxu0 %v646
    %675 = vmatprep.subr.mxu0 0.0
    %676 = vmatpush1.msra.mxu0 %v647
    %677 = vmatprep.subr.mxu0 0.0
    %678 = vmatpush1.msra.mxu0 %v648
    %679 = vmatprep.subr.mxu0 0.0
    %680 = vmatpush1.msra.mxu0 %v649
    %681 = vmatprep.subr.mxu0 0.0
    %682 = vmatpush1.msra.mxu0 %v650
    %683 = vmatprep.subr.mxu0 0.0
    %684 = vmatpush1.msra.mxu0 %v651
    %685 = vmatprep.subr.mxu0 0.0
    %686 = vmatpush1.msra.mxu0 %v652
    %687 = vmatprep.subr.mxu0 0.0
    %688 = vmatpush1.msra.mxu0 %v653
    %689 = vmatprep.subr.mxu0 0.0
    %690 = vmatpush1.msra.mxu0 %v654
    %691 = vmatprep.subr.mxu0 0.0
    %692 = vmatpush1.msra.mxu0 %v655
    %693 = vmatprep.subr.mxu0 0.0
    %694 = vmatpush1.msra.mxu0 %v656
    %695 = vmatprep.subr.mxu0 0.0
    %696 = vmatpush1.msra.mxu0 %v657
    %697 = vmatprep.subr.mxu0 0.0
    %698 = vmatpush1.msra.mxu0 %v658
    %699 = vmatprep.subr.mxu0 0.0
    %700 = vmatpush1.msra.mxu0 0.0
    %701 = vmatprep.subr.mxu0 0.0
    %702 = vmatpush1.msra.mxu0 0.0
    %703 = vmatprep.subr.mxu0 0.0
    %704 = vmatpush1.msra.mxu0 0.0
    %705 = vmatprep.subr.mxu0 0.0
    %706 = vmatpush1.msra.mxu0 0.0
    %707 = vmatprep.subr.mxu0 0.0
    %708 = vmatpush1.msra.mxu0 0.0
    %709 = vmatprep.subr.mxu0 0.0
    %710 = vmatpush1.msra.mxu0 0.0
    %711 = vmatprep.subr.mxu0 0.0
    %712 = vmatpush1.msra.mxu0 0.0
    %713 = vmatprep.subr.mxu0 0.0
    %714 = vmatpush1.msra.mxu0 0.0
    %715 = vmatprep.subr.mxu0 0.0
    %716 = vmatpush1.msra.mxu0 0.0
    %717 = vmatprep.subr.mxu0 0.0
    %718 = vmatpush1.msra.mxu0 0.0
    %719 = vmatprep.subr.mxu0 0.0
    %720 = vmatpush1.msra.mxu0 0.0
    %721 = vmatprep.subr.mxu0 0.0
    %722 = vmatpush1.msra.mxu0 0.0
    %723 = vmatprep.subr.mxu0 0.0
    %724 = vmatpush1.msra.mxu0 0.0
    %725 = vmatprep.subr.mxu0 0.0
    %726 = vmatpush1.msra.mxu0 0.0
    %727 = vmatprep.subr.mxu0 0.0
    %728 = vmatpush1.msra.mxu0 0.0
    %729 = vmatprep.subr.mxu0 0.0
    %730 = vmatpush1.msra.mxu0 0.0
    %731 = vmatprep.mubr.f32.mxu0 0.0
    %732 = vmatmul.mubr.f32.gmra.mrb[0].mxu0 %v641
    %v733 = vpop.f32.mrb[0].mxu0
    %v734 = vadd.f32 %v665, %v733
    %v735 = vpop.f32.mrb[0].mxu0
    %736 = vdwg.mxu0
    %vm737 = vcmp.gt.f32.partialorder %v734, 0.0
    %v738 = vmul.f32 %v734, 0.01
    %v739 = vsel %vm737, %v734, %v738
    %s740 = scalar_lea.vmem [#allocation5], 896
    %v741 = vld [vmem:[%s740] sm:$0xff]
    %v742 = vld [vmem:[%s740 + $0x8] sm:$0xff]
    %v743 = vld [vmem:[%s740 + $0x10] sm:$0xff]
    %v744 = vld [vmem:[%s740 + $0x18] sm:$0xff]
    %v745 = vld [vmem:[%s740 + $0x20] sm:$0xff]
    %v746 = vld [vmem:[%s740 + $0x28] sm:$0xff]
    %v747 = vld [vmem:[%s740 + $0x30] sm:$0xff]
    %v748 = vld [vmem:[%s740 + $0x38] sm:$0xff]
    %v749 = vld [vmem:[%s740 + $0x40] sm:$0xff]
    %v750 = vld [vmem:[%s740 + $0x48] sm:$0xff]
    %v751 = vld [vmem:[%s740 + $0x50] sm:$0xff]
    %v752 = vld [vmem:[%s740 + $0x58] sm:$0xff]
    %v753 = vld [vmem:[%s740 + $0x60] sm:$0xff]
    %v754 = vld [vmem:[%s740 + $0x68] sm:$0xff]
    %v755 = vld [vmem:[%s740 + $0x70] sm:$0xff]
    %v756 = vld [vmem:[%s740 + $0x78] sm:$0xff]
    %s757 = scalar_lea.vmem [#allocation7], 7
    %v758 = vld [vmem:[%s757] sm:$0x1]
    %v760 = vlaneseq
    %v761 = vshrl.u32 %v760, 7
    %v762 = vsub.s32 0, %v761
    %v763 = vrot.slane %v758, %v762
    %765 = vmatprep.subr.mxu0 0.0
    %766 = vmatpush1.msra.mxu0 %v741
    %767 = vmatprep.subr.mxu0 0.0
    %768 = vmatpush1.msra.mxu0 %v742
    %769 = vmatprep.subr.mxu0 0.0
    %770 = vmatpush1.msra.mxu0 %v743
    %771 = vmatprep.subr.mxu0 0.0
    %772 = vmatpush1.msra.mxu0 %v744
    %773 = vmatprep.subr.mxu0 0.0
    %774 = vmatpush1.msra.mxu0 %v745
    %775 = vmatprep.subr.mxu0 0.0
    %776 = vmatpush1.msra.mxu0 %v746
    %777 = vmatprep.subr.mxu0 0.0
    %778 = vmatpush1.msra.mxu0 %v747
    %779 = vmatprep.subr.mxu0 0.0
    %780 = vmatpush1.msra.mxu0 %v748
    %781 = vmatprep.subr.mxu0 0.0
    %782 = vmatpush1.msra.mxu0 %v749
    %783 = vmatprep.subr.mxu0 0.0
    %784 = vmatpush1.msra.mxu0 %v750
    %785 = vmatprep.subr.mxu0 0.0
    %786 = vmatpush1.msra.mxu0 %v751
    %787 = vmatprep.subr.mxu0 0.0
    %788 = vmatpush1.msra.mxu0 %v752
    %789 = vmatprep.subr.mxu0 0.0
    %790 = vmatpush1.msra.mxu0 %v753
    %791 = vmatprep.subr.mxu0 0.0
    %792 = vmatpush1.msra.mxu0 %v754
    %793 = vmatprep.subr.mxu0 0.0
    %794 = vmatpush1.msra.mxu0 %v755
    %795 = vmatprep.subr.mxu0 0.0
    %796 = vmatpush1.msra.mxu0 %v756
    %797 = vmatprep.subr.mxu0 0.0
    %798 = vmatpush1.msra.mxu0 0.0
    %799 = vmatprep.subr.mxu0 0.0
    %800 = vmatpush1.msra.mxu0 0.0
    %801 = vmatprep.subr.mxu0 0.0
    %802 = vmatpush1.msra.mxu0 0.0
    %803 = vmatprep.subr.mxu0 0.0
    %804 = vmatpush1.msra.mxu0 0.0
    %805 = vmatprep.subr.mxu0 0.0
    %806 = vmatpush1.msra.mxu0 0.0
    %807 = vmatprep.subr.mxu0 0.0
    %808 = vmatpush1.msra.mxu0 0.0
    %809 = vmatprep.subr.mxu0 0.0
    %810 = vmatpush1.msra.mxu0 0.0
    %811 = vmatprep.subr.mxu0 0.0
    %812 = vmatpush1.msra.mxu0 0.0
    %813 = vmatprep.subr.mxu0 0.0
    %814 = vmatpush1.msra.mxu0 0.0
    %815 = vmatprep.subr.mxu0 0.0
    %816 = vmatpush1.msra.mxu0 0.0
    %817 = vmatprep.subr.mxu0 0.0
    %818 = vmatpush1.msra.mxu0 0.0
    %819 = vmatprep.subr.mxu0 0.0
    %820 = vmatpush1.msra.mxu0 0.0
    %821 = vmatprep.subr.mxu0 0.0
    %822 = vmatpush1.msra.mxu0 0.0
    %823 = vmatprep.subr.mxu0 0.0
    %824 = vmatpush1.msra.mxu0 0.0
    %825 = vmatprep.subr.mxu0 0.0
    %826 = vmatpush1.msra.mxu0 0.0
    %827 = vmatprep.subr.mxu0 0.0
    %828 = vmatpush1.msra.mxu0 0.0
    %829 = vmatprep.mubr.f32.mxu0 0.0
    %830 = vmatmul.mubr.f32.gmra.mrb[0].mxu0 %v739
    %v831 = vpop.f32.mrb[0].mxu0
    %v832 = vadd.f32 %v763, %v831
    %v833 = vpop.f32.mrb[0].mxu0
    %834 = vdwg.mxu0
    %v835 = vtanh.pop %v832
    %v836 = vadd.f32 %v641, %v835
    %s837 = scalar_lea.vmem [#allocation5], 1024
    %v838 = vld [vmem:[%s837] sm:$0xff]
    %v839 = vld [vmem:[%s837 + $0x8] sm:$0xff]
    %v840 = vld [vmem:[%s837 + $0x10] sm:$0xff]
    %v841 = vld [vmem:[%s837 + $0x18] sm:$0xff]
    %v842 = vld [vmem:[%s837 + $0x20] sm:$0xff]
    %v843 = vld [vmem:[%s837 + $0x28] sm:$0xff]
    %v844 = vld [vmem:[%s837 + $0x30] sm:$0xff]
    %v845 = vld [vmem:[%s837 + $0x38] sm:$0xff]
    %v846 = vld [vmem:[%s837 + $0x40] sm:$0xff]
    %v847 = vld [vmem:[%s837 + $0x48] sm:$0xff]
    %v848 = vld [vmem:[%s837 + $0x50] sm:$0xff]
    %v849 = vld [vmem:[%s837 + $0x58] sm:$0xff]
    %v850 = vld [vmem:[%s837 + $0x60] sm:$0xff]
    %v851 = vld [vmem:[%s837 + $0x68] sm:$0xff]
    %v852 = vld [vmem:[%s837 + $0x70] sm:$0xff]
    %v853 = vld [vmem:[%s837 + $0x78] sm:$0xff]
    %s854 = scalar_lea.vmem [#allocation7], 8
    %v855 = vld [vmem:[%s854] sm:$0x1]
    %v857 = vlaneseq
    %v858 = vshrl.u32 %v857, 7
    %v859 = vsub.s32 0, %v858
    %v860 = vrot.slane %v855, %v859
    %862 = vmatprep.subr.mxu0 0.0
    %863 = vmatpush1.msra.mxu0 %v838
    %864 = vmatprep.subr.mxu0 0.0
    %865 = vmatpush1.msra.mxu0 %v839
    %866 = vmatprep.subr.mxu0 0.0
    %867 = vmatpush1.msra.mxu0 %v840
    %868 = vmatprep.subr.mxu0 0.0
    %869 = vmatpush1.msra.mxu0 %v841
    %870 = vmatprep.subr.mxu0 0.0
    %871 = vmatpush1.msra.mxu0 %v842
    %872 = vmatprep.subr.mxu0 0.0
    %873 = vmatpush1.msra.mxu0 %v843
    %874 = vmatprep.subr.mxu0 0.0
    %875 = vmatpush1.msra.mxu0 %v844
    %876 = vmatprep.subr.mxu0 0.0
    %877 = vmatpush1.msra.mxu0 %v845
    %878 = vmatprep.subr.mxu0 0.0
    %879 = vmatpush1.msra.mxu0 %v846
    %880 = vmatprep.subr.mxu0 0.0
    %881 = vmatpush1.msra.mxu0 %v847
    %882 = vmatprep.subr.mxu0 0.0
    %883 = vmatpush1.msra.mxu0 %v848
    %884 = vmatprep.subr.mxu0 0.0
    %885 = vmatpush1.msra.mxu0 %v849
    %886 = vmatprep.subr.mxu0 0.0
    %887 = vmatpush1.msra.mxu0 %v850
    %888 = vmatprep.subr.mxu0 0.0
    %889 = vmatpush1.msra.mxu0 %v851
    %890 = vmatprep.subr.mxu0 0.0
    %891 = vmatpush1.msra.mxu0 %v852
    %892 = vmatprep.subr.mxu0 0.0
    %893 = vmatpush1.msra.mxu0 %v853
    %894 = vmatprep.subr.mxu0 0.0
    %895 = vmatpush1.msra.mxu0 0.0
    %896 = vmatprep.subr.mxu0 0.0
    %897 = vmatpush1.msra.mxu0 0.0
    %898 = vmatprep.subr.mxu0 0.0
    %899 = vmatpush1.msra.mxu0 0.0
    %900 = vmatprep.subr.mxu0 0.0
    %901 = vmatpush1.msra.mxu0 0.0
    %902 = vmatprep.subr.mxu0 0.0
    %903 = vmatpush1.msra.mxu0 0.0
    %904 = vmatprep.subr.mxu0 0.0
    %905 = vmatpush1.msra.mxu0 0.0
    %906 = vmatprep.subr.mxu0 0.0
    %907 = vmatpush1.msra.mxu0 0.0
    %908 = vmatprep.subr.mxu0 0.0
    %909 = vmatpush1.msra.mxu0 0.0
    %910 = vmatprep.subr.mxu0 0.0
    %911 = vmatpush1.msra.mxu0 0.0
    %912 = vmatprep.subr.mxu0 0.0
    %913 = vmatpush1.msra.mxu0 0.0
    %914 = vmatprep.subr.mxu0 0.0
    %915 = vmatpush1.msra.mxu0 0.0
    %916 = vmatprep.subr.mxu0 0.0
    %917 = vmatpush1.msra.mxu0 0.0
    %918 = vmatprep.subr.mxu0 0.0
    %919 = vmatpush1.msra.mxu0 0.0
    %920 = vmatprep.subr.mxu0 0.0
    %921 = vmatpush1.msra.mxu0 0.0
    %922 = vmatprep.subr.mxu0 0.0
    %923 = vmatpush1.msra.mxu0 0.0
    %924 = vmatprep.subr.mxu0 0.0
    %925 = vmatpush1.msra.mxu0 0.0
    %926 = vmatprep.mubr.f32.mxu0 0.0
    %927 = vmatmul.mubr.f32.gmra.mrb[0].mxu0 %v836
    %v928 = vpop.f32.mrb[0].mxu0
    %v929 = vadd.f32 %v860, %v928
    %v930 = vpop.f32.mrb[0].mxu0
    %931 = vdwg.mxu0
    %vm932 = vcmp.gt.f32.partialorder %v929, 0.0
    %v933 = vmul.f32 %v929, 0.01
    %v934 = vsel %vm932, %v929, %v933
    %s935 = scalar_lea.vmem [#allocation5], 1152
    %v936 = vld [vmem:[%s935] sm:$0xff]
    %v937 = vld [vmem:[%s935 + $0x8] sm:$0xff]
    %v938 = vld [vmem:[%s935 + $0x10] sm:$0xff]
    %v939 = vld [vmem:[%s935 + $0x18] sm:$0xff]
    %v940 = vld [vmem:[%s935 + $0x20] sm:$0xff]
    %v941 = vld [vmem:[%s935 + $0x28] sm:$0xff]
    %v942 = vld [vmem:[%s935 + $0x30] sm:$0xff]
    %v943 = vld [vmem:[%s935 + $0x38] sm:$0xff]
    %v944 = vld [vmem:[%s935 + $0x40] sm:$0xff]
    %v945 = vld [vmem:[%s935 + $0x48] sm:$0xff]
    %v946 = vld [vmem:[%s935 + $0x50] sm:$0xff]
    %v947 = vld [vmem:[%s935 + $0x58] sm:$0xff]
    %v948 = vld [vmem:[%s935 + $0x60] sm:$0xff]
    %v949 = vld [vmem:[%s935 + $0x68] sm:$0xff]
    %v950 = vld [vmem:[%s935 + $0x70] sm:$0xff]
    %v951 = vld [vmem:[%s935 + $0x78] sm:$0xff]
    %s952 = scalar_lea.vmem [#allocation7], 9
    %v953 = vld [vmem:[%s952] sm:$0x1]
    %v955 = vlaneseq
    %v956 = vshrl.u32 %v955, 7
    %v957 = vsub.s32 0, %v956
    %v958 = vrot.slane %v953, %v957
    %960 = vmatprep.subr.mxu0 0.0
    %961 = vmatpush1.msra.mxu0 %v936
    %962 = vmatprep.subr.mxu0 0.0
    %963 = vmatpush1.msra.mxu0 %v937
    %964 = vmatprep.subr.mxu0 0.0
    %965 = vmatpush1.msra.mxu0 %v938
    %966 = vmatprep.subr.mxu0 0.0
    %967 = vmatpush1.msra.mxu0 %v939
    %968 = vmatprep.subr.mxu0 0.0
    %969 = vmatpush1.msra.mxu0 %v940
    %970 = vmatprep.subr.mxu0 0.0
    %971 = vmatpush1.msra.mxu0 %v941
    %972 = vmatprep.subr.mxu0 0.0
    %973 = vmatpush1.msra.mxu0 %v942
    %974 = vmatprep.subr.mxu0 0.0
    %975 = vmatpush1.msra.mxu0 %v943
    %976 = vmatprep.subr.mxu0 0.0
    %977 = vmatpush1.msra.mxu0 %v944
    %978 = vmatprep.subr.mxu0 0.0
    %979 = vmatpush1.msra.mxu0 %v945
    %980 = vmatprep.subr.mxu0 0.0
    %981 = vmatpush1.msra.mxu0 %v946
    %982 = vmatprep.subr.mxu0 0.0
    %983 = vmatpush1.msra.mxu0 %v947
    %984 = vmatprep.subr.mxu0 0.0
    %985 = vmatpush1.msra.mxu0 %v948
    %986 = vmatprep.subr.mxu0 0.0
    %987 = vmatpush1.msra.mxu0 %v949
    %988 = vmatprep.subr.mxu0 0.0
    %989 = vmatpush1.msra.mxu0 %v950
    %990 = vmatprep.subr.mxu0 0.0
    %991 = vmatpush1.msra.mxu0 %v951
    %992 = vmatprep.subr.mxu0 0.0
    %993 = vmatpush1.msra.mxu0 0.0
    %994 = vmatprep.subr.mxu0 0.0
    %995 = vmatpush1.msra.mxu0 0.0
    %996 = vmatprep.subr.mxu0 0.0
    %997 = vmatpush1.msra.mxu0 0.0
    %998 = vmatprep.subr.mxu0 0.0
    %999 = vmatpush1.msra.mxu0 0.0
    %1000 = vmatprep.subr.mxu0 0.0
    %1001 = vmatpush1.msra.mxu0 0.0
    %1002 = vmatprep.subr.mxu0 0.0
    %1003 = vmatpush1.msra.mxu0 0.0
    %1004 = vmatprep.subr.mxu0 0.0
    %1005 = vmatpush1.msra.mxu0 0.0
    %1006 = vmatprep.subr.mxu0 0.0
    %1007 = vmatpush1.msra.mxu0 0.0
    %1008 = vmatprep.subr.mxu0 0.0
    %1009 = vmatpush1.msra.mxu0 0.0
    %1010 = vmatprep.subr.mxu0 0.0
    %1011 = vmatpush1.msra.mxu0 0.0
    %1012 = vmatprep.subr.mxu0 0.0
    %1013 = vmatpush1.msra.mxu0 0.0
    %1014 = vmatprep.subr.mxu0 0.0
    %1015 = vmatpush1.msra.mxu0 0.0
    %1016 = vmatprep.subr.mxu0 0.0
    %1017 = vmatpush1.msra.mxu0 0.0
    %1018 = vmatprep.subr.mxu0 0.0
    %1019 = vmatpush1.msra.mxu0 0.0
    %1020 = vmatprep.subr.mxu0 0.0
    %1021 = vmatpush1.msra.mxu0 0.0
    %1022 = vmatprep.subr.mxu0 0.0
    %1023 = vmatpush1.msra.mxu0 0.0
    %1024 = vmatprep.mubr.f32.mxu0 0.0
    %1025 = vmatmul.mubr.f32.gmra.mrb[0].mxu0 %v934
    %v1026 = vpop.f32.mrb[0].mxu0
    %v1027 = vadd.f32 %v958, %v1026
    %v1028 = vpop.f32.mrb[0].mxu0
    %1029 = vdwg.mxu0
    %v1030 = vtanh.pop %v1027
    %v1031 = vmul.f32 %v1030, 1.442695
    %v1032 = vpow.pop %v1031
    %v1033 = vmul.f32 %v836, %v1032
    %s1034 = scalar_lea.vmem [#allocation5], 1280
    %v1035 = vld [vmem:[%s1034] sm:$0xff]
    %v1036 = vld [vmem:[%s1034 + $0x8] sm:$0xff]
    %v1037 = vld [vmem:[%s1034 + $0x10] sm:$0xff]
    %v1038 = vld [vmem:[%s1034 + $0x18] sm:$0xff]
    %v1039 = vld [vmem:[%s1034 + $0x20] sm:$0xff]
    %v1040 = vld [vmem:[%s1034 + $0x28] sm:$0xff]
    %v1041 = vld [vmem:[%s1034 + $0x30] sm:$0xff]
    %v1042 = vld [vmem:[%s1034 + $0x38] sm:$0xff]
    %v1043 = vld [vmem:[%s1034 + $0x40] sm:$0xff]
    %v1044 = vld [vmem:[%s1034 + $0x48] sm:$0xff]
    %v1045 = vld [vmem:[%s1034 + $0x50] sm:$0xff]
    %v1046 = vld [vmem:[%s1034 + $0x58] sm:$0xff]
    %v1047 = vld [vmem:[%s1034 + $0x60] sm:$0xff]
    %v1048 = vld [vmem:[%s1034 + $0x68] sm:$0xff]
    %v1049 = vld [vmem:[%s1034 + $0x70] sm:$0xff]
    %v1050 = vld [vmem:[%s1034 + $0x78] sm:$0xff]
    %s1051 = scalar_lea.vmem [#allocation7], 10
    %v1052 = vld [vmem:[%s1051] sm:$0x1]
    %v1054 = vlaneseq
    %v1055 = vshrl.u32 %v1054, 7
    %v1056 = vsub.s32 0, %v1055
    %v1057 = vrot.slane %v1052, %v1056
    %1059 = vmatprep.subr.mxu0 0.0
    %1060 = vmatpush1.msra.mxu0 %v1035
    %1061 = vmatprep.subr.mxu0 0.0
    %1062 = vmatpush1.msra.mxu0 %v1036
    %1063 = vmatprep.subr.mxu0 0.0
    %1064 = vmatpush1.msra.mxu0 %v1037
    %1065 = vmatprep.subr.mxu0 0.0
    %1066 = vmatpush1.msra.mxu0 %v1038
    %1067 = vmatprep.subr.mxu0 0.0
    %1068 = vmatpush1.msra.mxu0 %v1039
    %1069 = vmatprep.subr.mxu0 0.0
    %1070 = vmatpush1.msra.mxu0 %v1040
    %1071 = vmatprep.subr.mxu0 0.0
    %1072 = vmatpush1.msra.mxu0 %v1041
    %1073 = vmatprep.subr.mxu0 0.0
    %1074 = vmatpush1.msra.mxu0 %v1042
    %1075 = vmatprep.subr.mxu0 0.0
    %1076 = vmatpush1.msra.mxu0 %v1043
    %1077 = vmatprep.subr.mxu0 0.0
    %1078 = vmatpush1.msra.mxu0 %v1044
    %1079 = vmatprep.subr.mxu0 0.0
    %1080 = vmatpush1.msra.mxu0 %v1045
    %1081 = vmatprep.subr.mxu0 0.0
    %1082 = vmatpush1.msra.mxu0 %v1046
    %1083 = vmatprep.subr.mxu0 0.0
    %1084 = vmatpush1.msra.mxu0 %v1047
    %1085 = vmatprep.subr.mxu0 0.0
    %1086 = vmatpush1.msra.mxu0 %v1048
    %1087 = vmatprep.subr.mxu0 0.0
    %1088 = vmatpush1.msra.mxu0 %v1049
    %1089 = vmatprep.subr.mxu0 0.0
    %1090 = vmatpush1.msra.mxu0 %v1050
    %1091 = vmatprep.subr.mxu0 0.0
    %1092 = vmatpush1.msra.mxu0 0.0
    %1093 = vmatprep.subr.mxu0 0.0
    %1094 = vmatpush1.msra.mxu0 0.0
    %1095 = vmatprep.subr.mxu0 0.0
    %1096 = vmatpush1.msra.mxu0 0.0
    %1097 = vmatprep.subr.mxu0 0.0
    %1098 = vmatpush1.msra.mxu0 0.0
    %1099 = vmatprep.subr.mxu0 0.0
    %1100 = vmatpush1.msra.mxu0 0.0
    %1101 = vmatprep.subr.mxu0 0.0
    %1102 = vmatpush1.msra.mxu0 0.0
    %1103 = vmatprep.subr.mxu0 0.0
    %1104 = vmatpush1.msra.mxu0 0.0
    %1105 = vmatprep.subr.mxu0 0.0
    %1106 = vmatpush1.msra.mxu0 0.0
    %1107 = vmatprep.subr.mxu0 0.0
    %1108 = vmatpush1.msra.mxu0 0.0
    %1109 = vmatprep.subr.mxu0 0.0
    %1110 = vmatpush1.msra.mxu0 0.0
    %1111 = vmatprep.subr.mxu0 0.0
    %1112 = vmatpush1.msra.mxu0 0.0
    %1113 = vmatprep.subr.mxu0 0.0
    %1114 = vmatpush1.msra.mxu0 0.0
    %1115 = vmatprep.subr.mxu0 0.0
    %1116 = vmatpush1.msra.mxu0 0.0
    %1117 = vmatprep.subr.mxu0 0.0
    %1118 = vmatpush1.msra.mxu0 0.0
    %1119 = vmatprep.subr.mxu0 0.0
    %1120 = vmatpush1.msra.mxu0 0.0
    %1121 = vmatprep.subr.mxu0 0.0
    %1122 = vmatpush1.msra.mxu0 0.0
    %1123 = vmatprep.mubr.f32.mxu0 0.0
    %1124 = vmatmul.mubr.f32.gmra.mrb[0].mxu0 %v1033
    %v1125 = vpop.f32.mrb[0].mxu0
    %v1126 = vadd.f32 %v1057, %v1125
    %v1127 = vpop.f32.mrb[0].mxu0
    %1128 = vdwg.mxu0
    %vm1129 = vcmp.gt.f32.partialorder %v1126, 0.0
    %v1130 = vmul.f32 %v1126, 0.01
    %v1131 = vsel %vm1129, %v1126, %v1130
    %s1132 = scalar_lea.vmem [#allocation5], 1408
    %v1133 = vld [vmem:[%s1132] sm:$0xff]
    %v1134 = vld [vmem:[%s1132 + $0x8] sm:$0xff]
    %v1135 = vld [vmem:[%s1132 + $0x10] sm:$0xff]
    %v1136 = vld [vmem:[%s1132 + $0x18] sm:$0xff]
    %v1137 = vld [vmem:[%s1132 + $0x20] sm:$0xff]
    %v1138 = vld [vmem:[%s1132 + $0x28] sm:$0xff]
    %v1139 = vld [vmem:[%s1132 + $0x30] sm:$0xff]
    %v1140 = vld [vmem:[%s1132 + $0x38] sm:$0xff]
    %v1141 = vld [vmem:[%s1132 + $0x40] sm:$0xff]
    %v1142 = vld [vmem:[%s1132 + $0x48] sm:$0xff]
    %v1143 = vld [vmem:[%s1132 + $0x50] sm:$0xff]
    %v1144 = vld [vmem:[%s1132 + $0x58] sm:$0xff]
    %v1145 = vld [vmem:[%s1132 + $0x60] sm:$0xff]
    %v1146 = vld [vmem:[%s1132 + $0x68] sm:$0xff]
    %v1147 = vld [vmem:[%s1132 + $0x70] sm:$0xff]
    %v1148 = vld [vmem:[%s1132 + $0x78] sm:$0xff]
    %s1149 = scalar_lea.vmem [#allocation7], 11
    %v1150 = vld [vmem:[%s1149] sm:$0x1]
    %v1152 = vlaneseq
    %v1153 = vshrl.u32 %v1152, 7
    %v1154 = vsub.s32 0, %v1153
    %v1155 = vrot.slane %v1150, %v1154
    %1157 = vmatprep.subr.mxu0 0.0
    %1158 = vmatpush1.msra.mxu0 %v1133
    %1159 = vmatprep.subr.mxu0 0.0
    %1160 = vmatpush1.msra.mxu0 %v1134
    %1161 = vmatprep.subr.mxu0 0.0
    %1162 = vmatpush1.msra.mxu0 %v1135
    %1163 = vmatprep.subr.mxu0 0.0
    %1164 = vmatpush1.msra.mxu0 %v1136
    %1165 = vmatprep.subr.mxu0 0.0
    %1166 = vmatpush1.msra.mxu0 %v1137
    %1167 = vmatprep.subr.mxu0 0.0
    %1168 = vmatpush1.msra.mxu0 %v1138
    %1169 = vmatprep.subr.mxu0 0.0
    %1170 = vmatpush1.msra.mxu0 %v1139
    %1171 = vmatprep.subr.mxu0 0.0
    %1172 = vmatpush1.msra.mxu0 %v1140
    %1173 = vmatprep.subr.mxu0 0.0
    %1174 = vmatpush1.msra.mxu0 %v1141
    %1175 = vmatprep.subr.mxu0 0.0
    %1176 = vmatpush1.msra.mxu0 %v1142
    %1177 = vmatprep.subr.mxu0 0.0
    %1178 = vmatpush1.msra.mxu0 %v1143
    %1179 = vmatprep.subr.mxu0 0.0
    %1180 = vmatpush1.msra.mxu0 %v1144
    %1181 = vmatprep.subr.mxu0 0.0
    %1182 = vmatpush1.msra.mxu0 %v1145
    %1183 = vmatprep.subr.mxu0 0.0
    %1184 = vmatpush1.msra.mxu0 %v1146
    %1185 = vmatprep.subr.mxu0 0.0
    %1186 = vmatpush1.msra.mxu0 %v1147
    %1187 = vmatprep.subr.mxu0 0.0
    %1188 = vmatpush1.msra.mxu0 %v1148
    %1189 = vmatprep.subr.mxu0 0.0
    %1190 = vmatpush1.msra.mxu0 0.0
    %1191 = vmatprep.subr.mxu0 0.0
    %1192 = vmatpush1.msra.mxu0 0.0
    %1193 = vmatprep.subr.mxu0 0.0
    %1194 = vmatpush1.msra.mxu0 0.0
    %1195 = vmatprep.subr.mxu0 0.0
    %1196 = vmatpush1.msra.mxu0 0.0
    %1197 = vmatprep.subr.mxu0 0.0
    %1198 = vmatpush1.msra.mxu0 0.0
    %1199 = vmatprep.subr.mxu0 0.0
    %1200 = vmatpush1.msra.mxu0 0.0
    %1201 = vmatprep.subr.mxu0 0.0
    %1202 = vmatpush1.msra.mxu0 0.0
    %1203 = vmatprep.subr.mxu0 0.0
    %1204 = vmatpush1.msra.mxu0 0.0
    %1205 = vmatprep.subr.mxu0 0.0
    %1206 = vmatpush1.msra.mxu0 0.0
    %1207 = vmatprep.subr.mxu0 0.0
    %1208 = vmatpush1.msra.mxu0 0.0
    %1209 = vmatprep.subr.mxu0 0.0
    %1210 = vmatpush1.msra.mxu0 0.0
    %1211 = vmatprep.subr.mxu0 0.0
    %1212 = vmatpush1.msra.mxu0 0.0
    %1213 = vmatprep.subr.mxu0 0.0
    %1214 = vmatpush1.msra.mxu0 0.0
    %1215 = vmatprep.subr.mxu0 0.0
    %1216 = vmatpush1.msra.mxu0 0.0
    %1217 = vmatprep.subr.mxu0 0.0
    %1218 = vmatpush1.msra.mxu0 0.0
    %1219 = vmatprep.subr.mxu0 0.0
    %1220 = vmatpush1.msra.mxu0 0.0
    %1221 = vmatprep.mubr.f32.mxu0 0.0
    %1222 = vmatmul.mubr.f32.gmra.mrb[0].mxu0 %v1131
    %v1223 = vpop.f32.mrb[0].mxu0
    %v1224 = vadd.f32 %v1155, %v1223
    %v1225 = vpop.f32.mrb[0].mxu0
    %1226 = vdwg.mxu0
    %v1227 = vtanh.pop %v1224
    %v1228 = vadd.f32 %v1033, %v1227
    %v1229 = vadd.f32 %v1228, %v54
    %s1230 = scalar_lea.vmem [#allocation5], 1536
    %v1231 = vld [vmem:[%s1230] sm:$0xff]
    %v1232 = vld [vmem:[%s1230 + $0x8] sm:$0xff]
    %v1233 = vld [vmem:[%s1230 + $0x10] sm:$0xff]
    %v1234 = vld [vmem:[%s1230 + $0x18] sm:$0xff]
    %v1235 = vld [vmem:[%s1230 + $0x20] sm:$0xff]
    %v1236 = vld [vmem:[%s1230 + $0x28] sm:$0xff]
    %v1237 = vld [vmem:[%s1230 + $0x30] sm:$0xff]
    %v1238 = vld [vmem:[%s1230 + $0x38] sm:$0xff]
    %v1239 = vld [vmem:[%s1230 + $0x40] sm:$0xff]
    %v1240 = vld [vmem:[%s1230 + $0x48] sm:$0xff]
    %v1241 = vld [vmem:[%s1230 + $0x50] sm:$0xff]
    %v1242 = vld [vmem:[%s1230 + $0x58] sm:$0xff]
    %v1243 = vld [vmem:[%s1230 + $0x60] sm:$0xff]
    %v1244 = vld [vmem:[%s1230 + $0x68] sm:$0xff]
    %v1245 = vld [vmem:[%s1230 + $0x70] sm:$0xff]
    %v1246 = vld [vmem:[%s1230 + $0x78] sm:$0xff]
    %s1247 = scalar_lea.vmem [#allocation7], 12
    %v1248 = vld [vmem:[%s1247] sm:$0x1]
    %v1250 = vlaneseq
    %v1251 = vshrl.u32 %v1250, 7
    %v1252 = vsub.s32 0, %v1251
    %v1253 = vrot.slane %v1248, %v1252
    %1255 = vmatprep.subr.mxu0 0.0
    %1256 = vmatpush1.msra.mxu0 %v1231
    %1257 = vmatprep.subr.mxu0 0.0
    %1258 = vmatpush1.msra.mxu0 %v1232
    %1259 = vmatprep.subr.mxu0 0.0
    %1260 = vmatpush1.msra.mxu0 %v1233
    %1261 = vmatprep.subr.mxu0 0.0
    %1262 = vmatpush1.msra.mxu0 %v1234
    %1263 = vmatprep.subr.mxu0 0.0
    %1264 = vmatpush1.msra.mxu0 %v1235
    %1265 = vmatprep.subr.mxu0 0.0
    %1266 = vmatpush1.msra.mxu0 %v1236
    %1267 = vmatprep.subr.mxu0 0.0
    %1268 = vmatpush1.msra.mxu0 %v1237
    %1269 = vmatprep.subr.mxu0 0.0
    %1270 = vmatpush1.msra.mxu0 %v1238
    %1271 = vmatprep.subr.mxu0 0.0
    %1272 = vmatpush1.msra.mxu0 %v1239
    %1273 = vmatprep.subr.mxu0 0.0
    %1274 = vmatpush1.msra.mxu0 %v1240
    %1275 = vmatprep.subr.mxu0 0.0
    %1276 = vmatpush1.msra.mxu0 %v1241
    %1277 = vmatprep.subr.mxu0 0.0
    %1278 = vmatpush1.msra.mxu0 %v1242
    %1279 = vmatprep.subr.mxu0 0.0
    %1280 = vmatpush1.msra.mxu0 %v1243
    %1281 = vmatprep.subr.mxu0 0.0
    %1282 = vmatpush1.msra.mxu0 %v1244
    %1283 = vmatprep.subr.mxu0 0.0
    %1284 = vmatpush1.msra.mxu0 %v1245
    %1285 = vmatprep.subr.mxu0 0.0
    %1286 = vmatpush1.msra.mxu0 %v1246
    %1287 = vmatprep.subr.mxu0 0.0
    %1288 = vmatpush1.msra.mxu0 0.0
    %1289 = vmatprep.subr.mxu0 0.0
    %1290 = vmatpush1.msra.mxu0 0.0
    %1291 = vmatprep.subr.mxu0 0.0
    %1292 = vmatpush1.msra.mxu0 0.0
    %1293 = vmatprep.subr.mxu0 0.0
    %1294 = vmatpush1.msra.mxu0 0.0
    %1295 = vmatprep.subr.mxu0 0.0
    %1296 = vmatpush1.msra.mxu0 0.0
    %1297 = vmatprep.subr.mxu0 0.0
    %1298 = vmatpush1.msra.mxu0 0.0
    %1299 = vmatprep.subr.mxu0 0.0
    %1300 = vmatpush1.msra.mxu0 0.0
    %1301 = vmatprep.subr.mxu0 0.0
    %1302 = vmatpush1.msra.mxu0 0.0
    %1303 = vmatprep.subr.mxu0 0.0
    %1304 = vmatpush1.msra.mxu0 0.0
    %1305 = vmatprep.subr.mxu0 0.0
    %1306 = vmatpush1.msra.mxu0 0.0
    %1307 = vmatprep.subr.mxu0 0.0
    %1308 = vmatpush1.msra.mxu0 0.0
    %1309 = vmatprep.subr.mxu0 0.0
    %1310 = vmatpush1.msra.mxu0 0.0
    %1311 = vmatprep.subr.mxu0 0.0
    %1312 = vmatpush1.msra.mxu0 0.0
    %1313 = vmatprep.subr.mxu0 0.0
    %1314 = vmatpush1.msra.mxu0 0.0
    %1315 = vmatprep.subr.mxu0 0.0
    %1316 = vmatpush1.msra.mxu0 0.0
    %1317 = vmatprep.subr.mxu0 0.0
    %1318 = vmatpush1.msra.mxu0 0.0
    %1319 = vmatprep.mubr.f32.mxu0 0.0
    %1320 = vmatmul.mubr.f32.gmra.mrb[0].mxu0 %v1229
    %v1321 = vpop.f32.mrb[0].mxu0
    %v1322 = vadd.f32 %v1253, %v1321
    %v1323 = vpop.f32.mrb[0].mxu0
    %1324 = vdwg.mxu0
    %1325 = vst [vmem:[#allocation8] sm:$0xff] %v1322
    // Predicated region
    $region26: #{tpu_custom_call.1} parent=1 // pred_check
      _
    $region27: #{tpu_custom_call.1} parent=1 // pred_check_branch
      %1327 = sbr.rel (0) target = $region29
    $region28: #{tpu_custom_call.1} parent=1 // pred_region
      %s1329 = ssub.s32 128, 128
      %1330 = vsyncadd [#allocation4], %s1329
      %s1332 = sshll.u32 [#allocation8], 4
      %s1333 = int_to_ptr.vmem [resolvable:$true] %s1332
      %1335 = dma.vmem_to_hbm [thread:$0]  %s1333, 128, %s3, [#allocation4]
    $region29: #{tpu_custom_call.1} parent=1 // pred_fallthru
      _
    // Predicated region
    $region30: #{tpu_custom_call.1} parent=1 // pred_check
      _
    $region31: #{tpu_custom_call.1} parent=1 // pred_check_branch
      %1337 = sbr.rel (0) target = $region33
    $region32: #{tpu_custom_call.1} parent=1 // pred_region
      %1338 = dma.done [#allocation4], 128
    $region33: #{tpu_custom_call.1} parent=1 // pred_fallthru
      _
    %1339 = vsyncpa [#allocation3], 1
    %1340 = vsyncpa [#allocation6], 1
    %1341 = vsyncpa [#allocation4], 1

// kernel: tpu_custom_call.1
$region0: #{tpu_custom_call.1}
  #allocation0 [shape = 'u32[]', space=smem, size = 0x4, offset = 0x4, fixed_abs, tag = 'smem constant byte address 0x4 - core index']
  #allocation1 [shape = 'u32[144,128]{1,0:T(1,128)}', space=vmem, size = 0x12000, scoped, tag = 'internal scratch']
  %s0 = inlined_call_operand.hbm [shape: f32[8,128], index: 0, kind: input, shape index: {}]
  %s1 = inlined_call_operand.hbm [shape: f32[13,128,128], index: 1, kind: input, shape index: {}]
  %s2 = inlined_call_operand.hbm [shape: f32[13,1,128], index: 2, kind: input, shape index: {}]
  %s3 = inlined_call_operand.hbm [shape: f32[8,128], index: 3, kind: output, shape index: {}]
  %s4 = sld [smem:[#allocation0]]
  $region34: #{tpu_custom_call.1} parent=0
    _
  %s6 = ssub.s32 1, %s4
  %s7 = scalar_select 0, %s6, %s4
  $region1: #{tpu_custom_call.1} parent=0
    #allocation2 [shape = 'u8[4096]{0}', space=vmem, size = 0x1000, scoped, tag = 'input window, operand 0, single buffered']
    #allocation3 [shape = 's32[1]{0}', space=sflag, size = 0x4, scoped, tag = 'scoped memory for tpu_custom_call.1']
    #allocation4 [shape = 's32[1]{0}', space=sflag, size = 0x4, scoped, tag = 'scoped memory for tpu_custom_call.1']
    #allocation5 [shape = 'u8[851968]{0}', space=vmem, size = 0xd0000, scoped, tag = 'input window, operand 1, single buffered']
    #allocation6 [shape = 's32[1]{0}', space=sflag, size = 0x4, scoped, tag = 'scoped memory for tpu_custom_call.1']
    #allocation7 [shape = 'u8[6656]{0}', space=vmem, size = 0x1c00, scoped, tag = 'input window, operand 2, single buffered']
    #allocation8 [shape = 'u8[4096]{0}', space=vmem, size = 0x1000, scoped, tag = 'output window, operand 0, single buffered']
    %8 = vsyncpa [#allocation3], 0
    %9 = vsyncpa [#allocation6], 0
    %10 = vsyncpa [#allocation4], 0
    // Predicated region
    $region2: #{tpu_custom_call.1} parent=1 // pred_check
      _
    $region3: #{tpu_custom_call.1} parent=1 // pred_check_branch
      %12 = sbr.rel (0) target = $region5
    $region4: #{tpu_custom_call.1} parent=1 // pred_region
      %s14 = ssub.s32 128, 128
      %15 = vsyncadd [#allocation3], %s14
      %s17 = sshll.u32 [#allocation2], 4
      %s18 = int_to_ptr.vmem [resolvable:$true] %s17
      %20 = dma.hbm_to_vmem [thread:$0]  %s0, 128, %s18, [#allocation3]
    $region5: #{tpu_custom_call.1} parent=1 // pred_fallthru
      _
    // Predicated region
    $region6: #{tpu_custom_call.1} parent=1 // pred_check
      _
    $region7: #{tpu_custom_call.1} parent=1 // pred_check_branch
      %22 = sbr.rel (0) target = $region9
    $region8: #{tpu_custom_call.1} parent=1 // pred_region
      %s24 = ssub.s32 26624, 26624
      %25 = vsyncadd [#allocation6], %s24
      %s26 = sshll.u32 [#allocation5], 4
      %s27 = int_to_ptr.vmem [resolvable:$true] %s26
      %32 = dma.hbm_to_vmem [thread:$0]  %s1, 26624, %s27, [#allocation6], 128, 128, 8
    $region9: #{tpu_custom_call.1} parent=1 // pred_fallthru
      _
    // Predicated region
    $region10: #{tpu_custom_call.1} parent=1 // pred_check
      _
    $region11: #{tpu_custom_call.1} parent=1 // pred_check_branch
      %34 = sbr.rel (0) target = $region13
    $region12: #{tpu_custom_call.1} parent=1 // pred_region
      %s36 = ssub.s32 208, 208
      %37 = vsyncadd [#allocation6], %s36
      %s38 = sshll.u32 [#allocation7], 4
      %s39 = int_to_ptr.vmem [resolvable:$true] %s38
      %44 = dma.hbm_to_vmem [thread:$0]  %s2, 208, %s39, [#allocation6], 16, 16, 1
    $region13: #{tpu_custom_call.1} parent=1 // pred_fallthru
      _
    // Predicated region
    $region14: #{tpu_custom_call.1} parent=1 // pred_check
      _
    $region15: #{tpu_custom_call.1} parent=1 // pred_check_branch
      %46 = sbr.rel (0) target = $region17
    $region16: #{tpu_custom_call.1} parent=1 // pred_region
      %47 = dma.done [#allocation3], 128
    $region17: #{tpu_custom_call.1} parent=1 // pred_fallthru
      _
    // Predicated region
    $region18: #{tpu_custom_call.1} parent=1 // pred_check
      _
    $region19: #{tpu_custom_call.1} parent=1 // pred_check_branch
      %49 = sbr.rel (0) target = $region21
    $region20: #{tpu_custom_call.1} parent=1 // pred_region
      %50 = dma.done [#allocation6], 26624
    $region21: #{tpu_custom_call.1} parent=1 // pred_fallthru
      _
    // Predicated region
    $region22: #{tpu_custom_call.1} parent=1 // pred_check
      _
    $region23: #{tpu_custom_call.1} parent=1 // pred_check_branch
      %52 = sbr.rel (0) target = $region25
    $region24: #{tpu_custom_call.1} parent=1 // pred_region
      %53 = dma.done [#allocation6], 208
    $region25: #{tpu_custom_call.1} parent=1 // pred_fallthru
      _
    %v54 = vld [vmem:[#allocation2] sm:$0xff]
    %v55 = vld [vmem:[#allocation5] sm:$0xff]
    %v56 = vld [vmem:[#allocation5 + $0x8] sm:$0xff]
    %v57 = vld [vmem:[#allocation5 + $0x10] sm:$0xff]
    %v58 = vld [vmem:[#allocation5 + $0x18] sm:$0xff]
    %v59 = vld [vmem:[#allocation5 + $0x20] sm:$0xff]
    %v60 = vld [vmem:[#allocation5 + $0x28] sm:$0xff]
    %v61 = vld [vmem:[#allocation5 + $0x30] sm:$0xff]
    %v62 = vld [vmem:[#allocation5 + $0x38] sm:$0xff]
    %v63 = vld [vmem:[#allocation5 + $0x40] sm:$0xff]
    %v64 = vld [vmem:[#allocation5 + $0x48] sm:$0xff]
    %v65 = vld [vmem:[#allocation5 + $0x50] sm:$0xff]
    %v66 = vld [vmem:[#allocation5 + $0x58] sm:$0xff]
    %v67 = vld [vmem:[#allocation5 + $0x60] sm:$0xff]
    %v68 = vld [vmem:[#allocation5 + $0x68] sm:$0xff]
    %v69 = vld [vmem:[#allocation5 + $0x70] sm:$0xff]
    %v70 = vld [vmem:[#allocation5 + $0x78] sm:$0xff]
    %v71 = vld [vmem:[#allocation7] sm:$0x1]
    %v73 = vlaneseq
    %v74 = vshrl.u32 %v73, 7
    %v75 = vsub.s32 0, %v74
    %v76 = vrot.slane %v71, %v75
    %78 = vmatprep.subr.mxu0 0.0
    %79 = vmatpush1.msra.mxu0 %v55
    %80 = vmatprep.subr.mxu0 0.0
    %81 = vmatpush1.msra.mxu0 %v56
    %82 = vmatprep.subr.mxu0 0.0
    %83 = vmatpush1.msra.mxu0 %v57
    %84 = vmatprep.subr.mxu0 0.0
    %85 = vmatpush1.msra.mxu0 %v58
    %86 = vmatprep.subr.mxu0 0.0
    %87 = vmatpush1.msra.mxu0 %v59
    %88 = vmatprep.subr.mxu0 0.0
    %89 = vmatpush1.msra.mxu0 %v60
    %90 = vmatprep.subr.mxu0 0.0
    %91 = vmatpush1.msra.mxu0 %v61
    %92 = vmatprep.subr.mxu0 0.0
    %93 = vmatpush1.msra.mxu0 %v62
    %94 = vmatprep.subr.mxu0 0.0
    %95 = vmatpush1.msra.mxu0 %v63
    %96 = vmatprep.subr.mxu0 0.0
    %97 = vmatpush1.msra.mxu0 %v64
    %98 = vmatprep.subr.mxu0 0.0
    %99 = vmatpush1.msra.mxu0 %v65
    %100 = vmatprep.subr.mxu0 0.0
    %101 = vmatpush1.msra.mxu0 %v66
    %102 = vmatprep.subr.mxu0 0.0
    %103 = vmatpush1.msra.mxu0 %v67
    %104 = vmatprep.subr.mxu0 0.0
    %105 = vmatpush1.msra.mxu0 %v68
    %106 = vmatprep.subr.mxu0 0.0
    %107 = vmatpush1.msra.mxu0 %v69
    %108 = vmatprep.subr.mxu0 0.0
    %109 = vmatpush1.msra.mxu0 %v70
    %110 = vmatprep.subr.mxu0 0.0
    %111 = vmatpush1.msra.mxu0 0.0
    %112 = vmatprep.subr.mxu0 0.0
    %113 = vmatpush1.msra.mxu0 0.0
    %114 = vmatprep.subr.mxu0 0.0
    %115 = vmatpush1.msra.mxu0 0.0
    %116 = vmatprep.subr.mxu0 0.0
    %117 = vmatpush1.msra.mxu0 0.0
    %118 = vmatprep.subr.mxu0 0.0
    %119 = vmatpush1.msra.mxu0 0.0
    %120 = vmatprep.subr.mxu0 0.0
    %121 = vmatpush1.msra.mxu0 0.0
    %122 = vmatprep.subr.mxu0 0.0
    %123 = vmatpush1.msra.mxu0 0.0
    %124 = vmatprep.subr.mxu0 0.0
    %125 = vmatpush1.msra.mxu0 0.0
    %126 = vmatprep.subr.mxu0 0.0
    %127 = vmatpush1.msra.mxu0 0.0
    %128 = vmatprep.subr.mxu0 0.0
    %129 = vmatpush1.msra.mxu0 0.0
    %130 = vmatprep.subr.mxu0 0.0
    %131 = vmatpush1.msra.mxu0 0.0
    %132 = vmatprep.subr.mxu0 0.0
    %133 = vmatpush1.msra.mxu0 0.0
    %134 = vmatprep.subr.mxu0 0.0
    %135 = vmatpush1.msra.mxu0 0.0
    %136 = vmatprep.subr.mxu0 0.0
    %137 = vmatpush1.msra.mxu0 0.0
    %138 = vmatprep.subr.mxu0 0.0
    %139 = vmatpush1.msra.mxu0 0.0
    %140 = vmatprep.subr.mxu0 0.0
    %141 = vmatpush1.msra.mxu0 0.0
    %142 = vmatprep.mubr.f32.mxu0 0.0
    %143 = vmatmul.mubr.f32.gmra.mrb[0].mxu0 %v54
    %v144 = vpop.f32.mrb[0].mxu0
    %v145 = vadd.f32 %v76, %v144
    %v146 = vpop.f32.mrb[0].mxu0
    %147 = vdwg.mxu0
    %vm148 = vcmp.gt.f32.partialorder %v145, 0.0
    %v149 = vmul.f32 %v145, 0.01
    %v150 = vsel %vm148, %v145, %v149
    %s151 = scalar_lea.vmem [#allocation5], 128
    %v152 = vld [vmem:[%s151] sm:$0xff]
    %v153 = vld [vmem:[%s151 + $0x8] sm:$0xff]
    %v154 = vld [vmem:[%s151 + $0x10] sm:$0xff]
    %v155 = vld [vmem:[%s151 + $0x18] sm:$0xff]
    %v156 = vld [vmem:[%s151 + $0x20] sm:$0xff]
    %v157 = vld [vmem:[%s151 + $0x28] sm:$0xff]
    %v158 = vld [vmem:[%s151 + $0x30] sm:$0xff]
    %v159 = vld [vmem:[%s151 + $0x38] sm:$0xff]
    %v160 = vld [vmem:[%s151 + $0x40] sm:$0xff]
    %v161 = vld [vmem:[%s151 + $0x48] sm:$0xff]
    %v162 = vld [vmem:[%s151 + $0x50] sm:$0xff]
    %v163 = vld [vmem:[%s151 + $0x58] sm:$0xff]
    %v164 = vld [vmem:[%s151 + $0x60] sm:$0xff]
    %v165 = vld [vmem:[%s151 + $0x68] sm:$0xff]
    %v166 = vld [vmem:[%s151 + $0x70] sm:$0xff]
    %v167 = vld [vmem:[%s151 + $0x78] sm:$0xff]
    %s168 = scalar_lea.vmem [#allocation7], 1
    %v169 = vld [vmem:[%s168] sm:$0x1]
    %v171 = vlaneseq
    %v172 = vshrl.u32 %v171, 7
    %v173 = vsub.s32 0, %v172
    %v174 = vrot.slane %v169, %v173
    %176 = vmatprep.subr.mxu0 0.0
    %177 = vmatpush1.msra.mxu0 %v152
    %178 = vmatprep.subr.mxu0 0.0
    %179 = vmatpush1.msra.mxu0 %v153
    %180 = vmatprep.subr.mxu0 0.0
    %181 = vmatpush1.msra.mxu0 %v154
    %182 = vmatprep.subr.mxu0 0.0
    %183 = vmatpush1.msra.mxu0 %v155
    %184 = vmatprep.subr.mxu0 0.0
    %185 = vmatpush1.msra.mxu0 %v156
    %186 = vmatprep.subr.mxu0 0.0
    %187 = vmatpush1.msra.mxu0 %v157
    %188 = vmatprep.subr.mxu0 0.0
    %189 = vmatpush1.msra.mxu0 %v158
    %190 = vmatprep.subr.mxu0 0.0
    %191 = vmatpush1.msra.mxu0 %v159
    %192 = vmatprep.subr.mxu0 0.0
    %193 = vmatpush1.msra.mxu0 %v160
    %194 = vmatprep.subr.mxu0 0.0
    %195 = vmatpush1.msra.mxu0 %v161
    %196 = vmatprep.subr.mxu0 0.0
    %197 = vmatpush1.msra.mxu0 %v162
    %198 = vmatprep.subr.mxu0 0.0
    %199 = vmatpush1.msra.mxu0 %v163
    %200 = vmatprep.subr.mxu0 0.0
    %201 = vmatpush1.msra.mxu0 %v164
    %202 = vmatprep.subr.mxu0 0.0
    %203 = vmatpush1.msra.mxu0 %v165
    %204 = vmatprep.subr.mxu0 0.0
    %205 = vmatpush1.msra.mxu0 %v166
    %206 = vmatprep.subr.mxu0 0.0
    %207 = vmatpush1.msra.mxu0 %v167
    %208 = vmatprep.subr.mxu0 0.0
    %209 = vmatpush1.msra.mxu0 0.0
    %210 = vmatprep.subr.mxu0 0.0
    %211 = vmatpush1.msra.mxu0 0.0
    %212 = vmatprep.subr.mxu0 0.0
    %213 = vmatpush1.msra.mxu0 0.0
    %214 = vmatprep.subr.mxu0 0.0
    %215 = vmatpush1.msra.mxu0 0.0
    %216 = vmatprep.subr.mxu0 0.0
    %217 = vmatpush1.msra.mxu0 0.0
    %218 = vmatprep.subr.mxu0 0.0
    %219 = vmatpush1.msra.mxu0 0.0
    %220 = vmatprep.subr.mxu0 0.0
    %221 = vmatpush1.msra.mxu0 0.0
    %222 = vmatprep.subr.mxu0 0.0
    %223 = vmatpush1.msra.mxu0 0.0
    %224 = vmatprep.subr.mxu0 0.0
    %225 = vmatpush1.msra.mxu0 0.0
    %226 = vmatprep.subr.mxu0 0.0
    %227 = vmatpush1.msra.mxu0 0.0
    %228 = vmatprep.subr.mxu0 0.0
    %229 = vmatpush1.msra.mxu0 0.0
    %230 = vmatprep.subr.mxu0 0.0
    %231 = vmatpush1.msra.mxu0 0.0
    %232 = vmatprep.subr.mxu0 0.0
    %233 = vmatpush1.msra.mxu0 0.0
    %234 = vmatprep.subr.mxu0 0.0
    %235 = vmatpush1.msra.mxu0 0.0
    %236 = vmatprep.subr.mxu0 0.0
    %237 = vmatpush1.msra.mxu0 0.0
    %238 = vmatprep.subr.mxu0 0.0
    %239 = vmatpush1.msra.mxu0 0.0
    %240 = vmatprep.mubr.f32.mxu0 0.0
    %241 = vmatmul.mubr.f32.gmra.mrb[0].mxu0 %v150
    %v242 = vpop.f32.mrb[0].mxu0
    %v243 = vadd.f32 %v174, %v242
    %v244 = vpop.f32.mrb[0].mxu0
    %245 = vdwg.mxu0
    %v246 = vtanh.pop %v243
    %v247 = vmul.f32 %v246, 1.442695
    %v248 = vpow.pop %v247
    %v249 = vmul.f32 %v54, %v248
    %s250 = scalar_lea.vmem [#allocation5], 256
    %v251 = vld [vmem:[%s250] sm:$0xff]
    %v252 = vld [vmem:[%s250 + $0x8] sm:$0xff]
    %v253 = vld [vmem:[%s250 + $0x10] sm:$0xff]
    %v254 = vld [vmem:[%s250 + $0x18] sm:$0xff]
    %v255 = vld [vmem:[%s250 + $0x20] sm:$0xff]
    %v256 = vld [vmem:[%s250 + $0x28] sm:$0xff]
    %v257 = vld [vmem:[%s250 + $0x30] sm:$0xff]
    %v258 = vld [vmem:[%s250 + $0x38] sm:$0xff]
    %v259 = vld [vmem:[%s250 + $0x40] sm:$0xff]
    %v260 = vld [vmem:[%s250 + $0x48] sm:$0xff]
    %v261 = vld [vmem:[%s250 + $0x50] sm:$0xff]
    %v262 = vld [vmem:[%s250 + $0x58] sm:$0xff]
    %v263 = vld [vmem:[%s250 + $0x60] sm:$0xff]
    %v264 = vld [vmem:[%s250 + $0x68] sm:$0xff]
    %v265 = vld [vmem:[%s250 + $0x70] sm:$0xff]
    %v266 = vld [vmem:[%s250 + $0x78] sm:$0xff]
    %s267 = scalar_lea.vmem [#allocation7], 2
    %v268 = vld [vmem:[%s267] sm:$0x1]
    %v270 = vlaneseq
    %v271 = vshrl.u32 %v270, 7
    %v272 = vsub.s32 0, %v271
    %v273 = vrot.slane %v268, %v272
    %275 = vmatprep.subr.mxu0 0.0
    %276 = vmatpush1.msra.mxu0 %v251
    %277 = vmatprep.subr.mxu0 0.0
    %278 = vmatpush1.msra.mxu0 %v252
    %279 = vmatprep.subr.mxu0 0.0
    %280 = vmatpush1.msra.mxu0 %v253
    %281 = vmatprep.subr.mxu0 0.0
    %282 = vmatpush1.msra.mxu0 %v254
    %283 = vmatprep.subr.mxu0 0.0
    %284 = vmatpush1.msra.mxu0 %v255
    %285 = vmatprep.subr.mxu0 0.0
    %286 = vmatpush1.msra.mxu0 %v256
    %287 = vmatprep.subr.mxu0 0.0
    %288 = vmatpush1.msra.mxu0 %v257
    %289 = vmatprep.subr.mxu0 0.0
    %290 = vmatpush1.msra.mxu0 %v258
    %291 = vmatprep.subr.mxu0 0.0
    %292 = vmatpush1.msra.mxu0 %v259
    %293 = vmatprep.subr.mxu0 0.0
    %294 = vmatpush1.msra.mxu0 %v260
    %295 = vmatprep.subr.mxu0 0.0
    %296 = vmatpush1.msra.mxu0 %v261
    %297 = vmatprep.subr.mxu0 0.0
    %298 = vmatpush1.msra.mxu0 %v262
    %299 = vmatprep.subr.mxu0 0.0
    %300 = vmatpush1.msra.mxu0 %v263
    %301 = vmatprep.subr.mxu0 0.0
    %302 = vmatpush1.msra.mxu0 %v264
    %303 = vmatprep.subr.mxu0 0.0
    %304 = vmatpush1.msra.mxu0 %v265
    %305 = vmatprep.subr.mxu0 0.0
    %306 = vmatpush1.msra.mxu0 %v266
    %307 = vmatprep.subr.mxu0 0.0
    %308 = vmatpush1.msra.mxu0 0.0
    %309 = vmatprep.subr.mxu0 0.0
    %310 = vmatpush1.msra.mxu0 0.0
    %311 = vmatprep.subr.mxu0 0.0
    %312 = vmatpush1.msra.mxu0 0.0
    %313 = vmatprep.subr.mxu0 0.0
    %314 = vmatpush1.msra.mxu0 0.0
    %315 = vmatprep.subr.mxu0 0.0
    %316 = vmatpush1.msra.mxu0 0.0
    %317 = vmatprep.subr.mxu0 0.0
    %318 = vmatpush1.msra.mxu0 0.0
    %319 = vmatprep.subr.mxu0 0.0
    %320 = vmatpush1.msra.mxu0 0.0
    %321 = vmatprep.subr.mxu0 0.0
    %322 = vmatpush1.msra.mxu0 0.0
    %323 = vmatprep.subr.mxu0 0.0
    %324 = vmatpush1.msra.mxu0 0.0
    %325 = vmatprep.subr.mxu0 0.0
    %326 = vmatpush1.msra.mxu0 0.0
    %327 = vmatprep.subr.mxu0 0.0
    %328 = vmatpush1.msra.mxu0 0.0
    %329 = vmatprep.subr.mxu0 0.0
    %330 = vmatpush1.msra.mxu0 0.0
    %331 = vmatprep.subr.mxu0 0.0
    %332 = vmatpush1.msra.mxu0 0.0
    %333 = vmatprep.subr.mxu0 0.0
    %334 = vmatpush1.msra.mxu0 0.0
    %335 = vmatprep.subr.mxu0 0.0
    %336 = vmatpush1.msra.mxu0 0.0
    %337 = vmatprep.subr.mxu0 0.0
    %338 = vmatpush1.msra.mxu0 0.0
    %339 = vmatprep.mubr.f32.mxu0 0.0
    %340 = vmatmul.mubr.f32.gmra.mrb[0].mxu0 %v249
    %v341 = vpop.f32.mrb[0].mxu0
    %v342 = vadd.f32 %v273, %v341
    %v343 = vpop.f32.mrb[0].mxu0
    %344 = vdwg.mxu0
    %vm345 = vcmp.gt.f32.partialorder %v342, 0.0
    %v346 = vmul.f32 %v342, 0.01
    %v347 = vsel %vm345, %v342, %v346
    %s348 = scalar_lea.vmem [#allocation5], 384
    %v349 = vld [vmem:[%s348] sm:$0xff]
    %v350 = vld [vmem:[%s348 + $0x8] sm:$0xff]
    %v351 = vld [vmem:[%s348 + $0x10] sm:$0xff]
    %v352 = vld [vmem:[%s348 + $0x18] sm:$0xff]
    %v353 = vld [vmem:[%s348 + $0x20] sm:$0xff]
    %v354 = vld [vmem:[%s348 + $0x28] sm:$0xff]
    %v355 = vld [vmem:[%s348 + $0x30] sm:$0xff]
    %v356 = vld [vmem:[%s348 + $0x38] sm:$0xff]
    %v357 = vld [vmem:[%s348 + $0x40] sm:$0xff]
    %v358 = vld [vmem:[%s348 + $0x48] sm:$0xff]
    %v359 = vld [vmem:[%s348 + $0x50] sm:$0xff]
    %v360 = vld [vmem:[%s348 + $0x58] sm:$0xff]
    %v361 = vld [vmem:[%s348 + $0x60] sm:$0xff]
    %v362 = vld [vmem:[%s348 + $0x68] sm:$0xff]
    %v363 = vld [vmem:[%s348 + $0x70] sm:$0xff]
    %v364 = vld [vmem:[%s348 + $0x78] sm:$0xff]
    %s365 = scalar_lea.vmem [#allocation7], 3
    %v366 = vld [vmem:[%s365] sm:$0x1]
    %v368 = vlaneseq
    %v369 = vshrl.u32 %v368, 7
    %v370 = vsub.s32 0, %v369
    %v371 = vrot.slane %v366, %v370
    %373 = vmatprep.subr.mxu0 0.0
    %374 = vmatpush1.msra.mxu0 %v349
    %375 = vmatprep.subr.mxu0 0.0
    %376 = vmatpush1.msra.mxu0 %v350
    %377 = vmatprep.subr.mxu0 0.0
    %378 = vmatpush1.msra.mxu0 %v351
    %379 = vmatprep.subr.mxu0 0.0
    %380 = vmatpush1.msra.mxu0 %v352
    %381 = vmatprep.subr.mxu0 0.0
    %382 = vmatpush1.msra.mxu0 %v353
    %383 = vmatprep.subr.mxu0 0.0
    %384 = vmatpush1.msra.mxu0 %v354
    %385 = vmatprep.subr.mxu0 0.0
    %386 = vmatpush1.msra.mxu0 %v355
    %387 = vmatprep.subr.mxu0 0.0
    %388 = vmatpush1.msra.mxu0 %v356
    %389 = vmatprep.subr.mxu0 0.0
    %390 = vmatpush1.msra.mxu0 %v357
    %391 = vmatprep.subr.mxu0 0.0
    %392 = vmatpush1.msra.mxu0 %v358
    %393 = vmatprep.subr.mxu0 0.0
    %394 = vmatpush1.msra.mxu0 %v359
    %395 = vmatprep.subr.mxu0 0.0
    %396 = vmatpush1.msra.mxu0 %v360
    %397 = vmatprep.subr.mxu0 0.0
    %398 = vmatpush1.msra.mxu0 %v361
    %399 = vmatprep.subr.mxu0 0.0
    %400 = vmatpush1.msra.mxu0 %v362
    %401 = vmatprep.subr.mxu0 0.0
    %402 = vmatpush1.msra.mxu0 %v363
    %403 = vmatprep.subr.mxu0 0.0
    %404 = vmatpush1.msra.mxu0 %v364
    %405 = vmatprep.subr.mxu0 0.0
    %406 = vmatpush1.msra.mxu0 0.0
    %407 = vmatprep.subr.mxu0 0.0
    %408 = vmatpush1.msra.mxu0 0.0
    %409 = vmatprep.subr.mxu0 0.0
    %410 = vmatpush1.msra.mxu0 0.0
    %411 = vmatprep.subr.mxu0 0.0
    %412 = vmatpush1.msra.mxu0 0.0
    %413 = vmatprep.subr.mxu0 0.0
    %414 = vmatpush1.msra.mxu0 0.0
    %415 = vmatprep.subr.mxu0 0.0
    %416 = vmatpush1.msra.mxu0 0.0
    %417 = vmatprep.subr.mxu0 0.0
    %418 = vmatpush1.msra.mxu0 0.0
    %419 = vmatprep.subr.mxu0 0.0
    %420 = vmatpush1.msra.mxu0 0.0
    %421 = vmatprep.subr.mxu0 0.0
    %422 = vmatpush1.msra.mxu0 0.0
    %423 = vmatprep.subr.mxu0 0.0
    %424 = vmatpush1.msra.mxu0 0.0
    %425 = vmatprep.subr.mxu0 0.0
    %426 = vmatpush1.msra.mxu0 0.0
    %427 = vmatprep.subr.mxu0 0.0
    %428 = vmatpush1.msra.mxu0 0.0
    %429 = vmatprep.subr.mxu0 0.0
    %430 = vmatpush1.msra.mxu0 0.0
    %431 = vmatprep.subr.mxu0 0.0
    %432 = vmatpush1.msra.mxu0 0.0
    %433 = vmatprep.subr.mxu0 0.0
    %434 = vmatpush1.msra.mxu0 0.0
    %435 = vmatprep.subr.mxu0 0.0
    %436 = vmatpush1.msra.mxu0 0.0
    %437 = vmatprep.mubr.f32.mxu0 0.0
    %438 = vmatmul.mubr.f32.gmra.mrb[0].mxu0 %v347
    %v439 = vpop.f32.mrb[0].mxu0
    %v440 = vadd.f32 %v371, %v439
    %v441 = vpop.f32.mrb[0].mxu0
    %442 = vdwg.mxu0
    %v443 = vtanh.pop %v440
    %v444 = vadd.f32 %v249, %v443
    %s445 = scalar_lea.vmem [#allocation5], 512
    %v446 = vld [vmem:[%s445] sm:$0xff]
    %v447 = vld [vmem:[%s445 + $0x8] sm:$0xff]
    %v448 = vld [vmem:[%s445 + $0x10] sm:$0xff]
    %v449 = vld [vmem:[%s445 + $0x18] sm:$0xff]
    %v450 = vld [vmem:[%s445 + $0x20] sm:$0xff]
    %v451 = vld [vmem:[%s445 + $0x28] sm:$0xff]
    %v452 = vld [vmem:[%s445 + $0x30] sm:$0xff]
    %v453 = vld [vmem:[%s445 + $0x38] sm:$0xff]
    %v454 = vld [vmem:[%s445 + $0x40] sm:$0xff]
    %v455 = vld [vmem:[%s445 + $0x48] sm:$0xff]
    %v456 = vld [vmem:[%s445 + $0x50] sm:$0xff]
    %v457 = vld [vmem:[%s445 + $0x58] sm:$0xff]
    %v458 = vld [vmem:[%s445 + $0x60] sm:$0xff]
    %v459 = vld [vmem:[%s445 + $0x68] sm:$0xff]
    %v460 = vld [vmem:[%s445 + $0x70] sm:$0xff]
    %v461 = vld [vmem:[%s445 + $0x78] sm:$0xff]
    %s462 = scalar_lea.vmem [#allocation7], 4
    %v463 = vld [vmem:[%s462] sm:$0x1]
    %v465 = vlaneseq
    %v466 = vshrl.u32 %v465, 7
    %v467 = vsub.s32 0, %v466
    %v468 = vrot.slane %v463, %v467
    %470 = vmatprep.subr.mxu0 0.0
    %471 = vmatpush1.msra.mxu0 %v446
    %472 = vmatprep.subr.mxu0 0.0
    %473 = vmatpush1.msra.mxu0 %v447
    %474 = vmatprep.subr.mxu0 0.0
    %475 = vmatpush1.msra.mxu0 %v448
    %476 = vmatprep.subr.mxu0 0.0
    %477 = vmatpush1.msra.mxu0 %v449
    %478 = vmatprep.subr.mxu0 0.0
    %479 = vmatpush1.msra.mxu0 %v450
    %480 = vmatprep.subr.mxu0 0.0
    %481 = vmatpush1.msra.mxu0 %v451
    %482 = vmatprep.subr.mxu0 0.0
    %483 = vmatpush1.msra.mxu0 %v452
    %484 = vmatprep.subr.mxu0 0.0
    %485 = vmatpush1.msra.mxu0 %v453
    %486 = vmatprep.subr.mxu0 0.0
    %487 = vmatpush1.msra.mxu0 %v454
    %488 = vmatprep.subr.mxu0 0.0
    %489 = vmatpush1.msra.mxu0 %v455
    %490 = vmatprep.subr.mxu0 0.0
    %491 = vmatpush1.msra.mxu0 %v456
    %492 = vmatprep.subr.mxu0 0.0
    %493 = vmatpush1.msra.mxu0 %v457
    %494 = vmatprep.subr.mxu0 0.0
    %495 = vmatpush1.msra.mxu0 %v458
    %496 = vmatprep.subr.mxu0 0.0
    %497 = vmatpush1.msra.mxu0 %v459
    %498 = vmatprep.subr.mxu0 0.0
    %499 = vmatpush1.msra.mxu0 %v460
    %500 = vmatprep.subr.mxu0 0.0
    %501 = vmatpush1.msra.mxu0 %v461
    %502 = vmatprep.subr.mxu0 0.0
    %503 = vmatpush1.msra.mxu0 0.0
    %504 = vmatprep.subr.mxu0 0.0
    %505 = vmatpush1.msra.mxu0 0.0
    %506 = vmatprep.subr.mxu0 0.0
    %507 = vmatpush1.msra.mxu0 0.0
    %508 = vmatprep.subr.mxu0 0.0
    %509 = vmatpush1.msra.mxu0 0.0
    %510 = vmatprep.subr.mxu0 0.0
    %511 = vmatpush1.msra.mxu0 0.0
    %512 = vmatprep.subr.mxu0 0.0
    %513 = vmatpush1.msra.mxu0 0.0
    %514 = vmatprep.subr.mxu0 0.0
    %515 = vmatpush1.msra.mxu0 0.0
    %516 = vmatprep.subr.mxu0 0.0
    %517 = vmatpush1.msra.mxu0 0.0
    %518 = vmatprep.subr.mxu0 0.0
    %519 = vmatpush1.msra.mxu0 0.0
    %520 = vmatprep.subr.mxu0 0.0
    %521 = vmatpush1.msra.mxu0 0.0
    %522 = vmatprep.subr.mxu0 0.0
    %523 = vmatpush1.msra.mxu0 0.0
    %524 = vmatprep.subr.mxu0 0.0
    %525 = vmatpush1.msra.mxu0 0.0
    %526 = vmatprep.subr.mxu0 0.0
    %527 = vmatpush1.msra.mxu0 0.0
    %528 = vmatprep.subr.mxu0 0.0
    %529 = vmatpush1.msra.mxu0 0.0
    %530 = vmatprep.subr.mxu0 0.0
    %531 = vmatpush1.msra.mxu0 0.0
    %532 = vmatprep.subr.mxu0 0.0
    %533 = vmatpush1.msra.mxu0 0.0
    %534 = vmatprep.mubr.f32.mxu0 0.0
    %535 = vmatmul.mubr.f32.gmra.mrb[0].mxu0 %v444
    %v536 = vpop.f32.mrb[0].mxu0
    %v537 = vadd.f32 %v468, %v536
    %v538 = vpop.f32.mrb[0].mxu0
    %539 = vdwg.mxu0
    %vm540 = vcmp.gt.f32.partialorder %v537, 0.0
    %v541 = vmul.f32 %v537, 0.01
    %v542 = vsel %vm540, %v537, %v541
    %s543 = scalar_lea.vmem [#allocation5], 640
    %v544 = vld [vmem:[%s543] sm:$0xff]
    %v545 = vld [vmem:[%s543 + $0x8] sm:$0xff]
    %v546 = vld [vmem:[%s543 + $0x10] sm:$0xff]
    %v547 = vld [vmem:[%s543 + $0x18] sm:$0xff]
    %v548 = vld [vmem:[%s543 + $0x20] sm:$0xff]
    %v549 = vld [vmem:[%s543 + $0x28] sm:$0xff]
    %v550 = vld [vmem:[%s543 + $0x30] sm:$0xff]
    %v551 = vld [vmem:[%s543 + $0x38] sm:$0xff]
    %v552 = vld [vmem:[%s543 + $0x40] sm:$0xff]
    %v553 = vld [vmem:[%s543 + $0x48] sm:$0xff]
    %v554 = vld [vmem:[%s543 + $0x50] sm:$0xff]
    %v555 = vld [vmem:[%s543 + $0x58] sm:$0xff]
    %v556 = vld [vmem:[%s543 + $0x60] sm:$0xff]
    %v557 = vld [vmem:[%s543 + $0x68] sm:$0xff]
    %v558 = vld [vmem:[%s543 + $0x70] sm:$0xff]
    %v559 = vld [vmem:[%s543 + $0x78] sm:$0xff]
    %s560 = scalar_lea.vmem [#allocation7], 5
    %v561 = vld [vmem:[%s560] sm:$0x1]
    %v563 = vlaneseq
    %v564 = vshrl.u32 %v563, 7
    %v565 = vsub.s32 0, %v564
    %v566 = vrot.slane %v561, %v565
    %568 = vmatprep.subr.mxu0 0.0
    %569 = vmatpush1.msra.mxu0 %v544
    %570 = vmatprep.subr.mxu0 0.0
    %571 = vmatpush1.msra.mxu0 %v545
    %572 = vmatprep.subr.mxu0 0.0
    %573 = vmatpush1.msra.mxu0 %v546
    %574 = vmatprep.subr.mxu0 0.0
    %575 = vmatpush1.msra.mxu0 %v547
    %576 = vmatprep.subr.mxu0 0.0
    %577 = vmatpush1.msra.mxu0 %v548
    %578 = vmatprep.subr.mxu0 0.0
    %579 = vmatpush1.msra.mxu0 %v549
    %580 = vmatprep.subr.mxu0 0.0
    %581 = vmatpush1.msra.mxu0 %v550
    %582 = vmatprep.subr.mxu0 0.0
    %583 = vmatpush1.msra.mxu0 %v551
    %584 = vmatprep.subr.mxu0 0.0
    %585 = vmatpush1.msra.mxu0 %v552
    %586 = vmatprep.subr.mxu0 0.0
    %587 = vmatpush1.msra.mxu0 %v553
    %588 = vmatprep.subr.mxu0 0.0
    %589 = vmatpush1.msra.mxu0 %v554
    %590 = vmatprep.subr.mxu0 0.0
    %591 = vmatpush1.msra.mxu0 %v555
    %592 = vmatprep.subr.mxu0 0.0
    %593 = vmatpush1.msra.mxu0 %v556
    %594 = vmatprep.subr.mxu0 0.0
    %595 = vmatpush1.msra.mxu0 %v557
    %596 = vmatprep.subr.mxu0 0.0
    %597 = vmatpush1.msra.mxu0 %v558
    %598 = vmatprep.subr.mxu0 0.0
    %599 = vmatpush1.msra.mxu0 %v559
    %600 = vmatprep.subr.mxu0 0.0
    %601 = vmatpush1.msra.mxu0 0.0
    %602 = vmatprep.subr.mxu0 0.0
    %603 = vmatpush1.msra.mxu0 0.0
    %604 = vmatprep.subr.mxu0 0.0
    %605 = vmatpush1.msra.mxu0 0.0
    %606 = vmatprep.subr.mxu0 0.0
    %607 = vmatpush1.msra.mxu0 0.0
    %608 = vmatprep.subr.mxu0 0.0
    %609 = vmatpush1.msra.mxu0 0.0
    %610 = vmatprep.subr.mxu0 0.0
    %611 = vmatpush1.msra.mxu0 0.0
    %612 = vmatprep.subr.mxu0 0.0
    %613 = vmatpush1.msra.mxu0 0.0
    %614 = vmatprep.subr.mxu0 0.0
    %615 = vmatpush1.msra.mxu0 0.0
    %616 = vmatprep.subr.mxu0 0.0
    %617 = vmatpush1.msra.mxu0 0.0
    %618 = vmatprep.subr.mxu0 0.0
    %619 = vmatpush1.msra.mxu0 0.0
    %620 = vmatprep.subr.mxu0 0.0
    %621 = vmatpush1.msra.mxu0 0.0
    %622 = vmatprep.subr.mxu0 0.0
    %623 = vmatpush1.msra.mxu0 0.0
    %624 = vmatprep.subr.mxu0 0.0
    %625 = vmatpush1.msra.mxu0 0.0
    %626 = vmatprep.subr.mxu0 0.0
    %627 = vmatpush1.msra.mxu0 0.0
    %628 = vmatprep.subr.mxu0 0.0
    %629 = vmatpush1.msra.mxu0 0.0
    %630 = vmatprep.subr.mxu0 0.0
    %631 = vmatpush1.msra.mxu0 0.0
    %632 = vmatprep.mubr.f32.mxu0 0.0
    %633 = vmatmul.mubr.f32.gmra.mrb[0].mxu0 %v542
    %v634 = vpop.f32.mrb[0].mxu0
    %v635 = vadd.f32 %v566, %v634
    %v636 = vpop.f32.mrb[0].mxu0
    %637 = vdwg.mxu0
    %v638 = vtanh.pop %v635
    %v639 = vmul.f32 %v638, 1.442695
    %v640 = vpow.pop %v639
    %v641 = vmul.f32 %v444, %v640
    %s642 = scalar_lea.vmem [#allocation5], 768
    %v643 = vld [vmem:[%s642] sm:$0xff]
    %v644 = vld [vmem:[%s642 + $0x8] sm:$0xff]
    %v645 = vld [vmem:[%s642 + $0x10] sm:$0xff]
    %v646 = vld [vmem:[%s642 + $0x18] sm:$0xff]
    %v647 = vld [vmem:[%s642 + $0x20] sm:$0xff]
    %v648 = vld [vmem:[%s642 + $0x28] sm:$0xff]
    %v649 = vld [vmem:[%s642 + $0x30] sm:$0xff]
    %v650 = vld [vmem:[%s642 + $0x38] sm:$0xff]
    %v651 = vld [vmem:[%s642 + $0x40] sm:$0xff]
    %v652 = vld [vmem:[%s642 + $0x48] sm:$0xff]
    %v653 = vld [vmem:[%s642 + $0x50] sm:$0xff]
    %v654 = vld [vmem:[%s642 + $0x58] sm:$0xff]
    %v655 = vld [vmem:[%s642 + $0x60] sm:$0xff]
    %v656 = vld [vmem:[%s642 + $0x68] sm:$0xff]
    %v657 = vld [vmem:[%s642 + $0x70] sm:$0xff]
    %v658 = vld [vmem:[%s642 + $0x78] sm:$0xff]
    %s659 = scalar_lea.vmem [#allocation7], 6
    %v660 = vld [vmem:[%s659] sm:$0x1]
    %v662 = vlaneseq
    %v663 = vshrl.u32 %v662, 7
    %v664 = vsub.s32 0, %v663
    %v665 = vrot.slane %v660, %v664
    %667 = vmatprep.subr.mxu0 0.0
    %668 = vmatpush1.msra.mxu0 %v643
    %669 = vmatprep.subr.mxu0 0.0
    %670 = vmatpush1.msra.mxu0 %v644
    %671 = vmatprep.subr.mxu0 0.0
    %672 = vmatpush1.msra.mxu0 %v645
    %673 = vmatprep.subr.mxu0 0.0
    %674 = vmatpush1.msra.mxu0 %v646
    %675 = vmatprep.subr.mxu0 0.0
    %676 = vmatpush1.msra.mxu0 %v647
    %677 = vmatprep.subr.mxu0 0.0
    %678 = vmatpush1.msra.mxu0 %v648
    %679 = vmatprep.subr.mxu0 0.0
    %680 = vmatpush1.msra.mxu0 %v649
    %681 = vmatprep.subr.mxu0 0.0
    %682 = vmatpush1.msra.mxu0 %v650
    %683 = vmatprep.subr.mxu0 0.0
    %684 = vmatpush1.msra.mxu0 %v651
    %685 = vmatprep.subr.mxu0 0.0
    %686 = vmatpush1.msra.mxu0 %v652
    %687 = vmatprep.subr.mxu0 0.0
    %688 = vmatpush1.msra.mxu0 %v653
    %689 = vmatprep.subr.mxu0 0.0
    %690 = vmatpush1.msra.mxu0 %v654
    %691 = vmatprep.subr.mxu0 0.0
    %692 = vmatpush1.msra.mxu0 %v655
    %693 = vmatprep.subr.mxu0 0.0
    %694 = vmatpush1.msra.mxu0 %v656
    %695 = vmatprep.subr.mxu0 0.0
    %696 = vmatpush1.msra.mxu0 %v657
    %697 = vmatprep.subr.mxu0 0.0
    %698 = vmatpush1.msra.mxu0 %v658
    %699 = vmatprep.subr.mxu0 0.0
    %700 = vmatpush1.msra.mxu0 0.0
    %701 = vmatprep.subr.mxu0 0.0
    %702 = vmatpush1.msra.mxu0 0.0
    %703 = vmatprep.subr.mxu0 0.0
    %704 = vmatpush1.msra.mxu0 0.0
    %705 = vmatprep.subr.mxu0 0.0
    %706 = vmatpush1.msra.mxu0 0.0
    %707 = vmatprep.subr.mxu0 0.0
    %708 = vmatpush1.msra.mxu0 0.0
    %709 = vmatprep.subr.mxu0 0.0
    %710 = vmatpush1.msra.mxu0 0.0
    %711 = vmatprep.subr.mxu0 0.0
    %712 = vmatpush1.msra.mxu0 0.0
    %713 = vmatprep.subr.mxu0 0.0
    %714 = vmatpush1.msra.mxu0 0.0
    %715 = vmatprep.subr.mxu0 0.0
    %716 = vmatpush1.msra.mxu0 0.0
    %717 = vmatprep.subr.mxu0 0.0
    %718 = vmatpush1.msra.mxu0 0.0
    %719 = vmatprep.subr.mxu0 0.0
    %720 = vmatpush1.msra.mxu0 0.0
    %721 = vmatprep.subr.mxu0 0.0
    %722 = vmatpush1.msra.mxu0 0.0
    %723 = vmatprep.subr.mxu0 0.0
    %724 = vmatpush1.msra.mxu0 0.0
    %725 = vmatprep.subr.mxu0 0.0
    %726 = vmatpush1.msra.mxu0 0.0
    %727 = vmatprep.subr.mxu0 0.0
    %728 = vmatpush1.msra.mxu0 0.0
    %729 = vmatprep.subr.mxu0 0.0
    %730 = vmatpush1.msra.mxu0 0.0
    %731 = vmatprep.mubr.f32.mxu0 0.0
    %732 = vmatmul.mubr.f32.gmra.mrb[0].mxu0 %v641
    %v733 = vpop.f32.mrb[0].mxu0
    %v734 = vadd.f32 %v665, %v733
    %v735 = vpop.f32.mrb[0].mxu0
    %736 = vdwg.mxu0
    %vm737 = vcmp.gt.f32.partialorder %v734, 0.0
    %v738 = vmul.f32 %v734, 0.01
    %v739 = vsel %vm737, %v734, %v738
    %s740 = scalar_lea.vmem [#allocation5], 896
    %v741 = vld [vmem:[%s740] sm:$0xff]
    %v742 = vld [vmem:[%s740 + $0x8] sm:$0xff]
    %v743 = vld [vmem:[%s740 + $0x10] sm:$0xff]
    %v744 = vld [vmem:[%s740 + $0x18] sm:$0xff]
    %v745 = vld [vmem:[%s740 + $0x20] sm:$0xff]
    %v746 = vld [vmem:[%s740 + $0x28] sm:$0xff]
    %v747 = vld [vmem:[%s740 + $0x30] sm:$0xff]
    %v748 = vld [vmem:[%s740 + $0x38] sm:$0xff]
    %v749 = vld [vmem:[%s740 + $0x40] sm:$0xff]
    %v750 = vld [vmem:[%s740 + $0x48] sm:$0xff]
    %v751 = vld [vmem:[%s740 + $0x50] sm:$0xff]
    %v752 = vld [vmem:[%s740 + $0x58] sm:$0xff]
    %v753 = vld [vmem:[%s740 + $0x60] sm:$0xff]
    %v754 = vld [vmem:[%s740 + $0x68] sm:$0xff]
    %v755 = vld [vmem:[%s740 + $0x70] sm:$0xff]
    %v756 = vld [vmem:[%s740 + $0x78] sm:$0xff]
    %s757 = scalar_lea.vmem [#allocation7], 7
    %v758 = vld [vmem:[%s757] sm:$0x1]
    %v760 = vlaneseq
    %v761 = vshrl.u32 %v760, 7
    %v762 = vsub.s32 0, %v761
    %v763 = vrot.slane %v758, %v762
    %765 = vmatprep.subr.mxu0 0.0
    %766 = vmatpush1.msra.mxu0 %v741
    %767 = vmatprep.subr.mxu0 0.0
    %768 = vmatpush1.msra.mxu0 %v742
    %769 = vmatprep.subr.mxu0 0.0
    %770 = vmatpush1.msra.mxu0 %v743
    %771 = vmatprep.subr.mxu0 0.0
    %772 = vmatpush1.msra.mxu0 %v744
    %773 = vmatprep.subr.mxu0 0.0
    %774 = vmatpush1.msra.mxu0 %v745
    %775 = vmatprep.subr.mxu0 0.0
    %776 = vmatpush1.msra.mxu0 %v746
    %777 = vmatprep.subr.mxu0 0.0
    %778 = vmatpush1.msra.mxu0 %v747
    %779 = vmatprep.subr.mxu0 0.0
    %780 = vmatpush1.msra.mxu0 %v748
    %781 = vmatprep.subr.mxu0 0.0
    %782 = vmatpush1.msra.mxu0 %v749
    %783 = vmatprep.subr.mxu0 0.0
    %784 = vmatpush1.msra.mxu0 %v750
    %785 = vmatprep.subr.mxu0 0.0
    %786 = vmatpush1.msra.mxu0 %v751
    %787 = vmatprep.subr.mxu0 0.0
    %788 = vmatpush1.msra.mxu0 %v752
    %789 = vmatprep.subr.mxu0 0.0
    %790 = vmatpush1.msra.mxu0 %v753
    %791 = vmatprep.subr.mxu0 0.0
    %792 = vmatpush1.msra.mxu0 %v754
    %793 = vmatprep.subr.mxu0 0.0
    %794 = vmatpush1.msra.mxu0 %v755
    %795 = vmatprep.subr.mxu0 0.0
    %796 = vmatpush1.msra.mxu0 %v756
    %797 = vmatprep.subr.mxu0 0.0
    %798 = vmatpush1.msra.mxu0 0.0
    %799 = vmatprep.subr.mxu0 0.0
    %800 = vmatpush1.msra.mxu0 0.0
    %801 = vmatprep.subr.mxu0 0.0
    %802 = vmatpush1.msra.mxu0 0.0
    %803 = vmatprep.subr.mxu0 0.0
    %804 = vmatpush1.msra.mxu0 0.0
    %805 = vmatprep.subr.mxu0 0.0
    %806 = vmatpush1.msra.mxu0 0.0
    %807 = vmatprep.subr.mxu0 0.0
    %808 = vmatpush1.msra.mxu0 0.0
    %809 = vmatprep.subr.mxu0 0.0
    %810 = vmatpush1.msra.mxu0 0.0
    %811 = vmatprep.subr.mxu0 0.0
    %812 = vmatpush1.msra.mxu0 0.0
    %813 = vmatprep.subr.mxu0 0.0
    %814 = vmatpush1.msra.mxu0 0.0
    %815 = vmatprep.subr.mxu0 0.0
    %816 = vmatpush1.msra.mxu0 0.0
    %817 = vmatprep.subr.mxu0 0.0
    %818 = vmatpush1.msra.mxu0 0.0
    %819 = vmatprep.subr.mxu0 0.0
    %820 = vmatpush1.msra.mxu0 0.0
    %821 = vmatprep.subr.mxu0 0.0
    %822 = vmatpush1.msra.mxu0 0.0
    %823 = vmatprep.subr.mxu0 0.0
    %824 = vmatpush1.msra.mxu0 0.0
    %825 = vmatprep.subr.mxu0 0.0
    %826 = vmatpush1.msra.mxu0 0.0
    %827 = vmatprep.subr.mxu0 0.0
    %828 = vmatpush1.msra.mxu0 0.0
    %829 = vmatprep.mubr.f32.mxu0 0.0
    %830 = vmatmul.mubr.f32.gmra.mrb[0].mxu0 %v739
    %v831 = vpop.f32.mrb[0].mxu0
    %v832 = vadd.f32 %v763, %v831
    %v833 = vpop.f32.mrb[0].mxu0
    %834 = vdwg.mxu0
    %v835 = vtanh.pop %v832
    %v836 = vadd.f32 %v641, %v835
    %s837 = scalar_lea.vmem [#allocation5], 1024
    %v838 = vld [vmem:[%s837] sm:$0xff]
    %v839 = vld [vmem:[%s837 + $0x8] sm:$0xff]
    %v840 = vld [vmem:[%s837 + $0x10] sm:$0xff]
    %v841 = vld [vmem:[%s837 + $0x18] sm:$0xff]
    %v842 = vld [vmem:[%s837 + $0x20] sm:$0xff]
    %v843 = vld [vmem:[%s837 + $0x28] sm:$0xff]
    %v844 = vld [vmem:[%s837 + $0x30] sm:$0xff]
    %v845 = vld [vmem:[%s837 + $0x38] sm:$0xff]
    %v846 = vld [vmem:[%s837 + $0x40] sm:$0xff]
    %v847 = vld [vmem:[%s837 + $0x48] sm:$0xff]
    %v848 = vld [vmem:[%s837 + $0x50] sm:$0xff]
    %v849 = vld [vmem:[%s837 + $0x58] sm:$0xff]
    %v850 = vld [vmem:[%s837 + $0x60] sm:$0xff]
    %v851 = vld [vmem:[%s837 + $0x68] sm:$0xff]
    %v852 = vld [vmem:[%s837 + $0x70] sm:$0xff]
    %v853 = vld [vmem:[%s837 + $0x78] sm:$0xff]
    %s854 = scalar_lea.vmem [#allocation7], 8
    %v855 = vld [vmem:[%s854] sm:$0x1]
    %v857 = vlaneseq
    %v858 = vshrl.u32 %v857, 7
    %v859 = vsub.s32 0, %v858
    %v860 = vrot.slane %v855, %v859
    %862 = vmatprep.subr.mxu0 0.0
    %863 = vmatpush1.msra.mxu0 %v838
    %864 = vmatprep.subr.mxu0 0.0
    %865 = vmatpush1.msra.mxu0 %v839
    %866 = vmatprep.subr.mxu0 0.0
    %867 = vmatpush1.msra.mxu0 %v840
    %868 = vmatprep.subr.mxu0 0.0
    %869 = vmatpush1.msra.mxu0 %v841
    %870 = vmatprep.subr.mxu0 0.0
    %871 = vmatpush1.msra.mxu0 %v842
    %872 = vmatprep.subr.mxu0 0.0
    %873 = vmatpush1.msra.mxu0 %v843
    %874 = vmatprep.subr.mxu0 0.0
    %875 = vmatpush1.msra.mxu0 %v844
    %876 = vmatprep.subr.mxu0 0.0
    %877 = vmatpush1.msra.mxu0 %v845
    %878 = vmatprep.subr.mxu0 0.0
    %879 = vmatpush1.msra.mxu0 %v846
    %880 = vmatprep.subr.mxu0 0.0
    %881 = vmatpush1.msra.mxu0 %v847
    %882 = vmatprep.subr.mxu0 0.0
    %883 = vmatpush1.msra.mxu0 %v848
    %884 = vmatprep.subr.mxu0 0.0
    %885 = vmatpush1.msra.mxu0 %v849
    %886 = vmatprep.subr.mxu0 0.0
    %887 = vmatpush1.msra.mxu0 %v850
    %888 = vmatprep.subr.mxu0 0.0
    %889 = vmatpush1.msra.mxu0 %v851
    %890 = vmatprep.subr.mxu0 0.0
    %891 = vmatpush1.msra.mxu0 %v852
    %892 = vmatprep.subr.mxu0 0.0
    %893 = vmatpush1.msra.mxu0 %v853
    %894 = vmatprep.subr.mxu0 0.0
    %895 = vmatpush1.msra.mxu0 0.0
    %896 = vmatprep.subr.mxu0 0.0
    %897 = vmatpush1.msra.mxu0 0.0
    %898 = vmatprep.subr.mxu0 0.0
    %899 = vmatpush1.msra.mxu0 0.0
    %900 = vmatprep.subr.mxu0 0.0
    %901 = vmatpush1.msra.mxu0 0.0
    %902 = vmatprep.subr.mxu0 0.0
    %903 = vmatpush1.msra.mxu0 0.0
    %904 = vmatprep.subr.mxu0 0.0
    %905 = vmatpush1.msra.mxu0 0.0
    %906 = vmatprep.subr.mxu0 0.0
    %907 = vmatpush1.msra.mxu0 0.0
    %908 = vmatprep.subr.mxu0 0.0
    %909 = vmatpush1.msra.mxu0 0.0
    %910 = vmatprep.subr.mxu0 0.0
    %911 = vmatpush1.msra.mxu0 0.0
    %912 = vmatprep.subr.mxu0 0.0
    %913 = vmatpush1.msra.mxu0 0.0
    %914 = vmatprep.subr.mxu0 0.0
    %915 = vmatpush1.msra.mxu0 0.0
    %916 = vmatprep.subr.mxu0 0.0
    %917 = vmatpush1.msra.mxu0 0.0
    %918 = vmatprep.subr.mxu0 0.0
    %919 = vmatpush1.msra.mxu0 0.0
    %920 = vmatprep.subr.mxu0 0.0
    %921 = vmatpush1.msra.mxu0 0.0
    %922 = vmatprep.subr.mxu0 0.0
    %923 = vmatpush1.msra.mxu0 0.0
    %924 = vmatprep.subr.mxu0 0.0
    %925 = vmatpush1.msra.mxu0 0.0
    %926 = vmatprep.mubr.f32.mxu0 0.0
    %927 = vmatmul.mubr.f32.gmra.mrb[0].mxu0 %v836
    %v928 = vpop.f32.mrb[0].mxu0
    %v929 = vadd.f32 %v860, %v928
    %v930 = vpop.f32.mrb[0].mxu0
    %931 = vdwg.mxu0
    %vm932 = vcmp.gt.f32.partialorder %v929, 0.0
    %v933 = vmul.f32 %v929, 0.01
    %v934 = vsel %vm932, %v929, %v933
    %s935 = scalar_lea.vmem [#allocation5], 1152
    %v936 = vld [vmem:[%s935] sm:$0xff]
    %v937 = vld [vmem:[%s935 + $0x8] sm:$0xff]
    %v938 = vld [vmem:[%s935 + $0x10] sm:$0xff]
    %v939 = vld [vmem:[%s935 + $0x18] sm:$0xff]
    %v940 = vld [vmem:[%s935 + $0x20] sm:$0xff]
    %v941 = vld [vmem:[%s935 + $0x28] sm:$0xff]
    %v942 = vld [vmem:[%s935 + $0x30] sm:$0xff]
    %v943 = vld [vmem:[%s935 + $0x38] sm:$0xff]
    %v944 = vld [vmem:[%s935 + $0x40] sm:$0xff]
    %v945 = vld [vmem:[%s935 + $0x48] sm:$0xff]
    %v946 = vld [vmem:[%s935 + $0x50] sm:$0xff]
    %v947 = vld [vmem:[%s935 + $0x58] sm:$0xff]
    %v948 = vld [vmem:[%s935 + $0x60] sm:$0xff]
    %v949 = vld [vmem:[%s935 + $0x68] sm:$0xff]
    %v950 = vld [vmem:[%s935 + $0x70] sm:$0xff]
    %v951 = vld [vmem:[%s935 + $0x78] sm:$0xff]
    %s952 = scalar_lea.vmem [#allocation7], 9
    %v953 = vld [vmem:[%s952] sm:$0x1]
    %v955 = vlaneseq
    %v956 = vshrl.u32 %v955, 7
    %v957 = vsub.s32 0, %v956
    %v958 = vrot.slane %v953, %v957
    %960 = vmatprep.subr.mxu0 0.0
    %961 = vmatpush1.msra.mxu0 %v936
    %962 = vmatprep.subr.mxu0 0.0
    %963 = vmatpush1.msra.mxu0 %v937
    %964 = vmatprep.subr.mxu0 0.0
    %965 = vmatpush1.msra.mxu0 %v938
    %966 = vmatprep.subr.mxu0 0.0
    %967 = vmatpush1.msra.mxu0 %v939
    %968 = vmatprep.subr.mxu0 0.0
    %969 = vmatpush1.msra.mxu0 %v940
    %970 = vmatprep.subr.mxu0 0.0
    %971 = vmatpush1.msra.mxu0 %v941
    %972 = vmatprep.subr.mxu0 0.0
    %973 = vmatpush1.msra.mxu0 %v942
    %974 = vmatprep.subr.mxu0 0.0
    %975 = vmatpush1.msra.mxu0 %v943
    %976 = vmatprep.subr.mxu0 0.0
    %977 = vmatpush1.msra.mxu0 %v944
    %978 = vmatprep.subr.mxu0 0.0
    %979 = vmatpush1.msra.mxu0 %v945
    %980 = vmatprep.subr.mxu0 0.0
    %981 = vmatpush1.msra.mxu0 %v946
    %982 = vmatprep.subr.mxu0 0.0
    %983 = vmatpush1.msra.mxu0 %v947
    %984 = vmatprep.subr.mxu0 0.0
    %985 = vmatpush1.msra.mxu0 %v948
    %986 = vmatprep.subr.mxu0 0.0
    %987 = vmatpush1.msra.mxu0 %v949
    %988 = vmatprep.subr.mxu0 0.0
    %989 = vmatpush1.msra.mxu0 %v950
    %990 = vmatprep.subr.mxu0 0.0
    %991 = vmatpush1.msra.mxu0 %v951
    %992 = vmatprep.subr.mxu0 0.0
    %993 = vmatpush1.msra.mxu0 0.0
    %994 = vmatprep.subr.mxu0 0.0
    %995 = vmatpush1.msra.mxu0 0.0
    %996 = vmatprep.subr.mxu0 0.0
    %997 = vmatpush1.msra.mxu0 0.0
    %998 = vmatprep.subr.mxu0 0.0
    %999 = vmatpush1.msra.mxu0 0.0
    %1000 = vmatprep.subr.mxu0 0.0
    %1001 = vmatpush1.msra.mxu0 0.0
    %1002 = vmatprep.subr.mxu0 0.0
    %1003 = vmatpush1.msra.mxu0 0.0
    %1004 = vmatprep.subr.mxu0 0.0
    %1005 = vmatpush1.msra.mxu0 0.0
    %1006 = vmatprep.subr.mxu0 0.0
    %1007 = vmatpush1.msra.mxu0 0.0
    %1008 = vmatprep.subr.mxu0 0.0
    %1009 = vmatpush1.msra.mxu0 0.0
    %1010 = vmatprep.subr.mxu0 0.0
    %1011 = vmatpush1.msra.mxu0 0.0
    %1012 = vmatprep.subr.mxu0 0.0
    %1013 = vmatpush1.msra.mxu0 0.0
    %1014 = vmatprep.subr.mxu0 0.0
    %1015 = vmatpush1.msra.mxu0 0.0
    %1016 = vmatprep.subr.mxu0 0.0
    %1017 = vmatpush1.msra.mxu0 0.0
    %1018 = vmatprep.subr.mxu0 0.0
    %1019 = vmatpush1.msra.mxu0 0.0
    %1020 = vmatprep.subr.mxu0 0.0
    %1021 = vmatpush1.msra.mxu0 0.0
    %1022 = vmatprep.subr.mxu0 0.0
    %1023 = vmatpush1.msra.mxu0 0.0
    %1024 = vmatprep.mubr.f32.mxu0 0.0
    %1025 = vmatmul.mubr.f32.gmra.mrb[0].mxu0 %v934
    %v1026 = vpop.f32.mrb[0].mxu0
    %v1027 = vadd.f32 %v958, %v1026
    %v1028 = vpop.f32.mrb[0].mxu0
    %1029 = vdwg.mxu0
    %v1030 = vtanh.pop %v1027
    %v1031 = vmul.f32 %v1030, 1.442695
    %v1032 = vpow.pop %v1031
    %v1033 = vmul.f32 %v836, %v1032
    %s1034 = scalar_lea.vmem [#allocation5], 1280
    %v1035 = vld [vmem:[%s1034] sm:$0xff]
    %v1036 = vld [vmem:[%s1034 + $0x8] sm:$0xff]
    %v1037 = vld [vmem:[%s1034 + $0x10] sm:$0xff]
    %v1038 = vld [vmem:[%s1034 + $0x18] sm:$0xff]
    %v1039 = vld [vmem:[%s1034 + $0x20] sm:$0xff]
    %v1040 = vld [vmem:[%s1034 + $0x28] sm:$0xff]
    %v1041 = vld [vmem:[%s1034 + $0x30] sm:$0xff]
    %v1042 = vld [vmem:[%s1034 + $0x38] sm:$0xff]
    %v1043 = vld [vmem:[%s1034 + $0x40] sm:$0xff]
    %v1044 = vld [vmem:[%s1034 + $0x48] sm:$0xff]
    %v1045 = vld [vmem:[%s1034 + $0x50] sm:$0xff]
    %v1046 = vld [vmem:[%s1034 + $0x58] sm:$0xff]
    %v1047 = vld [vmem:[%s1034 + $0x60] sm:$0xff]
    %v1048 = vld [vmem:[%s1034 + $0x68] sm:$0xff]
    %v1049 = vld [vmem:[%s1034 + $0x70] sm:$0xff]
    %v1050 = vld [vmem:[%s1034 + $0x78] sm:$0xff]
    %s1051 = scalar_lea.vmem [#allocation7], 10
    %v1052 = vld [vmem:[%s1051] sm:$0x1]
    %v1054 = vlaneseq
    %v1055 = vshrl.u32 %v1054, 7
    %v1056 = vsub.s32 0, %v1055
    %v1057 = vrot.slane %v1052, %v1056
    %1059 = vmatprep.subr.mxu0 0.0
    %1060 = vmatpush1.msra.mxu0 %v1035
    %1061 = vmatprep.subr.mxu0 0.0
    %1062 = vmatpush1.msra.mxu0 %v1036
    %1063 = vmatprep.subr.mxu0 0.0
    %1064 = vmatpush1.msra.mxu0 %v1037
    %1065 = vmatprep.subr.mxu0 0.0
    %1066 = vmatpush1.msra.mxu0 %v1038
    %1067 = vmatprep.subr.mxu0 0.0
    %1068 = vmatpush1.msra.mxu0 %v1039
    %1069 = vmatprep.subr.mxu0 0.0
    %1070 = vmatpush1.msra.mxu0 %v1040
    %1071 = vmatprep.subr.mxu0 0.0
    %1072 = vmatpush1.msra.mxu0 %v1041
    %1073 = vmatprep.subr.mxu0 0.0
    %1074 = vmatpush1.msra.mxu0 %v1042
    %1075 = vmatprep.subr.mxu0 0.0
    %1076 = vmatpush1.msra.mxu0 %v1043
    %1077 = vmatprep.subr.mxu0 0.0
    %1078 = vmatpush1.msra.mxu0 %v1044
    %1079 = vmatprep.subr.mxu0 0.0
    %1080 = vmatpush1.msra.mxu0 %v1045
    %1081 = vmatprep.subr.mxu0 0.0
    %1082 = vmatpush1.msra.mxu0 %v1046
    %1083 = vmatprep.subr.mxu0 0.0
    %1084 = vmatpush1.msra.mxu0 %v1047
    %1085 = vmatprep.subr.mxu0 0.0
    %1086 = vmatpush1.msra.mxu0 %v1048
    %1087 = vmatprep.subr.mxu0 0.0
    %1088 = vmatpush1.msra.mxu0 %v1049
    %1089 = vmatprep.subr.mxu0 0.0
    %1090 = vmatpush1.msra.mxu0 %v1050
    %1091 = vmatprep.subr.mxu0 0.0
    %1092 = vmatpush1.msra.mxu0 0.0
    %1093 = vmatprep.subr.mxu0 0.0
    %1094 = vmatpush1.msra.mxu0 0.0
    %1095 = vmatprep.subr.mxu0 0.0
    %1096 = vmatpush1.msra.mxu0 0.0
    %1097 = vmatprep.subr.mxu0 0.0
    %1098 = vmatpush1.msra.mxu0 0.0
    %1099 = vmatprep.subr.mxu0 0.0
    %1100 = vmatpush1.msra.mxu0 0.0
    %1101 = vmatprep.subr.mxu0 0.0
    %1102 = vmatpush1.msra.mxu0 0.0
    %1103 = vmatprep.subr.mxu0 0.0
    %1104 = vmatpush1.msra.mxu0 0.0
    %1105 = vmatprep.subr.mxu0 0.0
    %1106 = vmatpush1.msra.mxu0 0.0
    %1107 = vmatprep.subr.mxu0 0.0
    %1108 = vmatpush1.msra.mxu0 0.0
    %1109 = vmatprep.subr.mxu0 0.0
    %1110 = vmatpush1.msra.mxu0 0.0
    %1111 = vmatprep.subr.mxu0 0.0
    %1112 = vmatpush1.msra.mxu0 0.0
    %1113 = vmatprep.subr.mxu0 0.0
    %1114 = vmatpush1.msra.mxu0 0.0
    %1115 = vmatprep.subr.mxu0 0.0
    %1116 = vmatpush1.msra.mxu0 0.0
    %1117 = vmatprep.subr.mxu0 0.0
    %1118 = vmatpush1.msra.mxu0 0.0
    %1119 = vmatprep.subr.mxu0 0.0
    %1120 = vmatpush1.msra.mxu0 0.0
    %1121 = vmatprep.subr.mxu0 0.0
    %1122 = vmatpush1.msra.mxu0 0.0
    %1123 = vmatprep.mubr.f32.mxu0 0.0
    %1124 = vmatmul.mubr.f32.gmra.mrb[0].mxu0 %v1033
    %v1125 = vpop.f32.mrb[0].mxu0
    %v1126 = vadd.f32 %v1057, %v1125
    %v1127 = vpop.f32.mrb[0].mxu0
    %1128 = vdwg.mxu0
    %vm1129 = vcmp.gt.f32.partialorder %v1126, 0.0
    %v1130 = vmul.f32 %v1126, 0.01
    %v1131 = vsel %vm1129, %v1126, %v1130
    %s1132 = scalar_lea.vmem [#allocation5], 1408
    %v1133 = vld [vmem:[%s1132] sm:$0xff]
    %v1134 = vld [vmem:[%s1132 + $0x8] sm:$0xff]
    %v1135 = vld [vmem:[%s1132 + $0x10] sm:$0xff]
    %v1136 = vld [vmem:[%s1132 + $0x18] sm:$0xff]
    %v1137 = vld [vmem:[%s1132 + $0x20] sm:$0xff]
    %v1138 = vld [vmem:[%s1132 + $0x28] sm:$0xff]
    %v1139 = vld [vmem:[%s1132 + $0x30] sm:$0xff]
    %v1140 = vld [vmem:[%s1132 + $0x38] sm:$0xff]
    %v1141 = vld [vmem:[%s1132 + $0x40] sm:$0xff]
    %v1142 = vld [vmem:[%s1132 + $0x48] sm:$0xff]
    %v1143 = vld [vmem:[%s1132 + $0x50] sm:$0xff]
    %v1144 = vld [vmem:[%s1132 + $0x58] sm:$0xff]
    %v1145 = vld [vmem:[%s1132 + $0x60] sm:$0xff]
    %v1146 = vld [vmem:[%s1132 + $0x68] sm:$0xff]
    %v1147 = vld [vmem:[%s1132 + $0x70] sm:$0xff]
    %v1148 = vld [vmem:[%s1132 + $0x78] sm:$0xff]
    %s1149 = scalar_lea.vmem [#allocation7], 11
    %v1150 = vld [vmem:[%s1149] sm:$0x1]
    %v1152 = vlaneseq
    %v1153 = vshrl.u32 %v1152, 7
    %v1154 = vsub.s32 0, %v1153
    %v1155 = vrot.slane %v1150, %v1154
    %1157 = vmatprep.subr.mxu0 0.0
    %1158 = vmatpush1.msra.mxu0 %v1133
    %1159 = vmatprep.subr.mxu0 0.0
    %1160 = vmatpush1.msra.mxu0 %v1134
    %1161 = vmatprep.subr.mxu0 0.0
    %1162 = vmatpush1.msra.mxu0 %v1135
    %1163 = vmatprep.subr.mxu0 0.0
    %1164 = vmatpush1.msra.mxu0 %v1136
    %1165 = vmatprep.subr.mxu0 0.0
    %1166 = vmatpush1.msra.mxu0 %v1137
    %1167 = vmatprep.subr.mxu0 0.0
    %1168 = vmatpush1.msra.mxu0 %v1138
    %1169 = vmatprep.subr.mxu0 0.0
    %1170 = vmatpush1.msra.mxu0 %v1139
    %1171 = vmatprep.subr.mxu0 0.0
    %1172 = vmatpush1.msra.mxu0 %v1140
    %1173 = vmatprep.subr.mxu0 0.0
    %1174 = vmatpush1.msra.mxu0 %v1141
    %1175 = vmatprep.subr.mxu0 0.0
    %1176 = vmatpush1.msra.mxu0 %v1142
    %1177 = vmatprep.subr.mxu0 0.0
    %1178 = vmatpush1.msra.mxu0 %v1143
    %1179 = vmatprep.subr.mxu0 0.0
    %1180 = vmatpush1.msra.mxu0 %v1144
    %1181 = vmatprep.subr.mxu0 0.0
    %1182 = vmatpush1.msra.mxu0 %v1145
    %1183 = vmatprep.subr.mxu0 0.0
    %1184 = vmatpush1.msra.mxu0 %v1146
    %1185 = vmatprep.subr.mxu0 0.0
    %1186 = vmatpush1.msra.mxu0 %v1147
    %1187 = vmatprep.subr.mxu0 0.0
    %1188 = vmatpush1.msra.mxu0 %v1148
    %1189 = vmatprep.subr.mxu0 0.0
    %1190 = vmatpush1.msra.mxu0 0.0
    %1191 = vmatprep.subr.mxu0 0.0
    %1192 = vmatpush1.msra.mxu0 0.0
    %1193 = vmatprep.subr.mxu0 0.0
    %1194 = vmatpush1.msra.mxu0 0.0
    %1195 = vmatprep.subr.mxu0 0.0
    %1196 = vmatpush1.msra.mxu0 0.0
    %1197 = vmatprep.subr.mxu0 0.0
    %1198 = vmatpush1.msra.mxu0 0.0
    %1199 = vmatprep.subr.mxu0 0.0
    %1200 = vmatpush1.msra.mxu0 0.0
    %1201 = vmatprep.subr.mxu0 0.0
    %1202 = vmatpush1.msra.mxu0 0.0
    %1203 = vmatprep.subr.mxu0 0.0
    %1204 = vmatpush1.msra.mxu0 0.0
    %1205 = vmatprep.subr.mxu0 0.0
    %1206 = vmatpush1.msra.mxu0 0.0
    %1207 = vmatprep.subr.mxu0 0.0
    %1208 = vmatpush1.msra.mxu0 0.0
    %1209 = vmatprep.subr.mxu0 0.0
    %1210 = vmatpush1.msra.mxu0 0.0
    %1211 = vmatprep.subr.mxu0 0.0
    %1212 = vmatpush1.msra.mxu0 0.0
    %1213 = vmatprep.subr.mxu0 0.0
    %1214 = vmatpush1.msra.mxu0 0.0
    %1215 = vmatprep.subr.mxu0 0.0
    %1216 = vmatpush1.msra.mxu0 0.0
    %1217 = vmatprep.subr.mxu0 0.0
    %1218 = vmatpush1.msra.mxu0 0.0
    %1219 = vmatprep.subr.mxu0 0.0
    %1220 = vmatpush1.msra.mxu0 0.0
    %1221 = vmatprep.mubr.f32.mxu0 0.0
    %1222 = vmatmul.mubr.f32.gmra.mrb[0].mxu0 %v1131
    %v1223 = vpop.f32.mrb[0].mxu0
    %v1224 = vadd.f32 %v1155, %v1223
    %v1225 = vpop.f32.mrb[0].mxu0
    %1226 = vdwg.mxu0
    %v1227 = vtanh.pop %v1224
    %v1228 = vadd.f32 %v1033, %v1227
    %v1229 = vadd.f32 %v1228, %v54
    %s1230 = scalar_lea.vmem [#allocation5], 1536
    %v1231 = vld [vmem:[%s1230] sm:$0xff]
    %v1232 = vld [vmem:[%s1230 + $0x8] sm:$0xff]
    %v1233 = vld [vmem:[%s1230 + $0x10] sm:$0xff]
    %v1234 = vld [vmem:[%s1230 + $0x18] sm:$0xff]
    %v1235 = vld [vmem:[%s1230 + $0x20] sm:$0xff]
    %v1236 = vld [vmem:[%s1230 + $0x28] sm:$0xff]
    %v1237 = vld [vmem:[%s1230 + $0x30] sm:$0xff]
    %v1238 = vld [vmem:[%s1230 + $0x38] sm:$0xff]
    %v1239 = vld [vmem:[%s1230 + $0x40] sm:$0xff]
    %v1240 = vld [vmem:[%s1230 + $0x48] sm:$0xff]
    %v1241 = vld [vmem:[%s1230 + $0x50] sm:$0xff]
    %v1242 = vld [vmem:[%s1230 + $0x58] sm:$0xff]
    %v1243 = vld [vmem:[%s1230 + $0x60] sm:$0xff]
    %v1244 = vld [vmem:[%s1230 + $0x68] sm:$0xff]
    %v1245 = vld [vmem:[%s1230 + $0x70] sm:$0xff]
    %v1246 = vld [vmem:[%s1230 + $0x78] sm:$0xff]
    %s1247 = scalar_lea.vmem [#allocation7], 12
    %v1248 = vld [vmem:[%s1247] sm:$0x1]
    %v1250 = vlaneseq
    %v1251 = vshrl.u32 %v1250, 7
    %v1252 = vsub.s32 0, %v1251
    %v1253 = vrot.slane %v1248, %v1252
    %1255 = vmatprep.subr.mxu0 0.0
    %1256 = vmatpush1.msra.mxu0 %v1231
    %1257 = vmatprep.subr.mxu0 0.0
    %1258 = vmatpush1.msra.mxu0 %v1232
    %1259 = vmatprep.subr.mxu0 0.0
    %1260 = vmatpush1.msra.mxu0 %v1233
    %1261 = vmatprep.subr.mxu0 0.0
    %1262 = vmatpush1.msra.mxu0 %v1234
    %1263 = vmatprep.subr.mxu0 0.0
    %1264 = vmatpush1.msra.mxu0 %v1235
    %1265 = vmatprep.subr.mxu0 0.0
    %1266 = vmatpush1.msra.mxu0 %v1236
    %1267 = vmatprep.subr.mxu0 0.0
    %1268 = vmatpush1.msra.mxu0 %v1237
    %1269 = vmatprep.subr.mxu0 0.0
    %1270 = vmatpush1.msra.mxu0 %v1238
    %1271 = vmatprep.subr.mxu0 0.0
    %1272 = vmatpush1.msra.mxu0 %v1239
    %1273 = vmatprep.subr.mxu0 0.0
    %1274 = vmatpush1.msra.mxu0 %v1240
    %1275 = vmatprep.subr.mxu0 0.0
    %1276 = vmatpush1.msra.mxu0 %v1241
    %1277 = vmatprep.subr.mxu0 0.0
    %1278 = vmatpush1.msra.mxu0 %v1242
    %1279 = vmatprep.subr.mxu0 0.0
    %1280 = vmatpush1.msra.mxu0 %v1243
    %1281 = vmatprep.subr.mxu0 0.0
    %1282 = vmatpush1.msra.mxu0 %v1244
    %1283 = vmatprep.subr.mxu0 0.0
    %1284 = vmatpush1.msra.mxu0 %v1245
    %1285 = vmatprep.subr.mxu0 0.0
    %1286 = vmatpush1.msra.mxu0 %v1246
    %1287 = vmatprep.subr.mxu0 0.0
    %1288 = vmatpush1.msra.mxu0 0.0
    %1289 = vmatprep.subr.mxu0 0.0
    %1290 = vmatpush1.msra.mxu0 0.0
    %1291 = vmatprep.subr.mxu0 0.0
    %1292 = vmatpush1.msra.mxu0 0.0
    %1293 = vmatprep.subr.mxu0 0.0
    %1294 = vmatpush1.msra.mxu0 0.0
    %1295 = vmatprep.subr.mxu0 0.0
    %1296 = vmatpush1.msra.mxu0 0.0
    %1297 = vmatprep.subr.mxu0 0.0
    %1298 = vmatpush1.msra.mxu0 0.0
    %1299 = vmatprep.subr.mxu0 0.0
    %1300 = vmatpush1.msra.mxu0 0.0
    %1301 = vmatprep.subr.mxu0 0.0
    %1302 = vmatpush1.msra.mxu0 0.0
    %1303 = vmatprep.subr.mxu0 0.0
    %1304 = vmatpush1.msra.mxu0 0.0
    %1305 = vmatprep.subr.mxu0 0.0
    %1306 = vmatpush1.msra.mxu0 0.0
    %1307 = vmatprep.subr.mxu0 0.0
    %1308 = vmatpush1.msra.mxu0 0.0
    %1309 = vmatprep.subr.mxu0 0.0
    %1310 = vmatpush1.msra.mxu0 0.0
    %1311 = vmatprep.subr.mxu0 0.0
    %1312 = vmatpush1.msra.mxu0 0.0
    %1313 = vmatprep.subr.mxu0 0.0
    %1314 = vmatpush1.msra.mxu0 0.0
    %1315 = vmatprep.subr.mxu0 0.0
    %1316 = vmatpush1.msra.mxu0 0.0
    %1317 = vmatprep.subr.mxu0 0.0
    %1318 = vmatpush1.msra.mxu0 0.0
    %1319 = vmatprep.mubr.f32.mxu0 0.0
    %1320 = vmatmul.mubr.f32.gmra.mrb[0].mxu0 %v1229
    %v1321 = vpop.f32.mrb[0].mxu0
    %v1322 = vadd.f32 %v1253, %v1321
    %v1323 = vpop.f32.mrb[0].mxu0
    %1324 = vdwg.mxu0
    %1325 = vst [vmem:[#allocation8] sm:$0xff] %v1322
    // Predicated region
    $region26: #{tpu_custom_call.1} parent=1 // pred_check
      _
    $region27: #{tpu_custom_call.1} parent=1 // pred_check_branch
      %1327 = sbr.rel (0) target = $region29
    $region28: #{tpu_custom_call.1} parent=1 // pred_region
      %s1329 = ssub.s32 128, 128
      %1330 = vsyncadd [#allocation4], %s1329
      %s1332 = sshll.u32 [#allocation8], 4
      %s1333 = int_to_ptr.vmem [resolvable:$true] %s1332
      %1335 = dma.vmem_to_hbm [thread:$0]  %s1333, 128, %s3, [#allocation4]
    $region29: #{tpu_custom_call.1} parent=1 // pred_fallthru
      _
    // Predicated region
    $region30: #{tpu_custom_call.1} parent=1 // pred_check
      _
    $region31: #{tpu_custom_call.1} parent=1 // pred_check_branch
      %1337 = sbr.rel (0) target = $region33
    $region32: #{tpu_custom_call.1} parent=1 // pred_region
      %1338 = dma.done [#allocation4], 128
    $region33: #{tpu_custom_call.1} parent=1 // pred_fallthru
      _
    %1339 = vsyncpa [#allocation3], 1
    %1340 = vsyncpa [#allocation6], 1
    %1341 = vsyncpa [#allocation4], 1

</llo_original>
